<compile_context>
chip_gen: v7x
topology: tpu7x:2x2x1
jax: 0.10.0
libtpu: 0.0.40
codegen_flags: <defaults>
</compile_context>

<pallas_src>
import functools

import jax
import jax.numpy as jnp
from jax import lax
from jax.experimental import pallas as pl
from jax.experimental.pallas import tpu as pltpu

N1, N2, N3 = 512, 256, 128
BN_EPS = 1e-5


def _round_up(x, m):
    return ((x + m - 1) // m) * m


def _critic_kernel(s_ref, a_ref,
                   w1_ref, b1_ref,
                   w2s_ref, w2a_ref, b2_ref,
                   w3_ref, b3_ref,
                   w4_ref, b4_ref,
                   gamma_ref, beta_ref,
                   out_ref,
                   s1_ref, s2_ref, w2eff_ref, b2eff_ref,
                   *, batch, tile_rows, need_mask):
    phase = pl.program_id(0)   # 0: BN statistics pass, 1: fold + fc2..fc4
    tile = pl.program_id(1)    # batch tile index

    # fc1 + ReLU for this batch tile (recomputed in both phases; K=state_size
    # is tiny, so recompute is far cheaper than spilling (B, 512) activations).
    xs = jnp.dot(s_ref[...].astype(jnp.bfloat16), w1_ref[...],
                 preferred_element_type=jnp.float32) + b1_ref[...]
    xs = jnp.maximum(xs, 0.0)                                    # f32 (TB, N1)

    # ------------------ phase 0: accumulate BN statistics ------------------
    @pl.when(phase == 0)
    def _():
        @pl.when(tile == 0)
        def _():
            s1_ref[...] = jnp.zeros_like(s1_ref)
            s2_ref[...] = jnp.zeros_like(s2_ref)

        if need_mask:  # zero padded tail rows so they do not bias the stats
            rows = tile * tile_rows + lax.broadcasted_iota(
                jnp.int32, (tile_rows, 1), 0)
            xs_stat = jnp.where(rows < batch, xs, 0.0)
        else:
            xs_stat = xs
        s1_ref[...] += jnp.sum(xs_stat, axis=0, keepdims=True)
        s2_ref[...] += jnp.sum(xs_stat * xs_stat, axis=0, keepdims=True)

    # --------------- phase 1: fold BN into fc2, run fc2..fc4 ---------------
    @pl.when(phase == 1)
    def _():
        # One-time (batch-independent) fold of BatchNorm into fc2:
        #   bn(x) @ w2s = x @ (w2s * (gamma*inv_std)[:, None])
        #                 + (beta - mean*gamma*inv_std) @ w2s
        @pl.when(tile == 0)
        def _():
            inv_b = jnp.float32(1.0 / batch)
            mean = s1_ref[...] * inv_b                               # (1, N1)
            var = jnp.maximum(s2_ref[...] * inv_b - mean * mean, 0.0)
            inv_std = lax.rsqrt(var + jnp.float32(BN_EPS))
            scale = gamma_ref[...] * inv_std                         # (1, N1)
            shift = beta_ref[...] - mean * scale                     # (1, N1)
            w2s_f32 = w2s_ref[...].astype(jnp.float32)               # (N1, N2)
            w2eff_ref[0:N1, :] = (
                w2s_f32 * jnp.transpose(scale)).astype(jnp.bfloat16)
            w2eff_ref[N1:, :] = w2a_ref[...]                         # (A, N2)
            b2eff_ref[...] = b2_ref[...] + jnp.dot(
                shift, w2s_f32, preferred_element_type=jnp.float32)

        # fc2 over concat([relu(fc1(state)), action]) with the folded weights.
        cat = jnp.concatenate(
            [xs.astype(jnp.bfloat16), a_ref[...].astype(jnp.bfloat16)], axis=1)
        x = jnp.dot(cat, w2eff_ref[...],
                    preferred_element_type=jnp.float32) + b2eff_ref[...]
        x = jnp.maximum(x, 0.0)                                      # (TB, N2)

        # fc3 + ReLU
        x = jnp.dot(x.astype(jnp.bfloat16), w3_ref[...],
                    preferred_element_type=jnp.float32) + b3_ref[...]
        x = jnp.maximum(x, 0.0)                                      # (TB, N3)

        # fc4 head, produced lane-dense as a (1, TB) row: contract the 128-dim
        # feature axis of w4 against the feature axis of x.
        head = lax.dot_general(
            w4_ref[...].astype(jnp.float32), x,
            dimension_numbers=(((1,), (1,)), ((), ())),
            preferred_element_type=jnp.float32) + b4_ref[...]        # (1, TB)
        out_ref[0] = head


def critic_forward(state, action, params, *, max_tile_rows=256):
    """Fused Critic forward pass. Returns (B, 1) f32 values."""
    B, S = state.shape
    A = action.shape[1]

    # Batch tile: multiple of 8 (sublanes), capped at 256 (full MXU M on v6e/v7x).
    TB = min(max_tile_rows, _round_up(B, 8))
    B_pad = _round_up(B, TB)
    num_tiles = B_pad // TB
    need_mask = B_pad != B

    if need_mask:
        state = jnp.pad(state, ((0, B_pad - B), (0, 0)))
        action = jnp.pad(action, ((0, B_pad - B), (0, 0)))

    kernel = functools.partial(_critic_kernel, batch=B, tile_rows=TB,
                               need_mask=need_mask)

    const = lambda p, j: (0, 0)          # weights: DMA'd once, VMEM-resident
    per_tile = lambda p, j: (j, 0)       # batch-streamed tensors

    in_specs = [
        pl.BlockSpec((TB, S), per_tile),               # state
        pl.BlockSpec((TB, A), per_tile),               # action
        pl.BlockSpec((S, N1), const),                  # w1
        pl.BlockSpec((1, N1), const),                  # b1
        pl.BlockSpec((N1, N2), const),                 # w2 (state part)
        pl.BlockSpec((A, N2), const),                  # w2 (action part)
        pl.BlockSpec((1, N2), const),                  # b2
        pl.BlockSpec((N2, N3), const),                 # w3
        pl.BlockSpec((1, N3), const),                  # b3
        pl.BlockSpec((1, N3), const),                  # w4 (stored (1, n3))
        pl.BlockSpec((1, 1), const),                   # b4
        pl.BlockSpec((1, N1), const),                  # bn gamma
        pl.BlockSpec((1, N1), const),                  # bn beta
    ]
    # Lane-dense output slab: one (1, TB) row per batch tile, written in
    # phase 1 only (phase 0 pins the block index to 0 -> no garbage writeback).
    out_specs = pl.BlockSpec((1, 1, TB), lambda p, j: (p * j, 0, 0))

    n_w = S * N1 + N1 * N2 + A * N2 + N2 * N3 + N3
    cost = pl.CostEstimate(
        flops=(2 * 2 * B_pad * S * N1          # fc1 (computed in both phases)
               + 2 * B_pad * (N1 + A) * N2     # fc2
               + 2 * B_pad * N2 * N3           # fc3
               + 2 * B_pad * N3                # head
               + 3 * N1 * N2),                 # one-time BN fold
        transcendentals=N1,                    # rsqrt over 512 BN features
        bytes_accessed=(2 * n_w                        # bf16 weights (once)
                        + 4 * (3 * N1 + N2 + N3 + 1)   # biases + gamma/beta
                        + 2 * 4 * B_pad * (S + A)      # inputs, read per phase
                        + 4 * num_tiles * TB),         # output slab
    )

    out = pl.pallas_call(
        kernel,
        grid=(2, num_tiles),
        in_specs=in_specs,
        out_specs=out_specs,
        out_shape=jax.ShapeDtypeStruct((num_tiles, 1, TB), jnp.float32),
        scratch_shapes=[
            pltpu.VMEM((1, N1), jnp.float32),          # sum(x)
            pltpu.VMEM((1, N1), jnp.float32),          # sum(x*x)
            pltpu.VMEM((N1 + A, N2), jnp.bfloat16),    # BN-folded fc2 weight
            pltpu.VMEM((1, N2), jnp.float32),          # BN-folded fc2 bias
        ],
        compiler_params=pltpu.CompilerParams(
            # Phase ordering and the BN accumulation make both axes sequential.
            dimension_semantics=("arbitrary", "arbitrary"),
            vmem_limit_bytes=32 * 1024 * 1024,
        ),
        cost_estimate=cost,
    )(state, action,
      params["w1"], params["b1"],
      params["w2s"], params["w2a"], params["b2"],
      params["w3"], params["b3"],
      params["w4"], params["b4"],
      params["gamma"], params["beta"])

    return out.reshape(B_pad, 1)[:B]


def init_params(key, state_size, action_size):
    """Deterministic init mirroring the PyTorch module's reset_parameters().

    PyTorch's hidden_init uses weight.size()[0] == out_features, so
    lim = 1/sqrt(out_features) for fc1..fc3; fc4 weight ~ U(-3e-3, 3e-3).
    Biases keep the default nn.Linear init U(-1/sqrt(in_features), +...).
    Weights are stored bf16 (kernel accumulates in f32); biases/BN stay f32.
    """
    ks = jax.random.split(key, 8)

    def u(k, shape, lim):
        return jax.random.uniform(k, shape, jnp.float32, minval=-lim, maxval=lim)

    bf16 = jnp.bfloat16

    w1 = u(ks[0], (state_size, N1), 1.0 / jnp.sqrt(N1)).astype(bf16)
    b1 = u(ks[1], (1, N1), 1.0 / jnp.sqrt(state_size))

    # fc2 acts on concat([xs, action]); split its (n1+action_size, n2) weight.
    lim2 = 1.0 / jnp.sqrt(N2)
    w2 = u(ks[2], (N1 + action_size, N2), lim2)
    w2s, w2a = w2[:N1].astype(bf16), w2[N1:].astype(bf16)
    b2 = u(ks[3], (1, N2), 1.0 / jnp.sqrt(N1 + action_size))

    w3 = u(ks[4], (N2, N3), 1.0 / jnp.sqrt(N3)).astype(bf16)
    b3 = u(ks[5], (1, N3), 1.0 / jnp.sqrt(N2))

    # fc4 stored as (1, N3) so the kernel contracts it lane-dense for the head.
    w4 = u(ks[6], (1, N3), 0.003).astype(bf16)
    b4 = u(ks[7], (1, 1), 1.0 / jnp.sqrt(N3))

    # BatchNorm1d affine params at PyTorch init values.
    gamma = jnp.ones((1, N1), jnp.float32)
    beta = jnp.zeros((1, N1), jnp.float32)

    return dict(w1=w1, b1=b1, w2s=w2s, w2a=w2a, b2=b2, w3=w3, b3=b3,
                w4=w4, b4=b4, gamma=gamma, beta=beta)


def reference_forward(state, action, params):
    """Pure-JAX reference: straightforward (un-folded) BN path, bf16 weights."""
    bf16 = jnp.bfloat16
    xs = jnp.dot(state.astype(bf16), params["w1"],
                 preferred_element_type=jnp.float32) + params["b1"]
    xs = jnp.maximum(xs, 0.0)
    mean = jnp.mean(xs, axis=0, keepdims=True)
    var = jnp.maximum(jnp.mean(xs * xs, axis=0, keepdims=True) - mean * mean, 0.0)
    xs_n = ((xs - mean) * jax.lax.rsqrt(var + BN_EPS)
            * params["gamma"] + params["beta"])
    cat = jnp.concatenate([xs_n, action], axis=1)
    w2 = jnp.concatenate([params["w2s"], params["w2a"]], axis=0)
    x = jnp.dot(cat.astype(bf16), w2,
                preferred_element_type=jnp.float32) + params["b2"]
    x = jnp.maximum(x, 0.0)
    x = jnp.dot(x.astype(bf16), params["w3"],
                preferred_element_type=jnp.float32) + params["b3"]
    x = jnp.maximum(x, 0.0)
    return jnp.sum(x * params["w4"].astype(jnp.float32), axis=-1,
                   keepdims=True) + params["b4"]


if __name__ == "__main__":
    key = jax.random.PRNGKey(0)
    k_state, k_action, k_param = jax.random.split(key, 3)

    # Small shapes for the correctness demo; for throughput use B >= 256 so
    # each batch tile fills the 256-row MXU dimension on v6e/v7x.
    B, STATE_SIZE, ACTION_SIZE = 8, 32, 8
    state = jax.random.normal(k_state, (B, STATE_SIZE), jnp.float32)
    action = jax.random.normal(k_action, (B, ACTION_SIZE), jnp.float32)
    params = init_params(k_param, STATE_SIZE, ACTION_SIZE)

    out = critic_forward(state, action, params)
    out = jax.block_until_ready(out)

    ref = reference_forward(state, action, params)

    assert out.shape == (B, 1), out.shape
    assert jnp.allclose(out, ref, atol=3e-3, rtol=2e-2), (out, ref)
    print("KERNEL_OK")
</pallas_src>

<mosaic_0001>
module attributes {stable_mosaic.version = 11 : i64} {
  func.func @_critic_kernel(%arg0: i32, %arg1: i32, %arg2: memref<8x32xf32, #tpu.memory_space<vmem>>, %arg3: memref<8x8xf32, #tpu.memory_space<vmem>>, %arg4: memref<32x512xbf16, #tpu.memory_space<vmem>>, %arg5: memref<1x512xf32, #tpu.memory_space<vmem>>, %arg6: memref<512x256xbf16, #tpu.memory_space<vmem>>, %arg7: memref<8x256xbf16, #tpu.memory_space<vmem>>, %arg8: memref<1x256xf32, #tpu.memory_space<vmem>>, %arg9: memref<256x128xbf16, #tpu.memory_space<vmem>>, %arg10: memref<1x128xf32, #tpu.memory_space<vmem>>, %arg11: memref<1x128xbf16, #tpu.memory_space<vmem>>, %arg12: memref<1x1xf32, #tpu.memory_space<vmem>>, %arg13: memref<1x512xf32, #tpu.memory_space<vmem>>, %arg14: memref<1x512xf32, #tpu.memory_space<vmem>>, %arg15: memref<1x1x8xf32, #tpu.memory_space<vmem>>, %arg16: memref<1x512xf32, #tpu.memory_space<vmem>>, %arg17: memref<1x512xf32, #tpu.memory_space<vmem>>, %arg18: memref<520x256xbf16, #tpu.memory_space<vmem>>, %arg19: memref<1x256xf32, #tpu.memory_space<vmem>>) attributes {dimension_semantics = [#tpu.dimension_semantics<arbitrary>, #tpu.dimension_semantics<arbitrary>], iteration_bounds = array<i64: 2, 1>, scalar_prefetch = 0 : i64, scratch_operands = 4 : i64, tpu.core_type = #tpu.core_type<tc>, window_params = [{transform_indices = @transform_0, window_bounds = array<i64: 8, 32>}, {transform_indices = @transform_1, window_bounds = array<i64: 8, 8>}, {pipeline_mode = #tpu.pipeline_mode<synchronous>, transform_indices = @transform_2, window_bounds = array<i64: 32, 512>}, {pipeline_mode = #tpu.pipeline_mode<synchronous>, transform_indices = @transform_3, window_bounds = array<i64: 1, 512>}, {pipeline_mode = #tpu.pipeline_mode<synchronous>, transform_indices = @transform_4, window_bounds = array<i64: 512, 256>}, {pipeline_mode = #tpu.pipeline_mode<synchronous>, transform_indices = @transform_5, window_bounds = array<i64: 8, 256>}, {pipeline_mode = #tpu.pipeline_mode<synchronous>, transform_indices = @transform_6, window_bounds = array<i64: 1, 256>}, {pipeline_mode = #tpu.pipeline_mode<synchronous>, transform_indices = @transform_7, window_bounds = array<i64: 256, 128>}, {pipeline_mode = #tpu.pipeline_mode<synchronous>, transform_indices = @transform_8, window_bounds = array<i64: 1, 128>}, {pipeline_mode = #tpu.pipeline_mode<synchronous>, transform_indices = @transform_9, window_bounds = array<i64: 1, 128>}, {pipeline_mode = #tpu.pipeline_mode<synchronous>, transform_indices = @transform_10, window_bounds = array<i64: 1, 1>}, {pipeline_mode = #tpu.pipeline_mode<synchronous>, transform_indices = @transform_11, window_bounds = array<i64: 1, 512>}, {pipeline_mode = #tpu.pipeline_mode<synchronous>, transform_indices = @transform_12, window_bounds = array<i64: 1, 512>}, {transform_indices = @transform_13, window_bounds = array<i64: 1, 1, 8>}]} {
    %c0 = arith.constant 0 : index
    %c0_0 = arith.constant 0 : index
    %0 = vector.load %arg2[%c0, %c0_0] : memref<8x32xf32, #tpu.memory_space<vmem>>, vector<8x32xf32>
    %1 = arith.truncf %0 : vector<8x32xf32> to vector<8x32xbf16>
    %c0_1 = arith.constant 0 : index
    %c0_2 = arith.constant 0 : index
    %2 = vector.load %arg4[%c0_1, %c0_2] : memref<32x512xbf16, #tpu.memory_space<vmem>>, vector<32x512xbf16>
    %cst = arith.constant dense<0.000000e+00> : vector<8x512xf32>
    %3 = tpu.matmul %1, %2, %cst {dimension_numbers = #tpu.dot_dimension_numbers<[1], [0], [0], [1], [0, 0, 1, 1], [], []>} : vector<8x32xbf16>, vector<32x512xbf16>, vector<8x512xf32> -> vector<8x512xf32>
    %c0_3 = arith.constant 0 : index
    %c0_4 = arith.constant 0 : index
    %4 = vector.load %arg5[%c0_3, %c0_4] : memref<1x512xf32, #tpu.memory_space<vmem>>, vector<1x512xf32>
    %5 = vector.broadcast %4 : vector<1x512xf32> to vector<8x512xf32>
    %6 = arith.addf %3, %5 : vector<8x512xf32>
    %cst_5 = arith.constant 0.000000e+00 : f32
    %7 = vector.broadcast %cst_5 : f32 to vector<8x512xf32>
    %8 = arith.maximumf %6, %7 : vector<8x512xf32>
    %c0_i32 = arith.constant 0 : i32
    %9 = arith.cmpi eq, %arg0, %c0_i32 : i32
    %10 = arith.extui %9 : i1 to i32
    %c0_i32_6 = arith.constant 0 : i32
    %11 = arith.cmpi ne, %10, %c0_i32_6 : i32
    scf.if %11 {
      %c0_i32_8 = arith.constant 0 : i32
      %15 = arith.cmpi eq, %arg1, %c0_i32_8 : i32
      %16 = arith.extui %15 : i1 to i32
      %c0_i32_9 = arith.constant 0 : i32
      %17 = arith.cmpi ne, %16, %c0_i32_9 : i32
      scf.if %17 {
        %cst_20 = arith.constant 0.000000e+00 : f32
        %29 = vector.broadcast %cst_20 : f32 to vector<1x512xf32>
        %c0_21 = arith.constant 0 : index
        %c0_22 = arith.constant 0 : index
        %30 = vector.load %arg16[%c0_21, %c0_22] : memref<1x512xf32, #tpu.memory_space<vmem>>, vector<1x512xf32>
        tpu.vector_store %arg16[%c0_21, %c0_22], %29 {strides = array<i32>} : memref<1x512xf32, #tpu.memory_space<vmem>>, vector<1x512xf32>,
        %cst_23 = arith.constant 0.000000e+00 : f32
        %31 = vector.broadcast %cst_23 : f32 to vector<1x512xf32>
        %c0_24 = arith.constant 0 : index
        %c0_25 = arith.constant 0 : index
        %32 = vector.load %arg17[%c0_24, %c0_25] : memref<1x512xf32, #tpu.memory_space<vmem>>, vector<1x512xf32>
        tpu.vector_store %arg17[%c0_24, %c0_25], %31 {strides = array<i32>} : memref<1x512xf32, #tpu.memory_space<vmem>>, vector<1x512xf32>,
      } else {
      }
      %c0_10 = arith.constant 0 : index
      %c0_11 = arith.constant 0 : index
      %18 = vector.load %arg16[%c0_10, %c0_11] : memref<1x512xf32, #tpu.memory_space<vmem>>, vector<1x512xf32>
      %cst_12 = arith.constant dense<0.000000e+00> : vector<512xf32>
      %19 = vector.multi_reduction <add>, %8, %cst_12 [0] : vector<8x512xf32> to vector<512xf32>
      %20 = vector.shape_cast %19 : vector<512xf32> to vector<1x512xf32>
      %21 = arith.addf %18, %20 : vector<1x512xf32>
      %c0_13 = arith.constant 0 : index
      %c0_14 = arith.constant 0 : index
      %22 = vector.load %arg16[%c0_13, %c0_14] : memref<1x512xf32, #tpu.memory_space<vmem>>, vector<1x512xf32>
      tpu.vector_store %arg16[%c0_13, %c0_14], %21 {strides = array<i32>} : memref<1x512xf32, #tpu.memory_space<vmem>>, vector<1x512xf32>,
      %c0_15 = arith.constant 0 : index
      %c0_16 = arith.constant 0 : index
      %23 = vector.load %arg17[%c0_15, %c0_16] : memref<1x512xf32, #tpu.memory_space<vmem>>, vector<1x512xf32>
      %24 = arith.mulf %8, %8 : vector<8x512xf32>
      %cst_17 = arith.constant dense<0.000000e+00> : vector<512xf32>
      %25 = vector.multi_reduction <add>, %24, %cst_17 [0] : vector<8x512xf32> to vector<512xf32>
      %26 = vector.shape_cast %25 : vector<512xf32> to vector<1x512xf32>
      %27 = arith.addf %23, %26 : vector<1x512xf32>
      %c0_18 = arith.constant 0 : index
      %c0_19 = arith.constant 0 : index
      %28 = vector.load %arg17[%c0_18, %c0_19] : memref<1x512xf32, #tpu.memory_space<vmem>>, vector<1x512xf32>
      tpu.vector_store %arg17[%c0_18, %c0_19], %27 {strides = array<i32>} : memref<1x512xf32, #tpu.memory_space<vmem>>, vector<1x512xf32>,
    } else {
    }
    %c1_i32 = arith.constant 1 : i32
    %12 = arith.cmpi eq, %arg0, %c1_i32 : i32
    %13 = arith.extui %12 : i1 to i32
    %c0_i32_7 = arith.constant 0 : i32
    %14 = arith.cmpi ne, %13, %c0_i32_7 : i32
    scf.if %14 {
      %c0_i32_8 = arith.constant 0 : i32
      %15 = arith.cmpi eq, %arg1, %c0_i32_8 : i32
      %16 = arith.extui %15 : i1 to i32
      %c0_i32_9 = arith.constant 0 : i32
      %17 = arith.cmpi ne, %16, %c0_i32_9 : i32
      scf.if %17 {
        %c0_32 = arith.constant 0 : index
        %c0_33 = arith.constant 0 : index
        %46 = vector.load %arg16[%c0_32, %c0_33] : memref<1x512xf32, #tpu.memory_space<vmem>>, vector<1x512xf32>
        %cst_34 = arith.constant 1.250000e-01 : f32
        %47 = vector.broadcast %cst_34 : f32 to vector<1x512xf32>
        %48 = arith.mulf %46, %47 : vector<1x512xf32>
        %c0_35 = arith.constant 0 : index
        %c0_36 = arith.constant 0 : index
        %49 = vector.load %arg17[%c0_35, %c0_36] : memref<1x512xf32, #tpu.memory_space<vmem>>, vector<1x512xf32>
        %cst_37 = arith.constant 1.250000e-01 : f32
        %50 = vector.broadcast %cst_37 : f32 to vector<1x512xf32>
        %51 = arith.mulf %49, %50 : vector<1x512xf32>
        %52 = arith.mulf %48, %48 : vector<1x512xf32>
        %53 = arith.subf %51, %52 : vector<1x512xf32>
        %cst_38 = arith.constant 0.000000e+00 : f32
        %54 = vector.broadcast %cst_38 : f32 to vector<1x512xf32>
        %55 = arith.maximumf %53, %54 : vector<1x512xf32>
        %cst_39 = arith.constant 9.99999974E-6 : f32
        %56 = vector.broadcast %cst_39 : f32 to vector<1x512xf32>
        %57 = arith.addf %55, %56 : vector<1x512xf32>
        %58 = math.rsqrt %57 : vector<1x512xf32>
        %c0_40 = arith.constant 0 : index
        %c0_41 = arith.constant 0 : index
        %59 = vector.load %arg13[%c0_40, %c0_41] : memref<1x512xf32, #tpu.memory_space<vmem>>, vector<1x512xf32>
        %60 = arith.mulf %59, %58 : vector<1x512xf32>
        %c0_42 = arith.constant 0 : index
        %c0_43 = arith.constant 0 : index
        %61 = vector.load %arg14[%c0_42, %c0_43] : memref<1x512xf32, #tpu.memory_space<vmem>>, vector<1x512xf32>
        %62 = arith.mulf %48, %60 : vector<1x512xf32>
        %63 = arith.subf %61, %62 : vector<1x512xf32>
        %c0_44 = arith.constant 0 : index
        %c0_45 = arith.constant 0 : index
        %64 = vector.load %arg6[%c0_44, %c0_45] : memref<512x256xbf16, #tpu.memory_space<vmem>>, vector<512x256xbf16>
        %65 = arith.extf %64 : vector<512x256xbf16> to vector<512x256xf32>
        %66 = tpu.transpose %60, [1, 0] : vector<1x512xf32> -> vector<512x1xf32>
        %67 = vector.broadcast %66 : vector<512x1xf32> to vector<512x256xf32>
        %68 = arith.mulf %65, %67 : vector<512x256xf32>
        %69 = arith.truncf %68 : vector<512x256xf32> to vector<512x256xbf16>
        %c0_46 = arith.constant 0 : index
        %c0_47 = arith.constant 0 : index
        %70 = vector.load %arg18[%c0_46, %c0_47] : memref<520x256xbf16, #tpu.memory_space<vmem>>, vector<512x256xbf16>
        tpu.vector_store %arg18[%c0_46, %c0_47], %69 {strides = array<i32>} : memref<520x256xbf16, #tpu.memory_space<vmem>>, vector<512x256xbf16>,
        %c0_48 = arith.constant 0 : index
        %c0_49 = arith.constant 0 : index
        %71 = vector.load %arg7[%c0_48, %c0_49] : memref<8x256xbf16, #tpu.memory_space<vmem>>, vector<8x256xbf16>
        %c512 = arith.constant 512 : index
        %c0_50 = arith.constant 0 : index
        %72 = vector.load %arg18[%c512, %c0_50] : memref<520x256xbf16, #tpu.memory_space<vmem>>, vector<8x256xbf16>
        tpu.vector_store %arg18[%c512, %c0_50], %71 {strides = array<i32>} : memref<520x256xbf16, #tpu.memory_space<vmem>>, vector<8x256xbf16>,
        %c0_51 = arith.constant 0 : index
        %c0_52 = arith.constant 0 : index
        %73 = vector.load %arg8[%c0_51, %c0_52] : memref<1x256xf32, #tpu.memory_space<vmem>>, vector<1x256xf32>
        %cst_53 = arith.constant dense<0.000000e+00> : vector<1x256xf32>
        %74 = tpu.matmul %63, %65, %cst_53 {dimension_numbers = #tpu.dot_dimension_numbers<[1], [0], [0], [1], [0, 0, 1, 1], [], []>} : vector<1x512xf32>, vector<512x256xf32>, vector<1x256xf32> -> vector<1x256xf32>
        %75 = arith.addf %73, %74 : vector<1x256xf32>
        %c0_54 = arith.constant 0 : index
        %c0_55 = arith.constant 0 : index
        %76 = vector.load %arg19[%c0_54, %c0_55] : memref<1x256xf32, #tpu.memory_space<vmem>>, vector<1x256xf32>
        tpu.vector_store %arg19[%c0_54, %c0_55], %75 {strides = array<i32>} : memref<1x256xf32, #tpu.memory_space<vmem>>, vector<1x256xf32>,
      } else {
      }
      %18 = arith.truncf %8 : vector<8x512xf32> to vector<8x512xbf16>
      %c0_10 = arith.constant 0 : index
      %c0_11 = arith.constant 0 : index
      %19 = vector.load %arg3[%c0_10, %c0_11] : memref<8x8xf32, #tpu.memory_space<vmem>>, vector<8x8xf32>
      %20 = arith.truncf %19 : vector<8x8xf32> to vector<8x8xbf16>
      %21 = tpu.concatenate %18, %20 in 1 : vector<8x512xbf16>, vector<8x8xbf16> -> vector<8x520xbf16>
      %c0_12 = arith.constant 0 : index
      %c0_13 = arith.constant 0 : index
      %22 = vector.load %arg18[%c0_12, %c0_13] : memref<520x256xbf16, #tpu.memory_space<vmem>>, vector<520x256xbf16>
      %cst_14 = arith.constant dense<0.000000e+00> : vector<8x256xf32>
      %23 = tpu.matmul %21, %22, %cst_14 {dimension_numbers = #tpu.dot_dimension_numbers<[1], [0], [0], [1], [0, 0, 1, 1], [], []>} : vector<8x520xbf16>, vector<520x256xbf16>, vector<8x256xf32> -> vector<8x256xf32>
      %c0_15 = arith.constant 0 : index
      %c0_16 = arith.constant 0 : index
      %24 = vector.load %arg19[%c0_15, %c0_16] : memref<1x256xf32, #tpu.memory_space<vmem>>, vector<1x256xf32>
      %25 = vector.broadcast %24 : vector<1x256xf32> to vector<8x256xf32>
      %26 = arith.addf %23, %25 : vector<8x256xf32>
      %cst_17 = arith.constant 0.000000e+00 : f32
      %27 = vector.broadcast %cst_17 : f32 to vector<8x256xf32>
      %28 = arith.maximumf %26, %27 : vector<8x256xf32>
      %29 = arith.truncf %28 : vector<8x256xf32> to vector<8x256xbf16>
      %c0_18 = arith.constant 0 : index
      %c0_19 = arith.constant 0 : index
      %30 = vector.load %arg9[%c0_18, %c0_19] : memref<256x128xbf16, #tpu.memory_space<vmem>>, vector<256x128xbf16>
      %cst_20 = arith.constant dense<0.000000e+00> : vector<8x128xf32>
      %31 = tpu.matmul %29, %30, %cst_20 {dimension_numbers = #tpu.dot_dimension_numbers<[1], [0], [0], [1], [0, 0, 1, 1], [], []>} : vector<8x256xbf16>, vector<256x128xbf16>, vector<8x128xf32> -> vector<8x128xf32>
      %c0_21 = arith.constant 0 : index
      %c0_22 = arith.constant 0 : index
      %32 = vector.load %arg10[%c0_21, %c0_22] : memref<1x128xf32, #tpu.memory_space<vmem>>, vector<1x128xf32>
      %33 = vector.broadcast %32 : vector<1x128xf32> to vector<8x128xf32>
      %34 = arith.addf %31, %33 : vector<8x128xf32>
      %cst_23 = arith.constant 0.000000e+00 : f32
      %35 = vector.broadcast %cst_23 : f32 to vector<8x128xf32>
      %36 = arith.maximumf %34, %35 : vector<8x128xf32>
      %c0_24 = arith.constant 0 : index
      %c0_25 = arith.constant 0 : index
      %37 = vector.load %arg11[%c0_24, %c0_25] : memref<1x128xbf16, #tpu.memory_space<vmem>>, vector<1x128xbf16>
      %38 = arith.extf %37 : vector<1x128xbf16> to vector<1x128xf32>
      %cst_26 = arith.constant dense<0.000000e+00> : vector<1x8xf32>
      %39 = tpu.matmul %38, %36, %cst_26 {dimension_numbers = #tpu.dot_dimension_numbers<[1], [1], [0], [0], [0, 0, 1, 0], [], []>} : vector<1x128xf32>, vector<8x128xf32>, vector<1x8xf32> -> vector<1x8xf32>
      %c0_27 = arith.constant 0 : index
      %c0_28 = arith.constant 0 : index
      %40 = vector.load %arg12[%c0_27, %c0_28] : memref<1x1xf32, #tpu.memory_space<vmem>>, vector<1x1xf32>
      %41 = vector.broadcast %40 : vector<1x1xf32> to vector<1x8xf32>
      %42 = arith.addf %39, %41 : vector<1x8xf32>
      %c0_29 = arith.constant 0 : index
      %c0_30 = arith.constant 0 : index
      %c0_31 = arith.constant 0 : index
      %43 = vector.load %arg15[%c0_29, %c0_30, %c0_31] : memref<1x1x8xf32, #tpu.memory_space<vmem>>, vector<1x1x8xf32>
      %44 = vector.shape_cast %43 : vector<1x1x8xf32> to vector<1x8xf32>
      %45 = vector.shape_cast %42 : vector<1x8xf32> to vector<1x1x8xf32>
      tpu.vector_store %arg15[%c0_29, %c0_30, %c0_31], %45 {strides = array<i32>} : memref<1x1x8xf32, #tpu.memory_space<vmem>>, vector<1x1x8xf32>,
    } else {
    }
    return
  }
  func.func @transform_0(%arg0: i32, %arg1: i32) -> (i32, i32) {
    %c0_i32 = arith.constant 0 : i32
    %c0_i32_0 = arith.constant 0 : i32
    return %arg1, %c0_i32 : i32, i32
  }
  func.func @transform_1(%arg0: i32, %arg1: i32) -> (i32, i32) {
    %c0_i32 = arith.constant 0 : i32
    %c0_i32_0 = arith.constant 0 : i32
    return %arg1, %c0_i32 : i32, i32
  }
  func.func @transform_2(%arg0: i32, %arg1: i32) -> (i32, i32) {
    %c0_i32 = arith.constant 0 : i32
    %c0_i32_0 = arith.constant 0 : i32
    %c0_i32_1 = arith.constant 0 : i32
    return %c0_i32, %c0_i32_0 : i32, i32
  }
  func.func @transform_3(%arg0: i32, %arg1: i32) -> (i32, i32) {
    %c0_i32 = arith.constant 0 : i32
    %c0_i32_0 = arith.constant 0 : i32
    %c0_i32_1 = arith.constant 0 : i32
    return %c0_i32, %c0_i32_0 : i32, i32
  }
  func.func @transform_4(%arg0: i32, %arg1: i32) -> (i32, i32) {
    %c0_i32 = arith.constant 0 : i32
    %c0_i32_0 = arith.constant 0 : i32
    %c0_i32_1 = arith.constant 0 : i32
    return %c0_i32, %c0_i32_0 : i32, i32
  }
  func.func @transform_5(%arg0: i32, %arg1: i32) -> (i32, i32) {
    %c0_i32 = arith.constant 0 : i32
    %c0_i32_0 = arith.constant 0 : i32
    %c0_i32_1 = arith.constant 0 : i32
    return %c0_i32, %c0_i32_0 : i32, i32
  }
  func.func @transform_6(%arg0: i32, %arg1: i32) -> (i32, i32) {
    %c0_i32 = arith.constant 0 : i32
    %c0_i32_0 = arith.constant 0 : i32
    %c0_i32_1 = arith.constant 0 : i32
    return %c0_i32, %c0_i32_0 : i32, i32
  }
  func.func @transform_7(%arg0: i32, %arg1: i32) -> (i32, i32) {
    %c0_i32 = arith.constant 0 : i32
    %c0_i32_0 = arith.constant 0 : i32
    %c0_i32_1 = arith.constant 0 : i32
    return %c0_i32, %c0_i32_0 : i32, i32
  }
  func.func @transform_8(%arg0: i32, %arg1: i32) -> (i32, i32) {
    %c0_i32 = arith.constant 0 : i32
    %c0_i32_0 = arith.constant 0 : i32
    %c0_i32_1 = arith.constant 0 : i32
    return %c0_i32, %c0_i32_0 : i32, i32
  }
  func.func @transform_9(%arg0: i32, %arg1: i32) -> (i32, i32) {
    %c0_i32 = arith.constant 0 : i32
    %c0_i32_0 = arith.constant 0 : i32
    %c0_i32_1 = arith.constant 0 : i32
    return %c0_i32, %c0_i32_0 : i32, i32
  }
  func.func @transform_10(%arg0: i32, %arg1: i32) -> (i32, i32) {
    %c0_i32 = arith.constant 0 : i32
    %c0_i32_0 = arith.constant 0 : i32
    %c0_i32_1 = arith.constant 0 : i32
    return %c0_i32, %c0_i32_0 : i32, i32
  }
  func.func @transform_11(%arg0: i32, %arg1: i32) -> (i32, i32) {
    %c0_i32 = arith.constant 0 : i32
    %c0_i32_0 = arith.constant 0 : i32
    %c0_i32_1 = arith.constant 0 : i32
    return %c0_i32, %c0_i32_0 : i32, i32
  }
  func.func @transform_12(%arg0: i32, %arg1: i32) -> (i32, i32) {
    %c0_i32 = arith.constant 0 : i32
    %c0_i32_0 = arith.constant 0 : i32
    %c0_i32_1 = arith.constant 0 : i32
    return %c0_i32, %c0_i32_0 : i32, i32
  }
  func.func @transform_13(%arg0: i32, %arg1: i32) -> (i32, i32, i32) {
    %0 = arith.muli %arg0, %arg1 : i32
    %c0_i32 = arith.constant 0 : i32
    %c0_i32_0 = arith.constant 0 : i32
    %c0_i32_1 = arith.constant 0 : i32
    return %0, %c0_i32, %c0_i32_0 : i32, i32, i32
  }
}

</mosaic_0001>

<llo_original>
// kernel: tpu_custom_call.1
$region0: #{tpu_custom_call.1}
  #allocation0 [shape = 'u32[]', space=smem, size = 0x4, offset = 0x4, fixed_abs, tag = 'smem constant byte address 0x4 - core index']
  #allocation1 [shape = 'u32[144,128]{1,0:T(1,128)}', space=vmem, size = 0x12000, scoped, tag = 'internal scratch']
  #allocation2 [shape = 'f32[1,512]{1,0:T(1,128)}', space=vmem, size = 0x800, scoped, tag = 'scratch operand']
  #allocation3 [shape = 'f32[1,512]{1,0:T(1,128)}', space=vmem, size = 0x800, scoped, tag = 'scratch operand']
  #allocation4 [shape = 'bf16[520,256]{1,0:T(8,128)(2,1)}', space=vmem, size = 0x41000, scoped, tag = 'scratch operand']
  #allocation5 [shape = 'f32[1,256]{1,0:T(1,128)}', space=vmem, size = 0x400, scoped, tag = 'scratch operand']
  #allocation6 [shape = 'f32[1,1]{1,0:T(1,128)S(1)}', space=vmem, size = 0x200, scoped, tag = 'scoped memory for tpu_custom_call.1']
  %s0 = inlined_call_operand.hbm [shape: f32[8,32], index: 0, kind: input, shape index: {}]
  %s1 = inlined_call_operand.hbm [shape: f32[8,8], index: 1, kind: input, shape index: {}]
  %s2 = inlined_call_operand.hbm [shape: bf16[32,512], index: 2, kind: input, shape index: {}]
  %s3 = inlined_call_operand.vmem [shape: f32[1,512], index: 3, kind: input, shape index: {}]
  %s4 = inlined_call_operand.hbm [shape: bf16[512,256], index: 4, kind: input, shape index: {}]
  %s5 = inlined_call_operand.vmem [shape: bf16[8,256], index: 5, kind: input, shape index: {}]
  %s6 = inlined_call_operand.vmem [shape: f32[1,256], index: 6, kind: input, shape index: {}]
  %s7 = inlined_call_operand.hbm [shape: bf16[256,128], index: 7, kind: input, shape index: {}]
  %s8 = inlined_call_operand.vmem [shape: f32[1,128], index: 8, kind: input, shape index: {}]
  %s9 = inlined_call_operand.vmem [shape: bf16[1,128], index: 9, kind: input, shape index: {}]
  %s10 = inlined_call_operand.<no memory space> [shape: f32[1,1], index: 10, kind: input, shape index: {}]
  %s11 = inlined_call_operand.vmem [shape: f32[1,512], index: 11, kind: input, shape index: {}]
  %s12 = inlined_call_operand.vmem [shape: f32[1,512], index: 12, kind: input, shape index: {}]
  %s13 = inlined_call_operand.hbm [shape: f32[1,1,8], index: 13, kind: output, shape index: {}]
  %s14 = sld [smem:[#allocation0]]
  $region121: #{tpu_custom_call.1} parent=0
    _
  %s16 = ssub.s32 1, %s14
  %s17 = scalar_select 0, %s16, %s14
  %v18 = vstv %s10
  %19 = vst [vmem:[#allocation6] sm:$0x1] %v18
  $region1: #{tpu_custom_call.1} parent=0
    #allocation7 [shape = 'u8[4096]{0}', space=vmem, size = 0x1000, scoped, tag = 'input window, operand 0, single buffered']
    #allocation8 [shape = 's32[2]{0}', space=sflag, size = 0x8, scoped, tag = 'scoped memory for tpu_custom_call.1']
    #allocation9 [shape = 's32[2]{0}', space=sflag, size = 0x8, scoped, tag = 'scoped memory for tpu_custom_call.1']
    #allocation10 [shape = 'u8[4096]{0}', space=vmem, size = 0x1000, scoped, tag = 'input window, operand 1, single buffered']
    #allocation11 [shape = 's32[1]{0}', space=sflag, size = 0x4, scoped, tag = 'scoped memory for tpu_custom_call.1']
    #allocation12 [shape = 'u8[32768]{0}', space=vmem, size = 0x8000, scoped, tag = 'input window, operand 2, single buffered']
    #allocation13 [shape = 'u8[262144]{0}', space=vmem, size = 0x40000, scoped, tag = 'input window, operand 4, single buffered']
    #allocation14 [shape = 's32[1]{0}', space=sflag, size = 0x4, scoped, tag = 'scoped memory for tpu_custom_call.1']
    #allocation15 [shape = 'u8[65536]{0}', space=vmem, size = 0x10000, scoped, tag = 'input window, operand 7, single buffered']
    #allocation16 [shape = 'u8[1024]{0}', space=vmem, size = 0x400, scoped, tag = 'output window, operand 0']
    %20 = vsyncpa [#allocation8], 0
    %21 = vsyncpa [#allocation11], 0
    %22 = vsyncpa [#allocation14], 0
    %23 = vsyncpa [#allocation9], 0
    %s24 = scalar_lea.sflag [#allocation9], 1
    %25 = vsyncpa %s24, 0
    loop: start=0, step=1, limit=4
    $region2: #{tpu_custom_call.1} parent=1 // loop_pre_header
      _
    $region3: #{tpu_custom_call.1} parent=1 // loop_header
      %s27 = sphi 0, %s31
      %p28 = scmp.ge.s32.totalorder %s27, 4
      %s34 = sphi 0, %s46
      %s35 = sphi 0, %s42
      %s36 = sphi 0, %s34
      %s37 = sphi 0, %s35
      %s38 = sphi 0, %s36
      %s39 = sphi 0, %s37
      %s49 = sphi 0, %s51
      %s52 = sphi 0, %s49
      %s53 = sphi 0, %s52
      %s69 = sphi 0, %s53
      %s75 = sphi 0, %s77
      %s78 = sphi 0, %s75
      %s79 = sphi 0, %s78
      %s95 = sphi 0, %s79
      %s99 = sphi 0, %s99
      %s101 = sphi 0, %s99
      %s102 = sphi 0, %s101
      %s116 = sphi 0, %s102
      %s120 = sphi 0, %s120
      %s122 = sphi 0, %s120
      %s123 = sphi 0, %s122
      %s137 = sphi 0, %s123
      %s141 = sphi 0, %s141
      %s143 = sphi 0, %s141
      %s144 = sphi 0, %s143
      %s158 = sphi 0, %s144
      %s162 = sphi 0, %s162
      %s164 = sphi 0, %s162
      %s165 = sphi 0, %s164
      %s179 = sphi 0, %s165
      %s183 = sphi 0, %s183
      %s185 = sphi 0, %s183
      %s186 = sphi 0, %s185
      %s200 = sphi 0, %s186
      %s204 = sphi 0, %s204
      %s206 = sphi 0, %s204
      %s207 = sphi 0, %s206
      %s221 = sphi 0, %s207
      %s225 = sphi 0, %s225
      %s227 = sphi 0, %s225
      %s228 = sphi 0, %s227
      %s242 = sphi 0, %s228
      %s246 = sphi 0, %s246
      %s248 = sphi 0, %s246
      %s249 = sphi 0, %s248
      %s263 = sphi 0, %s249
      %s267 = sphi 0, %s267
      %s269 = sphi 0, %s267
      %s270 = sphi 0, %s269
      %s284 = sphi 0, %s270
      %s288 = sphi 0, %s288
      %s290 = sphi 0, %s288
      %s291 = sphi 0, %s290
      %s305 = sphi 0, %s291
      %s309 = sphi 0, %s309
      %s311 = sphi 0, %s309
      %s312 = sphi 0, %s311
      %s326 = sphi 0, %s312
      %s334 = sphi 0, %s336
      %s337 = sphi 0, %s334
      %s338 = sphi 0, %s337
      %s354 = sphi 0, %s338
    $region4: #{tpu_custom_call.1} parent=1 // loop_header_branch
      %30 = sbr.rel (%p28) target = $region8
    $region5: #{tpu_custom_call.1} parent=1 // loop_body
      %s32 = ssub.s32 %s27, 1
      %s33 = ssub.s32 %s27, 2
      %s40 = sadd.s32 1, %s35
      %p41 = scmp.ge.s32.totalorder %s40, 1
      %s42 = scalar_select %p41, 0, %s40
      %s43 = sadd.s32 1, %s34
      %s44 = scalar_select %p41, %s43, %s34
      %p45 = scmp.ge.s32.totalorder %s44, 2
      %s46 = scalar_select %p45, 0, %s44
      %s47 = ssub.s32 %s35, %s42
      %p48 = scmp.eq.s32.totalorder %s47, 0
      %s50 = sadd.s32 %s49, 1
      %s51 = scalar_select %p48, %s49, %s50
      %p54 = pneg %p48
      %p55 = scmp.eq.s32.totalorder %s27, 1
      %p56 = por %p54, %p55
      %p57 = scmp.ne.s32.totalorder %s49, %s52
      %p58 = scmp.eq.s32.totalorder %s27, 0
      %p59 = por %p57, %p58
      %p60 = scmp.ne.s32.totalorder %s49, %s52
      %p61 = scmp.eq.s32.totalorder %s32, 1
      %p62 = por %p60, %p61
      %p63 = scmp.ne.s32.totalorder %s52, %s53
      %p64 = scmp.eq.s32.totalorder %s32, 0
      %p65 = por %p63, %p64
      %p66 = scmp.ne.s32.totalorder %s52, %s53
      %p67 = scmp.eq.s32.totalorder %s33, 1
      %p68 = por %p66, %p67
      %p70 = scmp.ne.s32.totalorder %s53, %s69
      %p71 = scmp.eq.s32.totalorder %s33, 0
      %p72 = por %p70, %p71
      %s73 = ssub.s32 %s35, %s42
      %p74 = scmp.eq.s32.totalorder %s73, 0
      %s76 = sadd.s32 %s75, 1
      %s77 = scalar_select %p74, %s75, %s76
      %p80 = pneg %p74
      %p81 = scmp.eq.s32.totalorder %s27, 1
      %p82 = por %p80, %p81
      %p83 = scmp.ne.s32.totalorder %s75, %s78
      %p84 = scmp.eq.s32.totalorder %s27, 0
      %p85 = por %p83, %p84
      %p86 = scmp.ne.s32.totalorder %s75, %s78
      %p87 = scmp.eq.s32.totalorder %s32, 1
      %p88 = por %p86, %p87
      %p89 = scmp.ne.s32.totalorder %s78, %s79
      %p90 = scmp.eq.s32.totalorder %s32, 0
      %p91 = por %p89, %p90
      %p92 = scmp.ne.s32.totalorder %s78, %s79
      %p93 = scmp.eq.s32.totalorder %s33, 1
      %p94 = por %p92, %p93
      %p96 = scmp.ne.s32.totalorder %s79, %s95
      %p97 = scmp.eq.s32.totalorder %s33, 0
      %p98 = por %p96, %p97
      %s100 = sadd.s32 %s99, 1
      %p103 = scmp.eq.s32.totalorder %s27, 1
      %p104 = scmp.ne.s32.totalorder %s99, %s101
      %p105 = scmp.eq.s32.totalorder %s27, 0
      %p106 = por %p104, %p105
      %p107 = scmp.ne.s32.totalorder %s99, %s101
      %p108 = scmp.eq.s32.totalorder %s32, 1
      %p109 = por %p107, %p108
      %p110 = scmp.ne.s32.totalorder %s101, %s102
      %p111 = scmp.eq.s32.totalorder %s32, 0
      %p112 = por %p110, %p111
      %p113 = scmp.ne.s32.totalorder %s101, %s102
      %p114 = scmp.eq.s32.totalorder %s33, 1
      %p115 = por %p113, %p114
      %p117 = scmp.ne.s32.totalorder %s102, %s116
      %p118 = scmp.eq.s32.totalorder %s33, 0
      %p119 = por %p117, %p118
      %s121 = sadd.s32 %s120, 1
      %p124 = scmp.eq.s32.totalorder %s27, 1
      %p125 = scmp.ne.s32.totalorder %s120, %s122
      %p126 = scmp.eq.s32.totalorder %s27, 0
      %p127 = por %p125, %p126
      %p128 = scmp.ne.s32.totalorder %s120, %s122
      %p129 = scmp.eq.s32.totalorder %s32, 1
      %p130 = por %p128, %p129
      %p131 = scmp.ne.s32.totalorder %s122, %s123
      %p132 = scmp.eq.s32.totalorder %s32, 0
      %p133 = por %p131, %p132
      %p134 = scmp.ne.s32.totalorder %s122, %s123
      %p135 = scmp.eq.s32.totalorder %s33, 1
      %p136 = por %p134, %p135
      %p138 = scmp.ne.s32.totalorder %s123, %s137
      %p139 = scmp.eq.s32.totalorder %s33, 0
      %p140 = por %p138, %p139
      %s142 = sadd.s32 %s141, 1
      %p145 = scmp.eq.s32.totalorder %s27, 1
      %p146 = scmp.ne.s32.totalorder %s141, %s143
      %p147 = scmp.eq.s32.totalorder %s27, 0
      %p148 = por %p146, %p147
      %p149 = scmp.ne.s32.totalorder %s141, %s143
      %p150 = scmp.eq.s32.totalorder %s32, 1
      %p151 = por %p149, %p150
      %p152 = scmp.ne.s32.totalorder %s143, %s144
      %p153 = scmp.eq.s32.totalorder %s32, 0
      %p154 = por %p152, %p153
      %p155 = scmp.ne.s32.totalorder %s143, %s144
      %p156 = scmp.eq.s32.totalorder %s33, 1
      %p157 = por %p155, %p156
      %p159 = scmp.ne.s32.totalorder %s144, %s158
      %p160 = scmp.eq.s32.totalorder %s33, 0
      %p161 = por %p159, %p160
      %s163 = sadd.s32 %s162, 1
      %p166 = scmp.eq.s32.totalorder %s27, 1
      %p167 = scmp.ne.s32.totalorder %s162, %s164
      %p168 = scmp.eq.s32.totalorder %s27, 0
      %p169 = por %p167, %p168
      %p170 = scmp.ne.s32.totalorder %s162, %s164
      %p171 = scmp.eq.s32.totalorder %s32, 1
      %p172 = por %p170, %p171
      %p173 = scmp.ne.s32.totalorder %s164, %s165
      %p174 = scmp.eq.s32.totalorder %s32, 0
      %p175 = por %p173, %p174
      %p176 = scmp.ne.s32.totalorder %s164, %s165
      %p177 = scmp.eq.s32.totalorder %s33, 1
      %p178 = por %p176, %p177
      %p180 = scmp.ne.s32.totalorder %s165, %s179
      %p181 = scmp.eq.s32.totalorder %s33, 0
      %p182 = por %p180, %p181
      %s184 = sadd.s32 %s183, 1
      %p187 = scmp.eq.s32.totalorder %s27, 1
      %p188 = scmp.ne.s32.totalorder %s183, %s185
      %p189 = scmp.eq.s32.totalorder %s27, 0
      %p190 = por %p188, %p189
      %p191 = scmp.ne.s32.totalorder %s183, %s185
      %p192 = scmp.eq.s32.totalorder %s32, 1
      %p193 = por %p191, %p192
      %p194 = scmp.ne.s32.totalorder %s185, %s186
      %p195 = scmp.eq.s32.totalorder %s32, 0
      %p196 = por %p194, %p195
      %p197 = scmp.ne.s32.totalorder %s185, %s186
      %p198 = scmp.eq.s32.totalorder %s33, 1
      %p199 = por %p197, %p198
      %p201 = scmp.ne.s32.totalorder %s186, %s200
      %p202 = scmp.eq.s32.totalorder %s33, 0
      %p203 = por %p201, %p202
      %s205 = sadd.s32 %s204, 1
      %p208 = scmp.eq.s32.totalorder %s27, 1
      %p209 = scmp.ne.s32.totalorder %s204, %s206
      %p210 = scmp.eq.s32.totalorder %s27, 0
      %p211 = por %p209, %p210
      %p212 = scmp.ne.s32.totalorder %s204, %s206
      %p213 = scmp.eq.s32.totalorder %s32, 1
      %p214 = por %p212, %p213
      %p215 = scmp.ne.s32.totalorder %s206, %s207
      %p216 = scmp.eq.s32.totalorder %s32, 0
      %p217 = por %p215, %p216
      %p218 = scmp.ne.s32.totalorder %s206, %s207
      %p219 = scmp.eq.s32.totalorder %s33, 1
      %p220 = por %p218, %p219
      %p222 = scmp.ne.s32.totalorder %s207, %s221
      %p223 = scmp.eq.s32.totalorder %s33, 0
      %p224 = por %p222, %p223
      %s226 = sadd.s32 %s225, 1
      %p229 = scmp.eq.s32.totalorder %s27, 1
      %p230 = scmp.ne.s32.totalorder %s225, %s227
      %p231 = scmp.eq.s32.totalorder %s27, 0
      %p232 = por %p230, %p231
      %p233 = scmp.ne.s32.totalorder %s225, %s227
      %p234 = scmp.eq.s32.totalorder %s32, 1
      %p235 = por %p233, %p234
      %p236 = scmp.ne.s32.totalorder %s227, %s228
      %p237 = scmp.eq.s32.totalorder %s32, 0
      %p238 = por %p236, %p237
      %p239 = scmp.ne.s32.totalorder %s227, %s228
      %p240 = scmp.eq.s32.totalorder %s33, 1
      %p241 = por %p239, %p240
      %p243 = scmp.ne.s32.totalorder %s228, %s242
      %p244 = scmp.eq.s32.totalorder %s33, 0
      %p245 = por %p243, %p244
      %s247 = sadd.s32 %s246, 1
      %p250 = scmp.eq.s32.totalorder %s27, 1
      %p251 = scmp.ne.s32.totalorder %s246, %s248
      %p252 = scmp.eq.s32.totalorder %s27, 0
      %p253 = por %p251, %p252
      %p254 = scmp.ne.s32.totalorder %s246, %s248
      %p255 = scmp.eq.s32.totalorder %s32, 1
      %p256 = por %p254, %p255
      %p257 = scmp.ne.s32.totalorder %s248, %s249
      %p258 = scmp.eq.s32.totalorder %s32, 0
      %p259 = por %p257, %p258
      %p260 = scmp.ne.s32.totalorder %s248, %s249
      %p261 = scmp.eq.s32.totalorder %s33, 1
      %p262 = por %p260, %p261
      %p264 = scmp.ne.s32.totalorder %s249, %s263
      %p265 = scmp.eq.s32.totalorder %s33, 0
      %p266 = por %p264, %p265
      %s268 = sadd.s32 %s267, 1
      %p271 = scmp.eq.s32.totalorder %s27, 1
      %p272 = scmp.ne.s32.totalorder %s267, %s269
      %p273 = scmp.eq.s32.totalorder %s27, 0
      %p274 = por %p272, %p273
      %p275 = scmp.ne.s32.totalorder %s267, %s269
      %p276 = scmp.eq.s32.totalorder %s32, 1
      %p277 = por %p275, %p276
      %p278 = scmp.ne.s32.totalorder %s269, %s270
      %p279 = scmp.eq.s32.totalorder %s32, 0
      %p280 = por %p278, %p279
      %p281 = scmp.ne.s32.totalorder %s269, %s270
      %p282 = scmp.eq.s32.totalorder %s33, 1
      %p283 = por %p281, %p282
      %p285 = scmp.ne.s32.totalorder %s270, %s284
      %p286 = scmp.eq.s32.totalorder %s33, 0
      %p287 = por %p285, %p286
      %s289 = sadd.s32 %s288, 1
      %p292 = scmp.eq.s32.totalorder %s27, 1
      %p293 = scmp.ne.s32.totalorder %s288, %s290
      %p294 = scmp.eq.s32.totalorder %s27, 0
      %p295 = por %p293, %p294
      %p296 = scmp.ne.s32.totalorder %s288, %s290
      %p297 = scmp.eq.s32.totalorder %s32, 1
      %p298 = por %p296, %p297
      %p299 = scmp.ne.s32.totalorder %s290, %s291
      %p300 = scmp.eq.s32.totalorder %s32, 0
      %p301 = por %p299, %p300
      %p302 = scmp.ne.s32.totalorder %s290, %s291
      %p303 = scmp.eq.s32.totalorder %s33, 1
      %p304 = por %p302, %p303
      %p306 = scmp.ne.s32.totalorder %s291, %s305
      %p307 = scmp.eq.s32.totalorder %s33, 0
      %p308 = por %p306, %p307
      %s310 = sadd.s32 %s309, 1
      %p313 = scmp.eq.s32.totalorder %s27, 1
      %p314 = scmp.ne.s32.totalorder %s309, %s311
      %p315 = scmp.eq.s32.totalorder %s27, 0
      %p316 = por %p314, %p315
      %p317 = scmp.ne.s32.totalorder %s309, %s311
      %p318 = scmp.eq.s32.totalorder %s32, 1
      %p319 = por %p317, %p318
      %p320 = scmp.ne.s32.totalorder %s311, %s312
      %p321 = scmp.eq.s32.totalorder %s32, 0
      %p322 = por %p320, %p321
      %p323 = scmp.ne.s32.totalorder %s311, %s312
      %p324 = scmp.eq.s32.totalorder %s33, 1
      %p325 = por %p323, %p324
      %p327 = scmp.ne.s32.totalorder %s312, %s326
      %p328 = scmp.eq.s32.totalorder %s33, 0
      %p329 = por %p327, %p328
      %s330 = smul.u32 %s34, %s35
      %s331 = smul.u32 %s46, %s42
      %s332 = ssub.s32 %s330, %s331
      %p333 = scmp.eq.s32.totalorder %s332, 0
      %s335 = sadd.s32 %s334, 1
      %s336 = scalar_select %p333, %s334, %s335
      %p339 = pneg %p333
      %p340 = scmp.eq.s32.totalorder %s27, 1
      %p341 = por %p339, %p340
      %p342 = scmp.ne.s32.totalorder %s334, %s337
      %p343 = scmp.eq.s32.totalorder %s27, 0
      %p344 = por %p342, %p343
      %p345 = scmp.ne.s32.totalorder %s334, %s337
      %p346 = scmp.eq.s32.totalorder %s32, 1
      %p347 = por %p345, %p346
      %p348 = scmp.ne.s32.totalorder %s337, %s338
      %p349 = scmp.eq.s32.totalorder %s32, 0
      %p350 = por %p348, %p349
      %p351 = scmp.ne.s32.totalorder %s337, %s338
      %p352 = scmp.eq.s32.totalorder %s33, 1
      %p353 = por %p351, %p352
      %p355 = scmp.ne.s32.totalorder %s338, %s354
      %p356 = scmp.eq.s32.totalorder %s33, 0
      %p357 = por %p355, %p356
      %p358 = scmp.le.s32.totalorder 1, %s27
      %p359 = scmp.lt.s32.totalorder %s27, 3
      %p360 = pnand %p358, %p359
      %p361 = pneg %p360
      // Predicated region
      $region9: #{tpu_custom_call.1} parent=5 // pred_check
        _
      $region10: #{tpu_custom_call.1} parent=5 // pred_check_branch
        %363 = sbr.rel (%p360) target = $region12
      $region11: #{tpu_custom_call.1} parent=5 // pred_region
        %s364 = ssub.s32 %s27, 1
        // Predicated region
        $region13: #{tpu_custom_call.1} parent=11 // pred_check
          %p365 = pneg %p65
        $region14: #{tpu_custom_call.1} parent=11 // pred_check_branch
          %367 = sbr.rel (%p365) target = $region16
        $region15: #{tpu_custom_call.1} parent=11 // pred_region
          %s369 = ssub.s32 128, 128
          %370 = vsyncadd [#allocation8], %s369
          %s371 = smul.addr %s37, 128
          %s372 = scalar_lea.hbm %s0, %s371
          %s374 = sshll.u32 [#allocation7], 4
          %s375 = int_to_ptr.vmem [resolvable:$true] %s374
          %377 = dma.hbm_to_vmem [thread:$0]  %s372, 128, %s375, [#allocation8]
        $region16: #{tpu_custom_call.1} parent=11 // pred_fallthru
          _
        // Predicated region
        $region17: #{tpu_custom_call.1} parent=11 // pred_check
          %p378 = pneg %p91
        $region18: #{tpu_custom_call.1} parent=11 // pred_check_branch
          %380 = sbr.rel (%p378) target = $region20
        $region19: #{tpu_custom_call.1} parent=11 // pred_region
          %s382 = ssub.s32 128, 128
          %383 = vsyncadd [#allocation11], %s382
          %s384 = smul.addr %s37, 128
          %s385 = scalar_lea.hbm %s1, %s384
          %s387 = sshll.u32 [#allocation10], 4
          %s388 = int_to_ptr.vmem [resolvable:$true] %s387
          %390 = dma.hbm_to_vmem [thread:$0]  %s385, 128, %s388, [#allocation11]
        $region20: #{tpu_custom_call.1} parent=11 // pred_fallthru
          _
        // Predicated region
        $region21: #{tpu_custom_call.1} parent=11 // pred_check
          %p391 = pneg %p112
        $region22: #{tpu_custom_call.1} parent=11 // pred_check_branch
          %393 = sbr.rel (%p391) target = $region24
        $region23: #{tpu_custom_call.1} parent=11 // pred_region
          %s395 = ssub.s32 1024, 1024
          %396 = vsyncadd [#allocation11], %s395
          %s397 = sshll.u32 [#allocation12], 4
          %s398 = int_to_ptr.vmem [resolvable:$true] %s397
          %403 = dma.hbm_to_vmem [thread:$0]  %s2, 1024, %s398, [#allocation11], 256, 256, 16
        $region24: #{tpu_custom_call.1} parent=11 // pred_fallthru
          _
        // Predicated region
        $region25: #{tpu_custom_call.1} parent=11 // pred_check
          %p404 = pneg %p133
        $region26: #{tpu_custom_call.1} parent=11 // pred_check_branch
          %406 = sbr.rel (%p404) target = $region28
        $region27: #{tpu_custom_call.1} parent=11 // pred_region
          _
        $region28: #{tpu_custom_call.1} parent=11 // pred_fallthru
          _
        // Predicated region
        $region29: #{tpu_custom_call.1} parent=11 // pred_check
          %p407 = pneg %p154
        $region30: #{tpu_custom_call.1} parent=11 // pred_check_branch
          %409 = sbr.rel (%p407) target = $region32
        $region31: #{tpu_custom_call.1} parent=11 // pred_region
          %s411 = ssub.s32 8192, 8192
          %412 = vsyncadd [#allocation14], %s411
          %s413 = sshll.u32 [#allocation13], 4
          %s414 = int_to_ptr.vmem [resolvable:$true] %s413
          %419 = dma.hbm_to_vmem [thread:$0]  %s4, 8192, %s414, [#allocation14], 128, 128, 8
        $region32: #{tpu_custom_call.1} parent=11 // pred_fallthru
          _
        // Predicated region
        $region33: #{tpu_custom_call.1} parent=11 // pred_check
          %p420 = pneg %p175
        $region34: #{tpu_custom_call.1} parent=11 // pred_check_branch
          %422 = sbr.rel (%p420) target = $region36
        $region35: #{tpu_custom_call.1} parent=11 // pred_region
          _
        $region36: #{tpu_custom_call.1} parent=11 // pred_fallthru
          _
        // Predicated region
        $region37: #{tpu_custom_call.1} parent=11 // pred_check
          %p423 = pneg %p196
        $region38: #{tpu_custom_call.1} parent=11 // pred_check_branch
          %425 = sbr.rel (%p423) target = $region40
        $region39: #{tpu_custom_call.1} parent=11 // pred_region
          _
        $region40: #{tpu_custom_call.1} parent=11 // pred_fallthru
          _
        // Predicated region
        $region41: #{tpu_custom_call.1} parent=11 // pred_check
          %p426 = pneg %p217
        $region42: #{tpu_custom_call.1} parent=11 // pred_check_branch
          %428 = sbr.rel (%p426) target = $region44
        $region43: #{tpu_custom_call.1} parent=11 // pred_region
          %s430 = ssub.s32 2048, 2048
          %431 = vsyncadd [#allocation14], %s430
          %s432 = sshll.u32 [#allocation15], 4
          %s433 = int_to_ptr.vmem [resolvable:$true] %s432
          %438 = dma.hbm_to_vmem [thread:$0]  %s7, 2048, %s433, [#allocation14], 64, 64, 4
        $region44: #{tpu_custom_call.1} parent=11 // pred_fallthru
          _
        // Predicated region
        $region45: #{tpu_custom_call.1} parent=11 // pred_check
          %p439 = pneg %p238
        $region46: #{tpu_custom_call.1} parent=11 // pred_check_branch
          %441 = sbr.rel (%p439) target = $region48
        $region47: #{tpu_custom_call.1} parent=11 // pred_region
          _
        $region48: #{tpu_custom_call.1} parent=11 // pred_fallthru
          _
        // Predicated region
        $region49: #{tpu_custom_call.1} parent=11 // pred_check
          %p442 = pneg %p259
        $region50: #{tpu_custom_call.1} parent=11 // pred_check_branch
          %444 = sbr.rel (%p442) target = $region52
        $region51: #{tpu_custom_call.1} parent=11 // pred_region
          _
        $region52: #{tpu_custom_call.1} parent=11 // pred_fallthru
          _
        // Predicated region
        $region53: #{tpu_custom_call.1} parent=11 // pred_check
          %p445 = pneg %p280
        $region54: #{tpu_custom_call.1} parent=11 // pred_check_branch
          %447 = sbr.rel (%p445) target = $region56
        $region55: #{tpu_custom_call.1} parent=11 // pred_region
          _
        $region56: #{tpu_custom_call.1} parent=11 // pred_fallthru
          _
        // Predicated region
        $region57: #{tpu_custom_call.1} parent=11 // pred_check
          %p448 = pneg %p301
        $region58: #{tpu_custom_call.1} parent=11 // pred_check_branch
          %450 = sbr.rel (%p448) target = $region60
        $region59: #{tpu_custom_call.1} parent=11 // pred_region
          _
        $region60: #{tpu_custom_call.1} parent=11 // pred_fallthru
          _
        // Predicated region
        $region61: #{tpu_custom_call.1} parent=11 // pred_check
          %p451 = pneg %p322
        $region62: #{tpu_custom_call.1} parent=11 // pred_check_branch
          %453 = sbr.rel (%p451) target = $region64
        $region63: #{tpu_custom_call.1} parent=11 // pred_region
          _
        $region64: #{tpu_custom_call.1} parent=11 // pred_fallthru
          _
      $region12: #{tpu_custom_call.1} parent=5 // pred_fallthru
        _
      %p454 = scmp.lt.s32.totalorder %s27, 2
      // Predicated region
      $region65: #{tpu_custom_call.1} parent=5 // pred_check
        %p455 = pneg %p454
      $region66: #{tpu_custom_call.1} parent=5 // pred_check_branch
        %457 = sbr.rel (%p455) target = $region68
      $region67: #{tpu_custom_call.1} parent=5 // pred_region
        _
      $region68: #{tpu_custom_call.1} parent=5 // pred_fallthru
        _
      %p458 = scmp.le.s32.totalorder 1, %s27
      %p459 = scmp.lt.s32.totalorder %s27, 3
      %p460 = pnand %p458, %p459
      %p461 = pneg %p460
      // Predicated region
      $region69: #{tpu_custom_call.1} parent=5 // pred_check
        _
      $region70: #{tpu_custom_call.1} parent=5 // pred_check_branch
        %463 = sbr.rel (%p460) target = $region72
      $region71: #{tpu_custom_call.1} parent=5 // pred_region
        %s464 = ssub.s32 %s27, 1
        // Predicated region
        $region73: #{tpu_custom_call.1} parent=71 // pred_check
          %p465 = pneg %p65
        $region74: #{tpu_custom_call.1} parent=71 // pred_check_branch
          %467 = sbr.rel (%p465) target = $region76
        $region75: #{tpu_custom_call.1} parent=71 // pred_region
          %468 = dma.done [#allocation8], 128
        $region76: #{tpu_custom_call.1} parent=71 // pred_fallthru
          _
        // Predicated region
        $region77: #{tpu_custom_call.1} parent=71 // pred_check
          %p469 = pneg %p91
        $region78: #{tpu_custom_call.1} parent=71 // pred_check_branch
          %471 = sbr.rel (%p469) target = $region80
        $region79: #{tpu_custom_call.1} parent=71 // pred_region
          %472 = dma.done [#allocation11], 128
        $region80: #{tpu_custom_call.1} parent=71 // pred_fallthru
          _
        // Predicated region
        $region81: #{tpu_custom_call.1} parent=71 // pred_check
          %p473 = pneg %p112
        $region82: #{tpu_custom_call.1} parent=71 // pred_check_branch
          %475 = sbr.rel (%p473) target = $region84
        $region83: #{tpu_custom_call.1} parent=71 // pred_region
          %476 = dma.done [#allocation11], 1024
        $region84: #{tpu_custom_call.1} parent=71 // pred_fallthru
          _
        // Predicated region
        $region85: #{tpu_custom_call.1} parent=71 // pred_check
          %p477 = pneg %p154
        $region86: #{tpu_custom_call.1} parent=71 // pred_check_branch
          %479 = sbr.rel (%p477) target = $region88
        $region87: #{tpu_custom_call.1} parent=71 // pred_region
          %480 = dma.done [#allocation14], 8192
        $region88: #{tpu_custom_call.1} parent=71 // pred_fallthru
          _
        // Predicated region
        $region89: #{tpu_custom_call.1} parent=71 // pred_check
          %p481 = pneg %p217
        $region90: #{tpu_custom_call.1} parent=71 // pred_check_branch
          %483 = sbr.rel (%p481) target = $region92
        $region91: #{tpu_custom_call.1} parent=71 // pred_region
          %484 = dma.done [#allocation14], 2048
        $region92: #{tpu_custom_call.1} parent=71 // pred_fallthru
          _
        %p485 = pneg %p65
        %p486 = pneg %p62
        %p487 = pneg %p91
        %p488 = pneg %p88
        %p489 = pneg %p112
        %p490 = pneg %p109
        %p491 = pneg %p133
        %p492 = pneg %p130
        %p493 = pneg %p154
        %p494 = pneg %p151
        %p495 = pneg %p175
        %p496 = pneg %p172
        %p497 = pneg %p196
        %p498 = pneg %p193
        %p499 = pneg %p217
        %p500 = pneg %p214
        %p501 = pneg %p238
        %p502 = pneg %p235
        %p503 = pneg %p259
        %p504 = pneg %p256
        %p505 = pneg %p280
        %p506 = pneg %p277
        %p507 = pneg %p301
        %p508 = pneg %p298
        %p509 = pneg %p322
        %p510 = pneg %p319
        %p511 = pneg %p350
        %p512 = pneg %p347
        %s513 = sand.u32 %s337, 1
        %s514 = scalar_lea.sflag [#allocation9], %s513
        %s515 = sand.u32 %s337, 1
        %s516 = scalar_lea.vmem [#allocation16], %s515
        %s517 = smul.u32 %s36, %s37
        %v519 = vld [vmem:[#allocation7] sm:$0xff]
        %v520 = vpack.c.bf16 %v519, %v519
        %v521 = vld [vmem:[#allocation12] sm:$0xff]
        %v522 = vld [vmem:[#allocation12 + $0x8] sm:$0xff]
        %v523 = vld [vmem:[#allocation12 + $0x10] sm:$0xff]
        %v524 = vld [vmem:[#allocation12 + $0x18] sm:$0xff]
        %v525 = vld [vmem:[#allocation12 + $0x20] sm:$0xff]
        %v526 = vld [vmem:[#allocation12 + $0x28] sm:$0xff]
        %v527 = vld [vmem:[#allocation12 + $0x30] sm:$0xff]
        %v528 = vld [vmem:[#allocation12 + $0x38] sm:$0xff]
        %v529 = vld [vmem:[%s3] sm:$0xf]
        %v531 = vlaneseq
        %v532 = vshrl.u32 %v531, 7
        %v533 = vsub.s32 0, %v532
        %v534 = vrot.slane %v529, %v533
        %v535 = vlaneseq
        %v536 = vshrl.u32 %v535, 7
        %v537 = vsub.s32 1, %v536
        %v538 = vrot.slane %v529, %v537
        %v539 = vlaneseq
        %v540 = vshrl.u32 %v539, 7
        %v541 = vsub.s32 2, %v540
        %v542 = vrot.slane %v529, %v541
        %v543 = vlaneseq
        %v544 = vshrl.u32 %v543, 7
        %v545 = vsub.s32 3, %v544
        %v546 = vrot.slane %v529, %v545
        %v559 = vunpack.c.l.b16 %v521
        %v560 = vunpack.c.h.b16 %v521
        %v561 = vunpack.c.l.b16 %v522
        %v562 = vunpack.c.h.b16 %v522
        %v563 = vunpack.c.l.b16 %v523
        %v564 = vunpack.c.h.b16 %v523
        %v565 = vunpack.c.l.b16 %v524
        %v566 = vunpack.c.h.b16 %v524
        %v567 = vunpack.c.l.b16 %v525
        %v568 = vunpack.c.h.b16 %v525
        %v569 = vunpack.c.l.b16 %v526
        %v570 = vunpack.c.h.b16 %v526
        %v571 = vunpack.c.l.b16 %v527
        %v572 = vunpack.c.h.b16 %v527
        %v573 = vunpack.c.l.b16 %v528
        %v574 = vunpack.c.h.b16 %v528
        %v575 = vpack.c.b16 %v563, %v559
        %v576 = vpack.c.b16 %v564, %v560
        %v577 = vpack.c.b16 %v565, %v561
        %v578 = vpack.c.b16 %v566, %v562
        %v579 = vpack.c.b16 %v571, %v567
        %v580 = vpack.c.b16 %v572, %v568
        %v581 = vpack.c.b16 %v573, %v569
        %v582 = vpack.c.b16 %v574, %v570
        %vm591 = vcmask 261120
        %v593 = vsel %vm591, %v520, 0
        %595 = vmatprep.subr.bf16.mxu0 %v576
        %596 = vmatpush1.bf16.msra.mxu0 %v575
        %597 = vmatprep.subr.bf16.mxu0 %v580
        %598 = vmatpush1.bf16.msra.mxu0 %v579
        %599 = vmatprep.subr.bf16.mxu0 0
        %600 = vmatpush1.bf16.msra.mxu0 0
        %601 = vmatprep.subr.bf16.mxu0 0
        %602 = vmatpush1.bf16.msra.mxu0 0
        %603 = vmatprep.subr.bf16.mxu0 0
        %604 = vmatpush1.bf16.msra.mxu0 0
        %605 = vmatprep.subr.bf16.mxu0 0
        %606 = vmatpush1.bf16.msra.mxu0 0
        %607 = vmatprep.subr.bf16.mxu0 0
        %608 = vmatpush1.bf16.msra.mxu0 0
        %609 = vmatprep.subr.bf16.mxu0 0
        %610 = vmatpush1.bf16.msra.mxu0 0
        %611 = vmatprep.subr.bf16.mxu0 0
        %612 = vmatpush1.bf16.msra.mxu0 0
        %613 = vmatprep.subr.bf16.mxu0 0
        %614 = vmatpush1.bf16.msra.mxu0 0
        %615 = vmatprep.subr.bf16.mxu0 0
        %616 = vmatpush1.bf16.msra.mxu0 0
        %617 = vmatprep.subr.bf16.mxu0 0
        %618 = vmatpush1.bf16.msra.mxu0 0
        %619 = vmatprep.subr.bf16.mxu0 0
        %620 = vmatpush1.bf16.msra.mxu0 0
        %621 = vmatprep.subr.bf16.mxu0 0
        %622 = vmatpush1.bf16.msra.mxu0 0
        %623 = vmatprep.subr.bf16.mxu0 0
        %624 = vmatpush1.bf16.msra.mxu0 0
        %625 = vmatprep.subr.bf16.mxu0 0
        %626 = vmatpush1.bf16.msra.mxu0 0
        %627 = vmatprep.mubr.bf16.mxu0 0
        %628 = vmatmul.mubr.bf16.gmra.mrb[0].mxu0 %v593
        %v629 = vpop.f32.mrb[0].mxu0
        %v630 = vadd.f32 %v534, %v629
        %v631 = vpop.f32.mrb[0].mxu0
        %v632 = vadd.f32 %v538, %v631
        %v633 = vpop.f32.mrb[0].mxu0
        %v634 = vpop.f32.mrb[0].mxu0
        %635 = vdwg.mxu0
        %636 = vmatprep.subr.bf16.mxu0 %v578
        %637 = vmatpush1.bf16.msra.mxu0 %v577
        %638 = vmatprep.subr.bf16.mxu0 %v582
        %639 = vmatpush1.bf16.msra.mxu0 %v581
        %640 = vmatprep.subr.bf16.mxu0 0
        %641 = vmatpush1.bf16.msra.mxu0 0
        %642 = vmatprep.subr.bf16.mxu0 0
        %643 = vmatpush1.bf16.msra.mxu0 0
        %644 = vmatprep.subr.bf16.mxu0 0
        %645 = vmatpush1.bf16.msra.mxu0 0
        %646 = vmatprep.subr.bf16.mxu0 0
        %647 = vmatpush1.bf16.msra.mxu0 0
        %648 = vmatprep.subr.bf16.mxu0 0
        %649 = vmatpush1.bf16.msra.mxu0 0
        %650 = vmatprep.subr.bf16.mxu0 0
        %651 = vmatpush1.bf16.msra.mxu0 0
        %652 = vmatprep.subr.bf16.mxu0 0
        %653 = vmatpush1.bf16.msra.mxu0 0
        %654 = vmatprep.subr.bf16.mxu0 0
        %655 = vmatpush1.bf16.msra.mxu0 0
        %656 = vmatprep.subr.bf16.mxu0 0
        %657 = vmatpush1.bf16.msra.mxu0 0
        %658 = vmatprep.subr.bf16.mxu0 0
        %659 = vmatpush1.bf16.msra.mxu0 0
        %660 = vmatprep.subr.bf16.mxu0 0
        %661 = vmatpush1.bf16.msra.mxu0 0
        %662 = vmatprep.subr.bf16.mxu0 0
        %663 = vmatpush1.bf16.msra.mxu0 0
        %664 = vmatprep.subr.bf16.mxu0 0
        %665 = vmatpush1.bf16.msra.mxu0 0
        %666 = vmatprep.subr.bf16.mxu0 0
        %667 = vmatpush1.bf16.msra.mxu0 0
        %668 = vmatprep.mubr.bf16.mxu0 0
        %669 = vmatmul.mubr.bf16.gmra.mrb[0].mxu0 %v593
        %v670 = vpop.f32.mrb[0].mxu0
        %v671 = vadd.f32 %v542, %v670
        %v672 = vpop.f32.mrb[0].mxu0
        %v673 = vadd.f32 %v546, %v672
        %v674 = vpop.f32.mrb[0].mxu0
        %v675 = vpop.f32.mrb[0].mxu0
        %676 = vdwg.mxu0
        %v677 = vmax.f32 %v630, 0.0
        %v678 = vmax.f32 %v632, 0.0
        %v679 = vmax.f32 %v671, 0.0
        %v680 = vmax.f32 %v673, 0.0
        %p681 = scmp.eq.s32.totalorder %s36, 0
        // Predicated region
        $region93: #{tpu_custom_call.1} parent=71 // pred_check
          %p682 = pneg %p681
        $region94: #{tpu_custom_call.1} parent=71 // pred_check_branch
          %684 = sbr.rel (%p682) target = $region96
        $region95: #{tpu_custom_call.1} parent=71 // pred_region
          %p685 = scmp.eq.s32.totalorder %s37, 0
          // Predicated region
          $region97: #{tpu_custom_call.1} parent=95 // pred_check
            %p686 = pneg %p685
          $region98: #{tpu_custom_call.1} parent=95 // pred_check_branch
            %688 = sbr.rel (%p686) target = $region100
          $region99: #{tpu_custom_call.1} parent=95 // pred_region
            %v689 = vlaneseq
            %vm690 = vcmp.ge.s32.totalorder %v689, 0
            %vm691 = vcmp.lt.s32.totalorder %v689, 512
            %vm692 = vmand %vm690, %vm691
            %693 = vst.msk [vmem:[#allocation2] sm:$0xf] %vm692, 0.0
            %694 = vst.msk [vmem:[#allocation3] sm:$0xf] %vm692, 0.0
          $region100: #{tpu_custom_call.1} parent=95 // pred_fallthru
            _
          %v695 = vld [vmem:[#allocation2] sm:$0xf]
          %v696 = vrot.slane %v677, 4
          %v697 = vadd.f32 %v677, %v696
          %v698 = vrot.slane %v697, 2
          %v699 = vadd.f32 %v697, %v698
          %v700 = vrot.slane %v699, 1
          %v701 = vadd.f32 %v699, %v700
          %v702 = vrot.slane %v678, 4
          %v703 = vadd.f32 %v678, %v702
          %v704 = vrot.slane %v703, 2
          %v705 = vadd.f32 %v703, %v704
          %v706 = vrot.slane %v705, 1
          %v707 = vadd.f32 %v705, %v706
          %v708 = vrot.slane %v679, 4
          %v709 = vadd.f32 %v679, %v708
          %v710 = vrot.slane %v709, 2
          %v711 = vadd.f32 %v709, %v710
          %v712 = vrot.slane %v711, 1
          %v713 = vadd.f32 %v711, %v712
          %v714 = vrot.slane %v680, 4
          %v715 = vadd.f32 %v680, %v714
          %v716 = vrot.slane %v715, 2
          %v717 = vadd.f32 %v715, %v716
          %v718 = vrot.slane %v717, 1
          %v719 = vadd.f32 %v717, %v718
          %v724 = vcombine.low %v701, %v707
          %v725 = vcombine.low %v713, %v719
          %v727 = vunpack.c.l.s4 1966171168
          %v728 = vunpack.c.0.s8 %v727
          %v729 = vlaneseq
          %v730 = vshrl.u32 %v729, 7
          %v731 = vsub.s32 %v728, %v730
          %v732 = vrot.slane %v724, %v731
          %v734 = vunpack.c.l.s4 1966171168
          %v735 = vunpack.c.0.s8 %v734
          %v736 = vlaneseq
          %v737 = vshrl.u32 %v736, 7
          %v738 = vsub.s32 %v735, %v737
          %v739 = vrot.slane %v725, %v738
          %v740 = vcombine.low %v732, %v739
          %v742 = vunpack.c.l.s4 1966171168
          %v743 = vunpack.c.0.s8 %v742
          %v744 = vlaneseq
          %v745 = vshrl.u32 %v744, 7
          %v746 = vsub.s32 %v743, %v745
          %v747 = vrot.slane %v740, %v746
          %v749 = vadd.f32 %v695, %v747
          %v750 = vlaneseq
          %vm751 = vcmp.ge.s32.totalorder %v750, 0
          %vm752 = vcmp.lt.s32.totalorder %v750, 512
          %vm753 = vmand %vm751, %vm752
          %754 = vst.msk [vmem:[#allocation2] sm:$0xf] %vm753, %v749
          %v755 = vld [vmem:[#allocation3] sm:$0xf]
          %v756 = vmul.f32 %v677, %v677
          %v757 = vmul.f32 %v678, %v678
          %v758 = vmul.f32 %v679, %v679
          %v759 = vmul.f32 %v680, %v680
          %v760 = vrot.slane %v756, 4
          %v761 = vadd.f32 %v756, %v760
          %v762 = vrot.slane %v761, 2
          %v763 = vadd.f32 %v761, %v762
          %v764 = vrot.slane %v763, 1
          %v765 = vadd.f32 %v763, %v764
          %v766 = vrot.slane %v757, 4
          %v767 = vadd.f32 %v757, %v766
          %v768 = vrot.slane %v767, 2
          %v769 = vadd.f32 %v767, %v768
          %v770 = vrot.slane %v769, 1
          %v771 = vadd.f32 %v769, %v770
          %v772 = vrot.slane %v758, 4
          %v773 = vadd.f32 %v758, %v772
          %v774 = vrot.slane %v773, 2
          %v775 = vadd.f32 %v773, %v774
          %v776 = vrot.slane %v775, 1
          %v777 = vadd.f32 %v775, %v776
          %v778 = vrot.slane %v759, 4
          %v779 = vadd.f32 %v759, %v778
          %v780 = vrot.slane %v779, 2
          %v781 = vadd.f32 %v779, %v780
          %v782 = vrot.slane %v781, 1
          %v783 = vadd.f32 %v781, %v782
          %v788 = vcombine.low %v765, %v771
          %v789 = vcombine.low %v777, %v783
          %v791 = vunpack.c.l.s4 1966171168
          %v792 = vunpack.c.0.s8 %v791
          %v793 = vlaneseq
          %v794 = vshrl.u32 %v793, 7
          %v795 = vsub.s32 %v792, %v794
          %v796 = vrot.slane %v788, %v795
          %v798 = vunpack.c.l.s4 1966171168
          %v799 = vunpack.c.0.s8 %v798
          %v800 = vlaneseq
          %v801 = vshrl.u32 %v800, 7
          %v802 = vsub.s32 %v799, %v801
          %v803 = vrot.slane %v789, %v802
          %v804 = vcombine.low %v796, %v803
          %v806 = vunpack.c.l.s4 1966171168
          %v807 = vunpack.c.0.s8 %v806
          %v808 = vlaneseq
          %v809 = vshrl.u32 %v808, 7
          %v810 = vsub.s32 %v807, %v809
          %v811 = vrot.slane %v804, %v810
          %v813 = vadd.f32 %v755, %v811
          %814 = vst.msk [vmem:[#allocation3] sm:$0xf] %vm753, %v813
        $region96: #{tpu_custom_call.1} parent=71 // pred_fallthru
          _
        %p815 = scmp.eq.s32.totalorder %s36, 1
        // Predicated region
        $region101: #{tpu_custom_call.1} parent=71 // pred_check
          %p816 = pneg %p815
        $region102: #{tpu_custom_call.1} parent=71 // pred_check_branch
          %818 = sbr.rel (%p816) target = $region104
        $region103: #{tpu_custom_call.1} parent=71 // pred_region
          %p819 = scmp.eq.s32.totalorder %s37, 0
          // Predicated region
          $region105: #{tpu_custom_call.1} parent=103 // pred_check
            %p820 = pneg %p819
          $region106: #{tpu_custom_call.1} parent=103 // pred_check_branch
            %822 = sbr.rel (%p820) target = $region108
          $region107: #{tpu_custom_call.1} parent=103 // pred_region
            %v823 = vld [vmem:[#allocation2] sm:$0xf]
            %v824 = vmul.f32 %v823, 0.125
            %v825 = vld [vmem:[#allocation3] sm:$0xf]
            %v826 = vmul.f32 %v825, 0.125
            %v827 = vmul.f32 %v824, %v824
            %v828 = vsub.f32 %v826, %v827
            %v829 = vmax.f32 %v828, 0.0
            %v830 = vadd.f32 %v829, 1e-05
            %v831 = vrsqrt.pop %v830
            %v832 = vld [vmem:[%s11] sm:$0xf]
            %v833 = vmul.f32 %v832, %v831
            %v834 = vld [vmem:[%s12] sm:$0xf]
            %v835 = vmul.f32 %v824, %v833
            %v836 = vsub.f32 %v834, %v835
            %v837 = vld [vmem:[#allocation13] sm:$0xff]
            %v838 = vld [vmem:[#allocation13 + $0x8] sm:$0xff]
            %v839 = vld [vmem:[#allocation13 + $0x10] sm:$0xff]
            %v840 = vld [vmem:[#allocation13 + $0x18] sm:$0xff]
            %v841 = vld [vmem:[#allocation13 + $0x20] sm:$0xff]
            %v842 = vld [vmem:[#allocation13 + $0x28] sm:$0xff]
            %v843 = vld [vmem:[#allocation13 + $0x30] sm:$0xff]
            %v844 = vld [vmem:[#allocation13 + $0x38] sm:$0xff]
            %v845 = vld [vmem:[#allocation13 + $0x40] sm:$0xff]
            %v846 = vld [vmem:[#allocation13 + $0x48] sm:$0xff]
            %v847 = vld [vmem:[#allocation13 + $0x50] sm:$0xff]
            %v848 = vld [vmem:[#allocation13 + $0x58] sm:$0xff]
            %v849 = vld [vmem:[#allocation13 + $0x60] sm:$0xff]
            %v850 = vld [vmem:[#allocation13 + $0x68] sm:$0xff]
            %v851 = vld [vmem:[#allocation13 + $0x70] sm:$0xff]
            %v852 = vld [vmem:[#allocation13 + $0x78] sm:$0xff]
            %v853 = vld [vmem:[#allocation13 + $0x80] sm:$0xff]
            %v854 = vld [vmem:[#allocation13 + $0x88] sm:$0xff]
            %v855 = vld [vmem:[#allocation13 + $0x90] sm:$0xff]
            %v856 = vld [vmem:[#allocation13 + $0x98] sm:$0xff]
            %v857 = vld [vmem:[#allocation13 + $0xa0] sm:$0xff]
            %v858 = vld [vmem:[#allocation13 + $0xa8] sm:$0xff]
            %v859 = vld [vmem:[#allocation13 + $0xb0] sm:$0xff]
            %v860 = vld [vmem:[#allocation13 + $0xb8] sm:$0xff]
            %v861 = vld [vmem:[#allocation13 + $0xc0] sm:$0xff]
            %v862 = vld [vmem:[#allocation13 + $0xc8] sm:$0xff]
            %v863 = vld [vmem:[#allocation13 + $0xd0] sm:$0xff]
            %v864 = vld [vmem:[#allocation13 + $0xd8] sm:$0xff]
            %v865 = vld [vmem:[#allocation13 + $0xe0] sm:$0xff]
            %v866 = vld [vmem:[#allocation13 + $0xe8] sm:$0xff]
            %v867 = vld [vmem:[#allocation13 + $0xf0] sm:$0xff]
            %v868 = vld [vmem:[#allocation13 + $0xf8] sm:$0xff]
            %v869 = vld [vmem:[#allocation13 + $0x100] sm:$0xff]
            %v870 = vld [vmem:[#allocation13 + $0x108] sm:$0xff]
            %v871 = vld [vmem:[#allocation13 + $0x110] sm:$0xff]
            %v872 = vld [vmem:[#allocation13 + $0x118] sm:$0xff]
            %v873 = vld [vmem:[#allocation13 + $0x120] sm:$0xff]
            %v874 = vld [vmem:[#allocation13 + $0x128] sm:$0xff]
            %v875 = vld [vmem:[#allocation13 + $0x130] sm:$0xff]
            %v876 = vld [vmem:[#allocation13 + $0x138] sm:$0xff]
            %v877 = vld [vmem:[#allocation13 + $0x140] sm:$0xff]
            %v878 = vld [vmem:[#allocation13 + $0x148] sm:$0xff]
            %v879 = vld [vmem:[#allocation13 + $0x150] sm:$0xff]
            %v880 = vld [vmem:[#allocation13 + $0x158] sm:$0xff]
            %v881 = vld [vmem:[#allocation13 + $0x160] sm:$0xff]
            %v882 = vld [vmem:[#allocation13 + $0x168] sm:$0xff]
            %v883 = vld [vmem:[#allocation13 + $0x170] sm:$0xff]
            %v884 = vld [vmem:[#allocation13 + $0x178] sm:$0xff]
            %v885 = vld [vmem:[#allocation13 + $0x180] sm:$0xff]
            %v886 = vld [vmem:[#allocation13 + $0x188] sm:$0xff]
            %v887 = vld [vmem:[#allocation13 + $0x190] sm:$0xff]
            %v888 = vld [vmem:[#allocation13 + $0x198] sm:$0xff]
            %v889 = vld [vmem:[#allocation13 + $0x1a0] sm:$0xff]
            %v890 = vld [vmem:[#allocation13 + $0x1a8] sm:$0xff]
            %v891 = vld [vmem:[#allocation13 + $0x1b0] sm:$0xff]
            %v892 = vld [vmem:[#allocation13 + $0x1b8] sm:$0xff]
            %v893 = vld [vmem:[#allocation13 + $0x1c0] sm:$0xff]
            %v894 = vld [vmem:[#allocation13 + $0x1c8] sm:$0xff]
            %v895 = vld [vmem:[#allocation13 + $0x1d0] sm:$0xff]
            %v896 = vld [vmem:[#allocation13 + $0x1d8] sm:$0xff]
            %v897 = vld [vmem:[#allocation13 + $0x1e0] sm:$0xff]
            %v898 = vld [vmem:[#allocation13 + $0x1e8] sm:$0xff]
            %v899 = vld [vmem:[#allocation13 + $0x1f0] sm:$0xff]
            %v900 = vld [vmem:[#allocation13 + $0x1f8] sm:$0xff]
            %v901 = vunpack.c.l.bf16 %v837
            %v902 = vunpack.c.h.bf16 %v837
            %v903 = vunpack.c.l.bf16 %v838
            %v904 = vunpack.c.h.bf16 %v838
            %v905 = vunpack.c.l.bf16 %v839
            %v906 = vunpack.c.h.bf16 %v839
            %v907 = vunpack.c.l.bf16 %v840
            %v908 = vunpack.c.h.bf16 %v840
            %v909 = vunpack.c.l.bf16 %v841
            %v910 = vunpack.c.h.bf16 %v841
            %v911 = vunpack.c.l.bf16 %v842
            %v912 = vunpack.c.h.bf16 %v842
            %v913 = vunpack.c.l.bf16 %v843
            %v914 = vunpack.c.h.bf16 %v843
            %v915 = vunpack.c.l.bf16 %v844
            %v916 = vunpack.c.h.bf16 %v844
            %v917 = vunpack.c.l.bf16 %v845
            %v918 = vunpack.c.h.bf16 %v845
            %v919 = vunpack.c.l.bf16 %v846
            %v920 = vunpack.c.h.bf16 %v846
            %v921 = vunpack.c.l.bf16 %v847
            %v922 = vunpack.c.h.bf16 %v847
            %v923 = vunpack.c.l.bf16 %v848
            %v924 = vunpack.c.h.bf16 %v848
            %v925 = vunpack.c.l.bf16 %v849
            %v926 = vunpack.c.h.bf16 %v849
            %v927 = vunpack.c.l.bf16 %v850
            %v928 = vunpack.c.h.bf16 %v850
            %v929 = vunpack.c.l.bf16 %v851
            %v930 = vunpack.c.h.bf16 %v851
            %v931 = vunpack.c.l.bf16 %v852
            %v932 = vunpack.c.h.bf16 %v852
            %v933 = vunpack.c.l.bf16 %v853
            %v934 = vunpack.c.h.bf16 %v853
            %v935 = vunpack.c.l.bf16 %v854
            %v936 = vunpack.c.h.bf16 %v854
            %v937 = vunpack.c.l.bf16 %v855
            %v938 = vunpack.c.h.bf16 %v855
            %v939 = vunpack.c.l.bf16 %v856
            %v940 = vunpack.c.h.bf16 %v856
            %v941 = vunpack.c.l.bf16 %v857
            %v942 = vunpack.c.h.bf16 %v857
            %v943 = vunpack.c.l.bf16 %v858
            %v944 = vunpack.c.h.bf16 %v858
            %v945 = vunpack.c.l.bf16 %v859
            %v946 = vunpack.c.h.bf16 %v859
            %v947 = vunpack.c.l.bf16 %v860
            %v948 = vunpack.c.h.bf16 %v860
            %v949 = vunpack.c.l.bf16 %v861
            %v950 = vunpack.c.h.bf16 %v861
            %v951 = vunpack.c.l.bf16 %v862
            %v952 = vunpack.c.h.bf16 %v862
            %v953 = vunpack.c.l.bf16 %v863
            %v954 = vunpack.c.h.bf16 %v863
            %v955 = vunpack.c.l.bf16 %v864
            %v956 = vunpack.c.h.bf16 %v864
            %v957 = vunpack.c.l.bf16 %v865
            %v958 = vunpack.c.h.bf16 %v865
            %v959 = vunpack.c.l.bf16 %v866
            %v960 = vunpack.c.h.bf16 %v866
            %v961 = vunpack.c.l.bf16 %v867
            %v962 = vunpack.c.h.bf16 %v867
            %v963 = vunpack.c.l.bf16 %v868
            %v964 = vunpack.c.h.bf16 %v868
            %v965 = vunpack.c.l.bf16 %v869
            %v966 = vunpack.c.h.bf16 %v869
            %v967 = vunpack.c.l.bf16 %v870
            %v968 = vunpack.c.h.bf16 %v870
            %v969 = vunpack.c.l.bf16 %v871
            %v970 = vunpack.c.h.bf16 %v871
            %v971 = vunpack.c.l.bf16 %v872
            %v972 = vunpack.c.h.bf16 %v872
            %v973 = vunpack.c.l.bf16 %v873
            %v974 = vunpack.c.h.bf16 %v873
            %v975 = vunpack.c.l.bf16 %v874
            %v976 = vunpack.c.h.bf16 %v874
            %v977 = vunpack.c.l.bf16 %v875
            %v978 = vunpack.c.h.bf16 %v875
            %v979 = vunpack.c.l.bf16 %v876
            %v980 = vunpack.c.h.bf16 %v876
            %v981 = vunpack.c.l.bf16 %v877
            %v982 = vunpack.c.h.bf16 %v877
            %v983 = vunpack.c.l.bf16 %v878
            %v984 = vunpack.c.h.bf16 %v878
            %v985 = vunpack.c.l.bf16 %v879
            %v986 = vunpack.c.h.bf16 %v879
            %v987 = vunpack.c.l.bf16 %v880
            %v988 = vunpack.c.h.bf16 %v880
            %v989 = vunpack.c.l.bf16 %v881
            %v990 = vunpack.c.h.bf16 %v881
            %v991 = vunpack.c.l.bf16 %v882
            %v992 = vunpack.c.h.bf16 %v882
            %v993 = vunpack.c.l.bf16 %v883
            %v994 = vunpack.c.h.bf16 %v883
            %v995 = vunpack.c.l.bf16 %v884
            %v996 = vunpack.c.h.bf16 %v884
            %v997 = vunpack.c.l.bf16 %v885
            %v998 = vunpack.c.h.bf16 %v885
            %v999 = vunpack.c.l.bf16 %v886
            %v1000 = vunpack.c.h.bf16 %v886
            %v1001 = vunpack.c.l.bf16 %v887
            %v1002 = vunpack.c.h.bf16 %v887
            %v1003 = vunpack.c.l.bf16 %v888
            %v1004 = vunpack.c.h.bf16 %v888
            %v1005 = vunpack.c.l.bf16 %v889
            %v1006 = vunpack.c.h.bf16 %v889
            %v1007 = vunpack.c.l.bf16 %v890
            %v1008 = vunpack.c.h.bf16 %v890
            %v1009 = vunpack.c.l.bf16 %v891
            %v1010 = vunpack.c.h.bf16 %v891
            %v1011 = vunpack.c.l.bf16 %v892
            %v1012 = vunpack.c.h.bf16 %v892
            %v1013 = vunpack.c.l.bf16 %v893
            %v1014 = vunpack.c.h.bf16 %v893
            %v1015 = vunpack.c.l.bf16 %v894
            %v1016 = vunpack.c.h.bf16 %v894
            %v1017 = vunpack.c.l.bf16 %v895
            %v1018 = vunpack.c.h.bf16 %v895
            %v1019 = vunpack.c.l.bf16 %v896
            %v1020 = vunpack.c.h.bf16 %v896
            %v1021 = vunpack.c.l.bf16 %v897
            %v1022 = vunpack.c.h.bf16 %v897
            %v1023 = vunpack.c.l.bf16 %v898
            %v1024 = vunpack.c.h.bf16 %v898
            %v1025 = vunpack.c.l.bf16 %v899
            %v1026 = vunpack.c.h.bf16 %v899
            %v1027 = vunpack.c.l.bf16 %v900
            %v1028 = vunpack.c.h.bf16 %v900
            %v1030 = vlaneseq
            %v1031 = vshrl.u32 %v1030, 7
            %v1032 = vsub.s32 0, %v1031
            %v1033 = vrot.slane %v833, %v1032
            %v1034 = vlaneseq
            %v1035 = vshrl.u32 %v1034, 7
            %v1036 = vsub.s32 1, %v1035
            %v1037 = vrot.slane %v833, %v1036
            %v1038 = vlaneseq
            %v1039 = vshrl.u32 %v1038, 7
            %v1040 = vsub.s32 2, %v1039
            %v1041 = vrot.slane %v833, %v1040
            %v1042 = vlaneseq
            %v1043 = vshrl.u32 %v1042, 7
            %v1044 = vsub.s32 3, %v1043
            %v1045 = vrot.slane %v833, %v1044
            %1050 = vxpose.xlu0.b32.start [1/16] %v1033, 128
            %1051 = vxpose.xlu0.b32.cont [2/16] 0.0, 128
            %1052 = vxpose.xlu0.b32.cont [3/16] 0.0, 128
            %1053 = vxpose.xlu0.b32.cont [4/16] 0.0, 128
            %1054 = vxpose.xlu0.b32.cont [5/16] 0.0, 128
            %1055 = vxpose.xlu0.b32.cont [6/16] 0.0, 128
            %1056 = vxpose.xlu0.b32.cont [7/16] 0.0, 128
            %1057 = vxpose.xlu0.b32.cont [8/16] 0.0, 128
            %1058 = vxpose.xlu0.b32.cont [9/16] 0.0, 128
            %1059 = vxpose.xlu0.b32.cont [10/16] 0.0, 128
            %1060 = vxpose.xlu0.b32.cont [11/16] 0.0, 128
            %1061 = vxpose.xlu0.b32.cont [12/16] 0.0, 128
            %1062 = vxpose.xlu0.b32.cont [13/16] 0.0, 128
            %1063 = vxpose.xlu0.b32.cont [14/16] 0.0, 128
            %1064 = vxpose.xlu0.b32.cont [15/16] 0.0, 128
            %1065 = vxpose.xlu0.b32.end [16/16] 0.0, 128
            %v1066 = vpop.trf.xlu0
            %v1067 = vpop.trf.xlu0
            %v1068 = vpop.trf.xlu0
            %v1069 = vpop.trf.xlu0
            %v1070 = vpop.trf.xlu0
            %v1071 = vpop.trf.xlu0
            %v1072 = vpop.trf.xlu0
            %v1073 = vpop.trf.xlu0
            %v1074 = vpop.trf.xlu0
            %v1075 = vpop.trf.xlu0
            %v1076 = vpop.trf.xlu0
            %v1077 = vpop.trf.xlu0
            %v1078 = vpop.trf.xlu0
            %v1079 = vpop.trf.xlu0
            %v1080 = vpop.trf.xlu0
            %v1081 = vpop.trf.xlu0
            %1082 = vxpose.xlu0.b32.start [1/16] %v1037, 128
            %1083 = vxpose.xlu0.b32.cont [2/16] 0.0, 128
            %1084 = vxpose.xlu0.b32.cont [3/16] 0.0, 128
            %1085 = vxpose.xlu0.b32.cont [4/16] 0.0, 128
            %1086 = vxpose.xlu0.b32.cont [5/16] 0.0, 128
            %1087 = vxpose.xlu0.b32.cont [6/16] 0.0, 128
            %1088 = vxpose.xlu0.b32.cont [7/16] 0.0, 128
            %1089 = vxpose.xlu0.b32.cont [8/16] 0.0, 128
            %1090 = vxpose.xlu0.b32.cont [9/16] 0.0, 128
            %1091 = vxpose.xlu0.b32.cont [10/16] 0.0, 128
            %1092 = vxpose.xlu0.b32.cont [11/16] 0.0, 128
            %1093 = vxpose.xlu0.b32.cont [12/16] 0.0, 128
            %1094 = vxpose.xlu0.b32.cont [13/16] 0.0, 128
            %1095 = vxpose.xlu0.b32.cont [14/16] 0.0, 128
            %1096 = vxpose.xlu0.b32.cont [15/16] 0.0, 128
            %1097 = vxpose.xlu0.b32.end [16/16] 0.0, 128
            %v1098 = vpop.trf.xlu0
            %v1099 = vpop.trf.xlu0
            %v1100 = vpop.trf.xlu0
            %v1101 = vpop.trf.xlu0
            %v1102 = vpop.trf.xlu0
            %v1103 = vpop.trf.xlu0
            %v1104 = vpop.trf.xlu0
            %v1105 = vpop.trf.xlu0
            %v1106 = vpop.trf.xlu0
            %v1107 = vpop.trf.xlu0
            %v1108 = vpop.trf.xlu0
            %v1109 = vpop.trf.xlu0
            %v1110 = vpop.trf.xlu0
            %v1111 = vpop.trf.xlu0
            %v1112 = vpop.trf.xlu0
            %v1113 = vpop.trf.xlu0
            %1114 = vxpose.xlu0.b32.start [1/16] %v1041, 128
            %1115 = vxpose.xlu0.b32.cont [2/16] 0.0, 128
            %1116 = vxpose.xlu0.b32.cont [3/16] 0.0, 128
            %1117 = vxpose.xlu0.b32.cont [4/16] 0.0, 128
            %1118 = vxpose.xlu0.b32.cont [5/16] 0.0, 128
            %1119 = vxpose.xlu0.b32.cont [6/16] 0.0, 128
            %1120 = vxpose.xlu0.b32.cont [7/16] 0.0, 128
            %1121 = vxpose.xlu0.b32.cont [8/16] 0.0, 128
            %1122 = vxpose.xlu0.b32.cont [9/16] 0.0, 128
            %1123 = vxpose.xlu0.b32.cont [10/16] 0.0, 128
            %1124 = vxpose.xlu0.b32.cont [11/16] 0.0, 128
            %1125 = vxpose.xlu0.b32.cont [12/16] 0.0, 128
            %1126 = vxpose.xlu0.b32.cont [13/16] 0.0, 128
            %1127 = vxpose.xlu0.b32.cont [14/16] 0.0, 128
            %1128 = vxpose.xlu0.b32.cont [15/16] 0.0, 128
            %1129 = vxpose.xlu0.b32.end [16/16] 0.0, 128
            %v1130 = vpop.trf.xlu0
            %v1131 = vpop.trf.xlu0
            %v1132 = vpop.trf.xlu0
            %v1133 = vpop.trf.xlu0
            %v1134 = vpop.trf.xlu0
            %v1135 = vpop.trf.xlu0
            %v1136 = vpop.trf.xlu0
            %v1137 = vpop.trf.xlu0
            %v1138 = vpop.trf.xlu0
            %v1139 = vpop.trf.xlu0
            %v1140 = vpop.trf.xlu0
            %v1141 = vpop.trf.xlu0
            %v1142 = vpop.trf.xlu0
            %v1143 = vpop.trf.xlu0
            %v1144 = vpop.trf.xlu0
            %v1145 = vpop.trf.xlu0
            %1146 = vxpose.xlu0.b32.start [1/16] %v1045, 128
            %1147 = vxpose.xlu0.b32.cont [2/16] 0.0, 128
            %1148 = vxpose.xlu0.b32.cont [3/16] 0.0, 128
            %1149 = vxpose.xlu0.b32.cont [4/16] 0.0, 128
            %1150 = vxpose.xlu0.b32.cont [5/16] 0.0, 128
            %1151 = vxpose.xlu0.b32.cont [6/16] 0.0, 128
            %1152 = vxpose.xlu0.b32.cont [7/16] 0.0, 128
            %1153 = vxpose.xlu0.b32.cont [8/16] 0.0, 128
            %1154 = vxpose.xlu0.b32.cont [9/16] 0.0, 128
            %1155 = vxpose.xlu0.b32.cont [10/16] 0.0, 128
            %1156 = vxpose.xlu0.b32.cont [11/16] 0.0, 128
            %1157 = vxpose.xlu0.b32.cont [12/16] 0.0, 128
            %1158 = vxpose.xlu0.b32.cont [13/16] 0.0, 128
            %1159 = vxpose.xlu0.b32.cont [14/16] 0.0, 128
            %1160 = vxpose.xlu0.b32.cont [15/16] 0.0, 128
            %1161 = vxpose.xlu0.b32.end [16/16] 0.0, 128
            %v1162 = vpop.trf.xlu0
            %v1163 = vpop.trf.xlu0
            %v1164 = vpop.trf.xlu0
            %v1165 = vpop.trf.xlu0
            %v1166 = vpop.trf.xlu0
            %v1167 = vpop.trf.xlu0
            %v1168 = vpop.trf.xlu0
            %v1169 = vpop.trf.xlu0
            %v1170 = vpop.trf.xlu0
            %v1171 = vpop.trf.xlu0
            %v1172 = vpop.trf.xlu0
            %v1173 = vpop.trf.xlu0
            %v1174 = vpop.trf.xlu0
            %v1175 = vpop.trf.xlu0
            %v1176 = vpop.trf.xlu0
            %v1177 = vpop.trf.xlu0
            %1179 = vset.pattern.permute.xlu0 0
            %1180 = vperm.xlu0 %1179, %v1066
            %v1181 = vpop.permute.xlu0 %1180
            %1184 = vset.pattern.permute.xlu0 0
            %1185 = vperm.xlu0 %1184, %v1067
            %v1186 = vpop.permute.xlu0 %1185
            %1189 = vset.pattern.permute.xlu0 0
            %1190 = vperm.xlu0 %1189, %v1068
            %v1191 = vpop.permute.xlu0 %1190
            %1194 = vset.pattern.permute.xlu0 0
            %1195 = vperm.xlu0 %1194, %v1069
            %v1196 = vpop.permute.xlu0 %1195
            %1199 = vset.pattern.permute.xlu0 0
            %1200 = vperm.xlu0 %1199, %v1070
            %v1201 = vpop.permute.xlu0 %1200
            %1204 = vset.pattern.permute.xlu0 0
            %1205 = vperm.xlu0 %1204, %v1071
            %v1206 = vpop.permute.xlu0 %1205
            %1209 = vset.pattern.permute.xlu0 0
            %1210 = vperm.xlu0 %1209, %v1072
            %v1211 = vpop.permute.xlu0 %1210
            %1214 = vset.pattern.permute.xlu0 0
            %1215 = vperm.xlu0 %1214, %v1073
            %v1216 = vpop.permute.xlu0 %1215
            %1219 = vset.pattern.permute.xlu0 0
            %1220 = vperm.xlu0 %1219, %v1074
            %v1221 = vpop.permute.xlu0 %1220
            %1224 = vset.pattern.permute.xlu0 0
            %1225 = vperm.xlu0 %1224, %v1075
            %v1226 = vpop.permute.xlu0 %1225
            %1229 = vset.pattern.permute.xlu0 0
            %1230 = vperm.xlu0 %1229, %v1076
            %v1231 = vpop.permute.xlu0 %1230
            %1234 = vset.pattern.permute.xlu0 0
            %1235 = vperm.xlu0 %1234, %v1077
            %v1236 = vpop.permute.xlu0 %1235
            %1239 = vset.pattern.permute.xlu0 0
            %1240 = vperm.xlu0 %1239, %v1078
            %v1241 = vpop.permute.xlu0 %1240
            %1244 = vset.pattern.permute.xlu0 0
            %1245 = vperm.xlu0 %1244, %v1079
            %v1246 = vpop.permute.xlu0 %1245
            %1249 = vset.pattern.permute.xlu0 0
            %1250 = vperm.xlu0 %1249, %v1080
            %v1251 = vpop.permute.xlu0 %1250
            %1254 = vset.pattern.permute.xlu0 0
            %1255 = vperm.xlu0 %1254, %v1081
            %v1256 = vpop.permute.xlu0 %1255
            %1259 = vset.pattern.permute.xlu0 0
            %1260 = vperm.xlu0 %1259, %v1098
            %v1261 = vpop.permute.xlu0 %1260
            %1264 = vset.pattern.permute.xlu0 0
            %1265 = vperm.xlu0 %1264, %v1099
            %v1266 = vpop.permute.xlu0 %1265
            %1269 = vset.pattern.permute.xlu0 0
            %1270 = vperm.xlu0 %1269, %v1100
            %v1271 = vpop.permute.xlu0 %1270
            %1274 = vset.pattern.permute.xlu0 0
            %1275 = vperm.xlu0 %1274, %v1101
            %v1276 = vpop.permute.xlu0 %1275
            %1279 = vset.pattern.permute.xlu0 0
            %1280 = vperm.xlu0 %1279, %v1102
            %v1281 = vpop.permute.xlu0 %1280
            %1284 = vset.pattern.permute.xlu0 0
            %1285 = vperm.xlu0 %1284, %v1103
            %v1286 = vpop.permute.xlu0 %1285
            %1289 = vset.pattern.permute.xlu0 0
            %1290 = vperm.xlu0 %1289, %v1104
            %v1291 = vpop.permute.xlu0 %1290
            %1294 = vset.pattern.permute.xlu0 0
            %1295 = vperm.xlu0 %1294, %v1105
            %v1296 = vpop.permute.xlu0 %1295
            %1299 = vset.pattern.permute.xlu0 0
            %1300 = vperm.xlu0 %1299, %v1106
            %v1301 = vpop.permute.xlu0 %1300
            %1304 = vset.pattern.permute.xlu0 0
            %1305 = vperm.xlu0 %1304, %v1107
            %v1306 = vpop.permute.xlu0 %1305
            %1309 = vset.pattern.permute.xlu0 0
            %1310 = vperm.xlu0 %1309, %v1108
            %v1311 = vpop.permute.xlu0 %1310
            %1314 = vset.pattern.permute.xlu0 0
            %1315 = vperm.xlu0 %1314, %v1109
            %v1316 = vpop.permute.xlu0 %1315
            %1319 = vset.pattern.permute.xlu0 0
            %1320 = vperm.xlu0 %1319, %v1110
            %v1321 = vpop.permute.xlu0 %1320
            %1324 = vset.pattern.permute.xlu0 0
            %1325 = vperm.xlu0 %1324, %v1111
            %v1326 = vpop.permute.xlu0 %1325
            %1329 = vset.pattern.permute.xlu0 0
            %1330 = vperm.xlu0 %1329, %v1112
            %v1331 = vpop.permute.xlu0 %1330
            %1334 = vset.pattern.permute.xlu0 0
            %1335 = vperm.xlu0 %1334, %v1113
            %v1336 = vpop.permute.xlu0 %1335
            %1339 = vset.pattern.permute.xlu0 0
            %1340 = vperm.xlu0 %1339, %v1130
            %v1341 = vpop.permute.xlu0 %1340
            %1344 = vset.pattern.permute.xlu0 0
            %1345 = vperm.xlu0 %1344, %v1131
            %v1346 = vpop.permute.xlu0 %1345
            %1349 = vset.pattern.permute.xlu0 0
            %1350 = vperm.xlu0 %1349, %v1132
            %v1351 = vpop.permute.xlu0 %1350
            %1354 = vset.pattern.permute.xlu0 0
            %1355 = vperm.xlu0 %1354, %v1133
            %v1356 = vpop.permute.xlu0 %1355
            %1359 = vset.pattern.permute.xlu0 0
            %1360 = vperm.xlu0 %1359, %v1134
            %v1361 = vpop.permute.xlu0 %1360
            %1364 = vset.pattern.permute.xlu0 0
            %1365 = vperm.xlu0 %1364, %v1135
            %v1366 = vpop.permute.xlu0 %1365
            %1369 = vset.pattern.permute.xlu0 0
            %1370 = vperm.xlu0 %1369, %v1136
            %v1371 = vpop.permute.xlu0 %1370
            %1374 = vset.pattern.permute.xlu0 0
            %1375 = vperm.xlu0 %1374, %v1137
            %v1376 = vpop.permute.xlu0 %1375
            %1379 = vset.pattern.permute.xlu0 0
            %1380 = vperm.xlu0 %1379, %v1138
            %v1381 = vpop.permute.xlu0 %1380
            %1384 = vset.pattern.permute.xlu0 0
            %1385 = vperm.xlu0 %1384, %v1139
            %v1386 = vpop.permute.xlu0 %1385
            %1389 = vset.pattern.permute.xlu0 0
            %1390 = vperm.xlu0 %1389, %v1140
            %v1391 = vpop.permute.xlu0 %1390
            %1394 = vset.pattern.permute.xlu0 0
            %1395 = vperm.xlu0 %1394, %v1141
            %v1396 = vpop.permute.xlu0 %1395
            %1399 = vset.pattern.permute.xlu0 0
            %1400 = vperm.xlu0 %1399, %v1142
            %v1401 = vpop.permute.xlu0 %1400
            %1404 = vset.pattern.permute.xlu0 0
            %1405 = vperm.xlu0 %1404, %v1143
            %v1406 = vpop.permute.xlu0 %1405
            %1409 = vset.pattern.permute.xlu0 0
            %1410 = vperm.xlu0 %1409, %v1144
            %v1411 = vpop.permute.xlu0 %1410
            %1414 = vset.pattern.permute.xlu0 0
            %1415 = vperm.xlu0 %1414, %v1145
            %v1416 = vpop.permute.xlu0 %1415
            %1419 = vset.pattern.permute.xlu0 0
            %1420 = vperm.xlu0 %1419, %v1162
            %v1421 = vpop.permute.xlu0 %1420
            %1424 = vset.pattern.permute.xlu0 0
            %1425 = vperm.xlu0 %1424, %v1163
            %v1426 = vpop.permute.xlu0 %1425
            %1429 = vset.pattern.permute.xlu0 0
            %1430 = vperm.xlu0 %1429, %v1164
            %v1431 = vpop.permute.xlu0 %1430
            %1434 = vset.pattern.permute.xlu0 0
            %1435 = vperm.xlu0 %1434, %v1165
            %v1436 = vpop.permute.xlu0 %1435
            %1439 = vset.pattern.permute.xlu0 0
            %1440 = vperm.xlu0 %1439, %v1166
            %v1441 = vpop.permute.xlu0 %1440
            %1444 = vset.pattern.permute.xlu0 0
            %1445 = vperm.xlu0 %1444, %v1167
            %v1446 = vpop.permute.xlu0 %1445
            %1449 = vset.pattern.permute.xlu0 0
            %1450 = vperm.xlu0 %1449, %v1168
            %v1451 = vpop.permute.xlu0 %1450
            %1454 = vset.pattern.permute.xlu0 0
            %1455 = vperm.xlu0 %1454, %v1169
            %v1456 = vpop.permute.xlu0 %1455
            %1459 = vset.pattern.permute.xlu0 0
            %1460 = vperm.xlu0 %1459, %v1170
            %v1461 = vpop.permute.xlu0 %1460
            %1464 = vset.pattern.permute.xlu0 0
            %1465 = vperm.xlu0 %1464, %v1171
            %v1466 = vpop.permute.xlu0 %1465
            %1469 = vset.pattern.permute.xlu0 0
            %1470 = vperm.xlu0 %1469, %v1172
            %v1471 = vpop.permute.xlu0 %1470
            %1474 = vset.pattern.permute.xlu0 0
            %1475 = vperm.xlu0 %1474, %v1173
            %v1476 = vpop.permute.xlu0 %1475
            %1479 = vset.pattern.permute.xlu0 0
            %1480 = vperm.xlu0 %1479, %v1174
            %v1481 = vpop.permute.xlu0 %1480
            %1484 = vset.pattern.permute.xlu0 0
            %1485 = vperm.xlu0 %1484, %v1175
            %v1486 = vpop.permute.xlu0 %1485
            %1489 = vset.pattern.permute.xlu0 0
            %1490 = vperm.xlu0 %1489, %v1176
            %v1491 = vpop.permute.xlu0 %1490
            %1494 = vset.pattern.permute.xlu0 0
            %1495 = vperm.xlu0 %1494, %v1177
            %v1496 = vpop.permute.xlu0 %1495
            %v1498 = vmul.f32 %v901, %v1181
            %v1499 = vmul.f32 %v902, %v1181
            %v1500 = vmul.f32 %v903, %v1186
            %v1501 = vmul.f32 %v904, %v1186
            %v1502 = vmul.f32 %v905, %v1191
            %v1503 = vmul.f32 %v906, %v1191
            %v1504 = vmul.f32 %v907, %v1196
            %v1505 = vmul.f32 %v908, %v1196
            %v1506 = vmul.f32 %v909, %v1201
            %v1507 = vmul.f32 %v910, %v1201
            %v1508 = vmul.f32 %v911, %v1206
            %v1509 = vmul.f32 %v912, %v1206
            %v1510 = vmul.f32 %v913, %v1211
            %v1511 = vmul.f32 %v914, %v1211
            %v1512 = vmul.f32 %v915, %v1216
            %v1513 = vmul.f32 %v916, %v1216
            %v1514 = vmul.f32 %v917, %v1221
            %v1515 = vmul.f32 %v918, %v1221
            %v1516 = vmul.f32 %v919, %v1226
            %v1517 = vmul.f32 %v920, %v1226
            %v1518 = vmul.f32 %v921, %v1231
            %v1519 = vmul.f32 %v922, %v1231
            %v1520 = vmul.f32 %v923, %v1236
            %v1521 = vmul.f32 %v924, %v1236
            %v1522 = vmul.f32 %v925, %v1241
            %v1523 = vmul.f32 %v926, %v1241
            %v1524 = vmul.f32 %v927, %v1246
            %v1525 = vmul.f32 %v928, %v1246
            %v1526 = vmul.f32 %v929, %v1251
            %v1527 = vmul.f32 %v930, %v1251
            %v1528 = vmul.f32 %v931, %v1256
            %v1529 = vmul.f32 %v932, %v1256
            %v1530 = vmul.f32 %v933, %v1261
            %v1531 = vmul.f32 %v934, %v1261
            %v1532 = vmul.f32 %v935, %v1266
            %v1533 = vmul.f32 %v936, %v1266
            %v1534 = vmul.f32 %v937, %v1271
            %v1535 = vmul.f32 %v938, %v1271
            %v1536 = vmul.f32 %v939, %v1276
            %v1537 = vmul.f32 %v940, %v1276
            %v1538 = vmul.f32 %v941, %v1281
            %v1539 = vmul.f32 %v942, %v1281
            %v1540 = vmul.f32 %v943, %v1286
            %v1541 = vmul.f32 %v944, %v1286
            %v1542 = vmul.f32 %v945, %v1291
            %v1543 = vmul.f32 %v946, %v1291
            %v1544 = vmul.f32 %v947, %v1296
            %v1545 = vmul.f32 %v948, %v1296
            %v1546 = vmul.f32 %v949, %v1301
            %v1547 = vmul.f32 %v950, %v1301
            %v1548 = vmul.f32 %v951, %v1306
            %v1549 = vmul.f32 %v952, %v1306
            %v1550 = vmul.f32 %v953, %v1311
            %v1551 = vmul.f32 %v954, %v1311
            %v1552 = vmul.f32 %v955, %v1316
            %v1553 = vmul.f32 %v956, %v1316
            %v1554 = vmul.f32 %v957, %v1321
            %v1555 = vmul.f32 %v958, %v1321
            %v1556 = vmul.f32 %v959, %v1326
            %v1557 = vmul.f32 %v960, %v1326
            %v1558 = vmul.f32 %v961, %v1331
            %v1559 = vmul.f32 %v962, %v1331
            %v1560 = vmul.f32 %v963, %v1336
            %v1561 = vmul.f32 %v964, %v1336
            %v1562 = vmul.f32 %v965, %v1341
            %v1563 = vmul.f32 %v966, %v1341
            %v1564 = vmul.f32 %v967, %v1346
            %v1565 = vmul.f32 %v968, %v1346
            %v1566 = vmul.f32 %v969, %v1351
            %v1567 = vmul.f32 %v970, %v1351
            %v1568 = vmul.f32 %v971, %v1356
            %v1569 = vmul.f32 %v972, %v1356
            %v1570 = vmul.f32 %v973, %v1361
            %v1571 = vmul.f32 %v974, %v1361
            %v1572 = vmul.f32 %v975, %v1366
            %v1573 = vmul.f32 %v976, %v1366
            %v1574 = vmul.f32 %v977, %v1371
            %v1575 = vmul.f32 %v978, %v1371
            %v1576 = vmul.f32 %v979, %v1376
            %v1577 = vmul.f32 %v980, %v1376
            %v1578 = vmul.f32 %v981, %v1381
            %v1579 = vmul.f32 %v982, %v1381
            %v1580 = vmul.f32 %v983, %v1386
            %v1581 = vmul.f32 %v984, %v1386
            %v1582 = vmul.f32 %v985, %v1391
            %v1583 = vmul.f32 %v986, %v1391
            %v1584 = vmul.f32 %v987, %v1396
            %v1585 = vmul.f32 %v988, %v1396
            %v1586 = vmul.f32 %v989, %v1401
            %v1587 = vmul.f32 %v990, %v1401
            %v1588 = vmul.f32 %v991, %v1406
            %v1589 = vmul.f32 %v992, %v1406
            %v1590 = vmul.f32 %v993, %v1411
            %v1591 = vmul.f32 %v994, %v1411
            %v1592 = vmul.f32 %v995, %v1416
            %v1593 = vmul.f32 %v996, %v1416
            %v1594 = vmul.f32 %v997, %v1421
            %v1595 = vmul.f32 %v998, %v1421
            %v1596 = vmul.f32 %v999, %v1426
            %v1597 = vmul.f32 %v1000, %v1426
            %v1598 = vmul.f32 %v1001, %v1431
            %v1599 = vmul.f32 %v1002, %v1431
            %v1600 = vmul.f32 %v1003, %v1436
            %v1601 = vmul.f32 %v1004, %v1436
            %v1602 = vmul.f32 %v1005, %v1441
            %v1603 = vmul.f32 %v1006, %v1441
            %v1604 = vmul.f32 %v1007, %v1446
            %v1605 = vmul.f32 %v1008, %v1446
            %v1606 = vmul.f32 %v1009, %v1451
            %v1607 = vmul.f32 %v1010, %v1451
            %v1608 = vmul.f32 %v1011, %v1456
            %v1609 = vmul.f32 %v1012, %v1456
            %v1610 = vmul.f32 %v1013, %v1461
            %v1611 = vmul.f32 %v1014, %v1461
            %v1612 = vmul.f32 %v1015, %v1466
            %v1613 = vmul.f32 %v1016, %v1466
            %v1614 = vmul.f32 %v1017, %v1471
            %v1615 = vmul.f32 %v1018, %v1471
            %v1616 = vmul.f32 %v1019, %v1476
            %v1617 = vmul.f32 %v1020, %v1476
            %v1618 = vmul.f32 %v1021, %v1481
            %v1619 = vmul.f32 %v1022, %v1481
            %v1620 = vmul.f32 %v1023, %v1486
            %v1621 = vmul.f32 %v1024, %v1486
            %v1622 = vmul.f32 %v1025, %v1491
            %v1623 = vmul.f32 %v1026, %v1491
            %v1624 = vmul.f32 %v1027, %v1496
            %v1625 = vmul.f32 %v1028, %v1496
            %v1626 = vpack.c.bf16 %v1500, %v1498
            %v1627 = vpack.c.bf16 %v1501, %v1499
            %v1628 = vpack.c.bf16 %v1504, %v1502
            %v1629 = vpack.c.bf16 %v1505, %v1503
            %v1630 = vpack.c.bf16 %v1508, %v1506
            %v1631 = vpack.c.bf16 %v1509, %v1507
            %v1632 = vpack.c.bf16 %v1512, %v1510
            %v1633 = vpack.c.bf16 %v1513, %v1511
            %v1634 = vpack.c.bf16 %v1516, %v1514
            %v1635 = vpack.c.bf16 %v1517, %v1515
            %v1636 = vpack.c.bf16 %v1520, %v1518
            %v1637 = vpack.c.bf16 %v1521, %v1519
            %v1638 = vpack.c.bf16 %v1524, %v1522
            %v1639 = vpack.c.bf16 %v1525, %v1523
            %v1640 = vpack.c.bf16 %v1528, %v1526
            %v1641 = vpack.c.bf16 %v1529, %v1527
            %v1642 = vpack.c.bf16 %v1532, %v1530
            %v1643 = vpack.c.bf16 %v1533, %v1531
            %v1644 = vpack.c.bf16 %v1536, %v1534
            %v1645 = vpack.c.bf16 %v1537, %v1535
            %v1646 = vpack.c.bf16 %v1540, %v1538
            %v1647 = vpack.c.bf16 %v1541, %v1539
            %v1648 = vpack.c.bf16 %v1544, %v1542
            %v1649 = vpack.c.bf16 %v1545, %v1543
            %v1650 = vpack.c.bf16 %v1548, %v1546
            %v1651 = vpack.c.bf16 %v1549, %v1547
            %v1652 = vpack.c.bf16 %v1552, %v1550
            %v1653 = vpack.c.bf16 %v1553, %v1551
            %v1654 = vpack.c.bf16 %v1556, %v1554
            %v1655 = vpack.c.bf16 %v1557, %v1555
            %v1656 = vpack.c.bf16 %v1560, %v1558
            %v1657 = vpack.c.bf16 %v1561, %v1559
            %v1658 = vpack.c.bf16 %v1564, %v1562
            %v1659 = vpack.c.bf16 %v1565, %v1563
            %v1660 = vpack.c.bf16 %v1568, %v1566
            %v1661 = vpack.c.bf16 %v1569, %v1567
            %v1662 = vpack.c.bf16 %v1572, %v1570
            %v1663 = vpack.c.bf16 %v1573, %v1571
            %v1664 = vpack.c.bf16 %v1576, %v1574
            %v1665 = vpack.c.bf16 %v1577, %v1575
            %v1666 = vpack.c.bf16 %v1580, %v1578
            %v1667 = vpack.c.bf16 %v1581, %v1579
            %v1668 = vpack.c.bf16 %v1584, %v1582
            %v1669 = vpack.c.bf16 %v1585, %v1583
            %v1670 = vpack.c.bf16 %v1588, %v1586
            %v1671 = vpack.c.bf16 %v1589, %v1587
            %v1672 = vpack.c.bf16 %v1592, %v1590
            %v1673 = vpack.c.bf16 %v1593, %v1591
            %v1674 = vpack.c.bf16 %v1596, %v1594
            %v1675 = vpack.c.bf16 %v1597, %v1595
            %v1676 = vpack.c.bf16 %v1600, %v1598
            %v1677 = vpack.c.bf16 %v1601, %v1599
            %v1678 = vpack.c.bf16 %v1604, %v1602
            %v1679 = vpack.c.bf16 %v1605, %v1603
            %v1680 = vpack.c.bf16 %v1608, %v1606
            %v1681 = vpack.c.bf16 %v1609, %v1607
            %v1682 = vpack.c.bf16 %v1612, %v1610
            %v1683 = vpack.c.bf16 %v1613, %v1611
            %v1684 = vpack.c.bf16 %v1616, %v1614
            %v1685 = vpack.c.bf16 %v1617, %v1615
            %v1686 = vpack.c.bf16 %v1620, %v1618
            %v1687 = vpack.c.bf16 %v1621, %v1619
            %v1688 = vpack.c.bf16 %v1624, %v1622
            %v1689 = vpack.c.bf16 %v1625, %v1623
            %v1754 = vunpack.c.l.b16 %v1626
            %v1755 = vunpack.c.l.b16 %v1627
            %v1756 = vunpack.c.h.b16 %v1626
            %v1757 = vunpack.c.h.b16 %v1627
            %v1758 = vunpack.c.l.b16 %v1628
            %v1759 = vunpack.c.l.b16 %v1629
            %v1760 = vunpack.c.h.b16 %v1628
            %v1761 = vunpack.c.h.b16 %v1629
            %v1762 = vunpack.c.l.b16 %v1630
            %v1763 = vunpack.c.l.b16 %v1631
            %v1764 = vunpack.c.h.b16 %v1630
            %v1765 = vunpack.c.h.b16 %v1631
            %v1766 = vunpack.c.l.b16 %v1632
            %v1767 = vunpack.c.l.b16 %v1633
            %v1768 = vunpack.c.h.b16 %v1632
            %v1769 = vunpack.c.h.b16 %v1633
            %v1770 = vunpack.c.l.b16 %v1634
            %v1771 = vunpack.c.l.b16 %v1635
            %v1772 = vunpack.c.h.b16 %v1634
            %v1773 = vunpack.c.h.b16 %v1635
            %v1774 = vunpack.c.l.b16 %v1636
            %v1775 = vunpack.c.l.b16 %v1637
            %v1776 = vunpack.c.h.b16 %v1636
            %v1777 = vunpack.c.h.b16 %v1637
            %v1778 = vunpack.c.l.b16 %v1638
            %v1779 = vunpack.c.l.b16 %v1639
            %v1780 = vunpack.c.h.b16 %v1638
            %v1781 = vunpack.c.h.b16 %v1639
            %v1782 = vunpack.c.l.b16 %v1640
            %v1783 = vunpack.c.l.b16 %v1641
            %v1784 = vunpack.c.h.b16 %v1640
            %v1785 = vunpack.c.h.b16 %v1641
            %v1786 = vunpack.c.l.b16 %v1642
            %v1787 = vunpack.c.l.b16 %v1643
            %v1788 = vunpack.c.h.b16 %v1642
            %v1789 = vunpack.c.h.b16 %v1643
            %v1790 = vunpack.c.l.b16 %v1644
            %v1791 = vunpack.c.l.b16 %v1645
            %v1792 = vunpack.c.h.b16 %v1644
            %v1793 = vunpack.c.h.b16 %v1645
            %v1794 = vunpack.c.l.b16 %v1646
            %v1795 = vunpack.c.l.b16 %v1647
            %v1796 = vunpack.c.h.b16 %v1646
            %v1797 = vunpack.c.h.b16 %v1647
            %v1798 = vunpack.c.l.b16 %v1648
            %v1799 = vunpack.c.l.b16 %v1649
            %v1800 = vunpack.c.h.b16 %v1648
            %v1801 = vunpack.c.h.b16 %v1649
            %v1802 = vunpack.c.l.b16 %v1650
            %v1803 = vunpack.c.l.b16 %v1651
            %v1804 = vunpack.c.h.b16 %v1650
            %v1805 = vunpack.c.h.b16 %v1651
            %v1806 = vunpack.c.l.b16 %v1652
            %v1807 = vunpack.c.l.b16 %v1653
            %v1808 = vunpack.c.h.b16 %v1652
            %v1809 = vunpack.c.h.b16 %v1653
            %v1810 = vunpack.c.l.b16 %v1654
            %v1811 = vunpack.c.l.b16 %v1655
            %v1812 = vunpack.c.h.b16 %v1654
            %v1813 = vunpack.c.h.b16 %v1655
            %v1814 = vunpack.c.l.b16 %v1656
            %v1815 = vunpack.c.l.b16 %v1657
            %v1816 = vunpack.c.h.b16 %v1656
            %v1817 = vunpack.c.h.b16 %v1657
            %v1818 = vunpack.c.l.b16 %v1658
            %v1819 = vunpack.c.l.b16 %v1659
            %v1820 = vunpack.c.h.b16 %v1658
            %v1821 = vunpack.c.h.b16 %v1659
            %v1822 = vunpack.c.l.b16 %v1660
            %v1823 = vunpack.c.l.b16 %v1661
            %v1824 = vunpack.c.h.b16 %v1660
            %v1825 = vunpack.c.h.b16 %v1661
            %v1826 = vunpack.c.l.b16 %v1662
            %v1827 = vunpack.c.l.b16 %v1663
            %v1828 = vunpack.c.h.b16 %v1662
            %v1829 = vunpack.c.h.b16 %v1663
            %v1830 = vunpack.c.l.b16 %v1664
            %v1831 = vunpack.c.l.b16 %v1665
            %v1832 = vunpack.c.h.b16 %v1664
            %v1833 = vunpack.c.h.b16 %v1665
            %v1834 = vunpack.c.l.b16 %v1666
            %v1835 = vunpack.c.l.b16 %v1667
            %v1836 = vunpack.c.h.b16 %v1666
            %v1837 = vunpack.c.h.b16 %v1667
            %v1838 = vunpack.c.l.b16 %v1668
            %v1839 = vunpack.c.l.b16 %v1669
            %v1840 = vunpack.c.h.b16 %v1668
            %v1841 = vunpack.c.h.b16 %v1669
            %v1842 = vunpack.c.l.b16 %v1670
            %v1843 = vunpack.c.l.b16 %v1671
            %v1844 = vunpack.c.h.b16 %v1670
            %v1845 = vunpack.c.h.b16 %v1671
            %v1846 = vunpack.c.l.b16 %v1672
            %v1847 = vunpack.c.l.b16 %v1673
            %v1848 = vunpack.c.h.b16 %v1672
            %v1849 = vunpack.c.h.b16 %v1673
            %v1850 = vunpack.c.l.b16 %v1674
            %v1851 = vunpack.c.l.b16 %v1675
            %v1852 = vunpack.c.h.b16 %v1674
            %v1853 = vunpack.c.h.b16 %v1675
            %v1854 = vunpack.c.l.b16 %v1676
            %v1855 = vunpack.c.l.b16 %v1677
            %v1856 = vunpack.c.h.b16 %v1676
            %v1857 = vunpack.c.h.b16 %v1677
            %v1858 = vunpack.c.l.b16 %v1678
            %v1859 = vunpack.c.l.b16 %v1679
            %v1860 = vunpack.c.h.b16 %v1678
            %v1861 = vunpack.c.h.b16 %v1679
            %v1862 = vunpack.c.l.b16 %v1680
            %v1863 = vunpack.c.l.b16 %v1681
            %v1864 = vunpack.c.h.b16 %v1680
            %v1865 = vunpack.c.h.b16 %v1681
            %v1866 = vunpack.c.l.b16 %v1682
            %v1867 = vunpack.c.l.b16 %v1683
            %v1868 = vunpack.c.h.b16 %v1682
            %v1869 = vunpack.c.h.b16 %v1683
            %v1870 = vunpack.c.l.b16 %v1684
            %v1871 = vunpack.c.l.b16 %v1685
            %v1872 = vunpack.c.h.b16 %v1684
            %v1873 = vunpack.c.h.b16 %v1685
            %v1874 = vunpack.c.l.b16 %v1686
            %v1875 = vunpack.c.l.b16 %v1687
            %v1876 = vunpack.c.h.b16 %v1686
            %v1877 = vunpack.c.h.b16 %v1687
            %v1878 = vunpack.c.l.b16 %v1688
            %v1879 = vunpack.c.l.b16 %v1689
            %v1880 = vunpack.c.h.b16 %v1688
            %v1881 = vunpack.c.h.b16 %v1689
            %v1882 = vpack.c.b16 %v1755, %v1754
            %v1883 = vpack.c.b16 %v1757, %v1756
            %v1884 = vpack.c.b16 %v1759, %v1758
            %v1885 = vpack.c.b16 %v1761, %v1760
            %v1886 = vpack.c.b16 %v1763, %v1762
            %v1887 = vpack.c.b16 %v1765, %v1764
            %v1888 = vpack.c.b16 %v1767, %v1766
            %v1889 = vpack.c.b16 %v1769, %v1768
            %v1890 = vpack.c.b16 %v1771, %v1770
            %v1891 = vpack.c.b16 %v1773, %v1772
            %v1892 = vpack.c.b16 %v1775, %v1774
            %v1893 = vpack.c.b16 %v1777, %v1776
            %v1894 = vpack.c.b16 %v1779, %v1778
            %v1895 = vpack.c.b16 %v1781, %v1780
            %v1896 = vpack.c.b16 %v1783, %v1782
            %v1897 = vpack.c.b16 %v1785, %v1784
            %v1898 = vpack.c.b16 %v1787, %v1786
            %v1899 = vpack.c.b16 %v1789, %v1788
            %v1900 = vpack.c.b16 %v1791, %v1790
            %v1901 = vpack.c.b16 %v1793, %v1792
            %v1902 = vpack.c.b16 %v1795, %v1794
            %v1903 = vpack.c.b16 %v1797, %v1796
            %v1904 = vpack.c.b16 %v1799, %v1798
            %v1905 = vpack.c.b16 %v1801, %v1800
            %v1906 = vpack.c.b16 %v1803, %v1802
            %v1907 = vpack.c.b16 %v1805, %v1804
            %v1908 = vpack.c.b16 %v1807, %v1806
            %v1909 = vpack.c.b16 %v1809, %v1808
            %v1910 = vpack.c.b16 %v1811, %v1810
            %v1911 = vpack.c.b16 %v1813, %v1812
            %v1912 = vpack.c.b16 %v1815, %v1814
            %v1913 = vpack.c.b16 %v1817, %v1816
            %v1914 = vpack.c.b16 %v1819, %v1818
            %v1915 = vpack.c.b16 %v1821, %v1820
            %v1916 = vpack.c.b16 %v1823, %v1822
            %v1917 = vpack.c.b16 %v1825, %v1824
            %v1918 = vpack.c.b16 %v1827, %v1826
            %v1919 = vpack.c.b16 %v1829, %v1828
            %v1920 = vpack.c.b16 %v1831, %v1830
            %v1921 = vpack.c.b16 %v1833, %v1832
            %v1922 = vpack.c.b16 %v1835, %v1834
            %v1923 = vpack.c.b16 %v1837, %v1836
            %v1924 = vpack.c.b16 %v1839, %v1838
            %v1925 = vpack.c.b16 %v1841, %v1840
            %v1926 = vpack.c.b16 %v1843, %v1842
            %v1927 = vpack.c.b16 %v1845, %v1844
            %v1928 = vpack.c.b16 %v1847, %v1846
            %v1929 = vpack.c.b16 %v1849, %v1848
            %v1930 = vpack.c.b16 %v1851, %v1850
            %v1931 = vpack.c.b16 %v1853, %v1852
            %v1932 = vpack.c.b16 %v1855, %v1854
            %v1933 = vpack.c.b16 %v1857, %v1856
            %v1934 = vpack.c.b16 %v1859, %v1858
            %v1935 = vpack.c.b16 %v1861, %v1860
            %v1936 = vpack.c.b16 %v1863, %v1862
            %v1937 = vpack.c.b16 %v1865, %v1864
            %v1938 = vpack.c.b16 %v1867, %v1866
            %v1939 = vpack.c.b16 %v1869, %v1868
            %v1940 = vpack.c.b16 %v1871, %v1870
            %v1941 = vpack.c.b16 %v1873, %v1872
            %v1942 = vpack.c.b16 %v1875, %v1874
            %v1943 = vpack.c.b16 %v1877, %v1876
            %v1944 = vpack.c.b16 %v1879, %v1878
            %v1945 = vpack.c.b16 %v1881, %v1880
            %2010 = vst [vmem:[#allocation4] sm:$0xff] %v1882
            %2011 = vst [vmem:[#allocation4 + $0x8] sm:$0xff] %v1883
            %2012 = vst [vmem:[#allocation4 + $0x10] sm:$0xff] %v1884
            %2013 = vst [vmem:[#allocation4 + $0x18] sm:$0xff] %v1885
            %2014 = vst [vmem:[#allocation4 + $0x20] sm:$0xff] %v1886
            %2015 = vst [vmem:[#allocation4 + $0x28] sm:$0xff] %v1887
            %2016 = vst [vmem:[#allocation4 + $0x30] sm:$0xff] %v1888
            %2017 = vst [vmem:[#allocation4 + $0x38] sm:$0xff] %v1889
            %2018 = vst [vmem:[#allocation4 + $0x40] sm:$0xff] %v1890
            %2019 = vst [vmem:[#allocation4 + $0x48] sm:$0xff] %v1891
            %2020 = vst [vmem:[#allocation4 + $0x50] sm:$0xff] %v1892
            %2021 = vst [vmem:[#allocation4 + $0x58] sm:$0xff] %v1893
            %2022 = vst [vmem:[#allocation4 + $0x60] sm:$0xff] %v1894
            %2023 = vst [vmem:[#allocation4 + $0x68] sm:$0xff] %v1895
            %2024 = vst [vmem:[#allocation4 + $0x70] sm:$0xff] %v1896
            %2025 = vst [vmem:[#allocation4 + $0x78] sm:$0xff] %v1897
            %2026 = vst [vmem:[#allocation4 + $0x80] sm:$0xff] %v1898
            %2027 = vst [vmem:[#allocation4 + $0x88] sm:$0xff] %v1899
            %2028 = vst [vmem:[#allocation4 + $0x90] sm:$0xff] %v1900
            %2029 = vst [vmem:[#allocation4 + $0x98] sm:$0xff] %v1901
            %2030 = vst [vmem:[#allocation4 + $0xa0] sm:$0xff] %v1902
            %2031 = vst [vmem:[#allocation4 + $0xa8] sm:$0xff] %v1903
            %2032 = vst [vmem:[#allocation4 + $0xb0] sm:$0xff] %v1904
            %2033 = vst [vmem:[#allocation4 + $0xb8] sm:$0xff] %v1905
            %2034 = vst [vmem:[#allocation4 + $0xc0] sm:$0xff] %v1906
            %2035 = vst [vmem:[#allocation4 + $0xc8] sm:$0xff] %v1907
            %2036 = vst [vmem:[#allocation4 + $0xd0] sm:$0xff] %v1908
            %2037 = vst [vmem:[#allocation4 + $0xd8] sm:$0xff] %v1909
            %2038 = vst [vmem:[#allocation4 + $0xe0] sm:$0xff] %v1910
            %2039 = vst [vmem:[#allocation4 + $0xe8] sm:$0xff] %v1911
            %2040 = vst [vmem:[#allocation4 + $0xf0] sm:$0xff] %v1912
            %2041 = vst [vmem:[#allocation4 + $0xf8] sm:$0xff] %v1913
            %2042 = vst [vmem:[#allocation4 + $0x100] sm:$0xff] %v1914
            %2043 = vst [vmem:[#allocation4 + $0x108] sm:$0xff] %v1915
            %2044 = vst [vmem:[#allocation4 + $0x110] sm:$0xff] %v1916
            %2045 = vst [vmem:[#allocation4 + $0x118] sm:$0xff] %v1917
            %2046 = vst [vmem:[#allocation4 + $0x120] sm:$0xff] %v1918
            %2047 = vst [vmem:[#allocation4 + $0x128] sm:$0xff] %v1919
            %2048 = vst [vmem:[#allocation4 + $0x130] sm:$0xff] %v1920
            %2049 = vst [vmem:[#allocation4 + $0x138] sm:$0xff] %v1921
            %2050 = vst [vmem:[#allocation4 + $0x140] sm:$0xff] %v1922
            %2051 = vst [vmem:[#allocation4 + $0x148] sm:$0xff] %v1923
            %2052 = vst [vmem:[#allocation4 + $0x150] sm:$0xff] %v1924
            %2053 = vst [vmem:[#allocation4 + $0x158] sm:$0xff] %v1925
            %2054 = vst [vmem:[#allocation4 + $0x160] sm:$0xff] %v1926
            %2055 = vst [vmem:[#allocation4 + $0x168] sm:$0xff] %v1927
            %2056 = vst [vmem:[#allocation4 + $0x170] sm:$0xff] %v1928
            %2057 = vst [vmem:[#allocation4 + $0x178] sm:$0xff] %v1929
            %2058 = vst [vmem:[#allocation4 + $0x180] sm:$0xff] %v1930
            %2059 = vst [vmem:[#allocation4 + $0x188] sm:$0xff] %v1931
            %2060 = vst [vmem:[#allocation4 + $0x190] sm:$0xff] %v1932
            %2061 = vst [vmem:[#allocation4 + $0x198] sm:$0xff] %v1933
            %2062 = vst [vmem:[#allocation4 + $0x1a0] sm:$0xff] %v1934
            %2063 = vst [vmem:[#allocation4 + $0x1a8] sm:$0xff] %v1935
            %2064 = vst [vmem:[#allocation4 + $0x1b0] sm:$0xff] %v1936
            %2065 = vst [vmem:[#allocation4 + $0x1b8] sm:$0xff] %v1937
            %2066 = vst [vmem:[#allocation4 + $0x1c0] sm:$0xff] %v1938
            %2067 = vst [vmem:[#allocation4 + $0x1c8] sm:$0xff] %v1939
            %2068 = vst [vmem:[#allocation4 + $0x1d0] sm:$0xff] %v1940
            %2069 = vst [vmem:[#allocation4 + $0x1d8] sm:$0xff] %v1941
            %2070 = vst [vmem:[#allocation4 + $0x1e0] sm:$0xff] %v1942
            %2071 = vst [vmem:[#allocation4 + $0x1e8] sm:$0xff] %v1943
            %2072 = vst [vmem:[#allocation4 + $0x1f0] sm:$0xff] %v1944
            %2073 = vst [vmem:[#allocation4 + $0x1f8] sm:$0xff] %v1945
            %v2074 = vld [vmem:[%s5] sm:$0xff]
            %2075 = vst [vmem:[#allocation4 + $0x200] sm:$0xff] %v2074
            %v2076 = vld [vmem:[%s6] sm:$0x3]
            %v2078 = vlaneseq
            %v2079 = vshrl.u32 %v2078, 7
            %v2080 = vsub.s32 0, %v2079
            %v2081 = vrot.slane %v836, %v2080
            %v2082 = vlaneseq
            %v2083 = vshrl.u32 %v2082, 7
            %v2084 = vsub.s32 1, %v2083
            %v2085 = vrot.slane %v836, %v2084
            %v2086 = vlaneseq
            %v2087 = vshrl.u32 %v2086, 7
            %v2088 = vsub.s32 2, %v2087
            %v2089 = vrot.slane %v836, %v2088
            %v2090 = vlaneseq
            %v2091 = vshrl.u32 %v2090, 7
            %v2092 = vsub.s32 3, %v2091
            %v2093 = vrot.slane %v836, %v2092
            %2098 = vmatprep.subr.mxu0 %v902
            %2099 = vmatpush1.msra.mxu0 %v901
            %2100 = vmatprep.subr.mxu0 %v904
            %2101 = vmatpush1.msra.mxu0 %v903
            %2102 = vmatprep.subr.mxu0 %v906
            %2103 = vmatpush1.msra.mxu0 %v905
            %2104 = vmatprep.subr.mxu0 %v908
            %2105 = vmatpush1.msra.mxu0 %v907
            %2106 = vmatprep.subr.mxu0 %v910
            %2107 = vmatpush1.msra.mxu0 %v909
            %2108 = vmatprep.subr.mxu0 %v912
            %2109 = vmatpush1.msra.mxu0 %v911
            %2110 = vmatprep.subr.mxu0 %v914
            %2111 = vmatpush1.msra.mxu0 %v913
            %2112 = vmatprep.subr.mxu0 %v916
            %2113 = vmatpush1.msra.mxu0 %v915
            %2114 = vmatprep.subr.mxu0 %v918
            %2115 = vmatpush1.msra.mxu0 %v917
            %2116 = vmatprep.subr.mxu0 %v920
            %2117 = vmatpush1.msra.mxu0 %v919
            %2118 = vmatprep.subr.mxu0 %v922
            %2119 = vmatpush1.msra.mxu0 %v921
            %2120 = vmatprep.subr.mxu0 %v924
            %2121 = vmatpush1.msra.mxu0 %v923
            %2122 = vmatprep.subr.mxu0 %v926
            %2123 = vmatpush1.msra.mxu0 %v925
            %2124 = vmatprep.subr.mxu0 %v928
            %2125 = vmatpush1.msra.mxu0 %v927
            %2126 = vmatprep.subr.mxu0 %v930
            %2127 = vmatpush1.msra.mxu0 %v929
            %2128 = vmatprep.subr.mxu0 %v932
            %2129 = vmatpush1.msra.mxu0 %v931
            %2130 = vmatprep.subr.mxu0 %v934
            %2131 = vmatpush1.msra.mxu0 %v933
            %2132 = vmatprep.subr.mxu0 %v936
            %2133 = vmatpush1.msra.mxu0 %v935
            %2134 = vmatprep.subr.mxu0 %v938
            %2135 = vmatpush1.msra.mxu0 %v937
            %2136 = vmatprep.subr.mxu0 %v940
            %2137 = vmatpush1.msra.mxu0 %v939
            %2138 = vmatprep.subr.mxu0 %v942
            %2139 = vmatpush1.msra.mxu0 %v941
            %2140 = vmatprep.subr.mxu0 %v944
            %2141 = vmatpush1.msra.mxu0 %v943
            %2142 = vmatprep.subr.mxu0 %v946
            %2143 = vmatpush1.msra.mxu0 %v945
            %2144 = vmatprep.subr.mxu0 %v948
            %2145 = vmatpush1.msra.mxu0 %v947
            %2146 = vmatprep.subr.mxu0 %v950
            %2147 = vmatpush1.msra.mxu0 %v949
            %2148 = vmatprep.subr.mxu0 %v952
            %2149 = vmatpush1.msra.mxu0 %v951
            %2150 = vmatprep.subr.mxu0 %v954
            %2151 = vmatpush1.msra.mxu0 %v953
            %2152 = vmatprep.subr.mxu0 %v956
            %2153 = vmatpush1.msra.mxu0 %v955
            %2154 = vmatprep.subr.mxu0 %v958
            %2155 = vmatpush1.msra.mxu0 %v957
            %2156 = vmatprep.subr.mxu0 %v960
            %2157 = vmatpush1.msra.mxu0 %v959
            %2158 = vmatprep.subr.mxu0 %v962
            %2159 = vmatpush1.msra.mxu0 %v961
            %2160 = vmatprep.subr.mxu0 %v964
            %2161 = vmatpush1.msra.mxu0 %v963
            %2162 = vmatprep.mubr.f32.mxu0 %v2085
            %2163 = vmatmul.mubr.f32.gmra.mrb[0].mxu0 %v2081
            %v2164 = vpop.f32.mrb[0].mxu0
            %v2165 = vadd.f32 0.0, %v2164
            %v2166 = vpop.f32.mrb[0].mxu0
            %v2167 = vadd.f32 0.0, %v2166
            %2168 = vdwg.mxu0
            %2169 = vmatprep.subr.mxu0 %v966
            %2170 = vmatpush1.msra.mxu0 %v965
            %2171 = vmatprep.subr.mxu0 %v968
            %2172 = vmatpush1.msra.mxu0 %v967
            %2173 = vmatprep.subr.mxu0 %v970
            %2174 = vmatpush1.msra.mxu0 %v969
            %2175 = vmatprep.subr.mxu0 %v972
            %2176 = vmatpush1.msra.mxu0 %v971
            %2177 = vmatprep.subr.mxu0 %v974
            %2178 = vmatpush1.msra.mxu0 %v973
            %2179 = vmatprep.subr.mxu0 %v976
            %2180 = vmatpush1.msra.mxu0 %v975
            %2181 = vmatprep.subr.mxu0 %v978
            %2182 = vmatpush1.msra.mxu0 %v977
            %2183 = vmatprep.subr.mxu0 %v980
            %2184 = vmatpush1.msra.mxu0 %v979
            %2185 = vmatprep.subr.mxu0 %v982
            %2186 = vmatpush1.msra.mxu0 %v981
            %2187 = vmatprep.subr.mxu0 %v984
            %2188 = vmatpush1.msra.mxu0 %v983
            %2189 = vmatprep.subr.mxu0 %v986
            %2190 = vmatpush1.msra.mxu0 %v985
            %2191 = vmatprep.subr.mxu0 %v988
            %2192 = vmatpush1.msra.mxu0 %v987
            %2193 = vmatprep.subr.mxu0 %v990
            %2194 = vmatpush1.msra.mxu0 %v989
            %2195 = vmatprep.subr.mxu0 %v992
            %2196 = vmatpush1.msra.mxu0 %v991
            %2197 = vmatprep.subr.mxu0 %v994
            %2198 = vmatpush1.msra.mxu0 %v993
            %2199 = vmatprep.subr.mxu0 %v996
            %2200 = vmatpush1.msra.mxu0 %v995
            %2201 = vmatprep.subr.mxu0 %v998
            %2202 = vmatpush1.msra.mxu0 %v997
            %2203 = vmatprep.subr.mxu0 %v1000
            %2204 = vmatpush1.msra.mxu0 %v999
            %2205 = vmatprep.subr.mxu0 %v1002
            %2206 = vmatpush1.msra.mxu0 %v1001
            %2207 = vmatprep.subr.mxu0 %v1004
            %2208 = vmatpush1.msra.mxu0 %v1003
            %2209 = vmatprep.subr.mxu0 %v1006
            %2210 = vmatpush1.msra.mxu0 %v1005
            %2211 = vmatprep.subr.mxu0 %v1008
            %2212 = vmatpush1.msra.mxu0 %v1007
            %2213 = vmatprep.subr.mxu0 %v1010
            %2214 = vmatpush1.msra.mxu0 %v1009
            %2215 = vmatprep.subr.mxu0 %v1012
            %2216 = vmatpush1.msra.mxu0 %v1011
            %2217 = vmatprep.subr.mxu0 %v1014
            %2218 = vmatpush1.msra.mxu0 %v1013
            %2219 = vmatprep.subr.mxu0 %v1016
            %2220 = vmatpush1.msra.mxu0 %v1015
            %2221 = vmatprep.subr.mxu0 %v1018
            %2222 = vmatpush1.msra.mxu0 %v1017
            %2223 = vmatprep.subr.mxu0 %v1020
            %2224 = vmatpush1.msra.mxu0 %v1019
            %2225 = vmatprep.subr.mxu0 %v1022
            %2226 = vmatpush1.msra.mxu0 %v1021
            %2227 = vmatprep.subr.mxu0 %v1024
            %2228 = vmatpush1.msra.mxu0 %v1023
            %2229 = vmatprep.subr.mxu0 %v1026
            %2230 = vmatpush1.msra.mxu0 %v1025
            %2231 = vmatprep.subr.mxu0 %v1028
            %2232 = vmatpush1.msra.mxu0 %v1027
            %2233 = vmatprep.mubr.f32.mxu0 %v2093
            %2234 = vmatmul.mubr.f32.gmra.mrb[0].mxu0 %v2089
            %v2235 = vpop.f32.mrb[0].mxu0
            %v2236 = vadd.f32 %v2165, %v2235
            %v2237 = vpop.f32.mrb[0].mxu0
            %v2238 = vadd.f32 %v2167, %v2237
            %2239 = vdwg.mxu0
            %v2242 = vcombine.low %v2236, %v2238
            %v2244 = vunpack.c.l.s4 1966171168
            %v2245 = vunpack.c.0.s8 %v2244
            %v2246 = vlaneseq
            %v2247 = vshrl.u32 %v2246, 7
            %v2248 = vsub.s32 %v2245, %v2247
            %v2249 = vrot.slane %v2242, %v2248
            %v2251 = vunpack.c.l.s4 1966171168
            %v2252 = vunpack.c.0.s8 %v2251
            %v2253 = vlaneseq
            %v2254 = vshrl.u32 %v2253, 7
            %v2255 = vsub.s32 %v2252, %v2254
            %v2256 = vrot.slane %v2249, %v2255
            %v2258 = vadd.f32 %v2076, %v2256
            %v2259 = vlaneseq
            %vm2260 = vcmp.ge.s32.totalorder %v2259, 0
            %vm2261 = vcmp.lt.s32.totalorder %v2259, 256
            %vm2262 = vmand %vm2260, %vm2261
            %2263 = vst.msk [vmem:[#allocation5] sm:$0x3] %vm2262, %v2258
          $region108: #{tpu_custom_call.1} parent=103 // pred_fallthru
            _
          %v2264 = vpack.c.bf16 %v677, %v677
          %v2265 = vpack.c.bf16 %v678, %v678
          %v2266 = vpack.c.bf16 %v679, %v679
          %v2267 = vpack.c.bf16 %v680, %v680
          %v2268 = vld [vmem:[#allocation10] sm:$0xff]
          %v2269 = vpack.c.bf16 %v2268, %v2268
          %v2270 = vld [vmem:[#allocation4] sm:$0xff]
          %v2271 = vld [vmem:[#allocation4 + $0x8] sm:$0xff]
          %v2272 = vld [vmem:[#allocation4 + $0x10] sm:$0xff]
          %v2273 = vld [vmem:[#allocation4 + $0x18] sm:$0xff]
          %v2274 = vld [vmem:[#allocation4 + $0x20] sm:$0xff]
          %v2275 = vld [vmem:[#allocation4 + $0x28] sm:$0xff]
          %v2276 = vld [vmem:[#allocation4 + $0x30] sm:$0xff]
          %v2277 = vld [vmem:[#allocation4 + $0x38] sm:$0xff]
          %v2278 = vld [vmem:[#allocation4 + $0x40] sm:$0xff]
          %v2279 = vld [vmem:[#allocation4 + $0x48] sm:$0xff]
          %v2280 = vld [vmem:[#allocation4 + $0x50] sm:$0xff]
          %v2281 = vld [vmem:[#allocation4 + $0x58] sm:$0xff]
          %v2282 = vld [vmem:[#allocation4 + $0x60] sm:$0xff]
          %v2283 = vld [vmem:[#allocation4 + $0x68] sm:$0xff]
          %v2284 = vld [vmem:[#allocation4 + $0x70] sm:$0xff]
          %v2285 = vld [vmem:[#allocation4 + $0x78] sm:$0xff]
          %v2286 = vld [vmem:[#allocation4 + $0x80] sm:$0xff]
          %v2287 = vld [vmem:[#allocation4 + $0x88] sm:$0xff]
          %v2288 = vld [vmem:[#allocation4 + $0x90] sm:$0xff]
          %v2289 = vld [vmem:[#allocation4 + $0x98] sm:$0xff]
          %v2290 = vld [vmem:[#allocation4 + $0xa0] sm:$0xff]
          %v2291 = vld [vmem:[#allocation4 + $0xa8] sm:$0xff]
          %v2292 = vld [vmem:[#allocation4 + $0xb0] sm:$0xff]
          %v2293 = vld [vmem:[#allocation4 + $0xb8] sm:$0xff]
          %v2294 = vld [vmem:[#allocation4 + $0xc0] sm:$0xff]
          %v2295 = vld [vmem:[#allocation4 + $0xc8] sm:$0xff]
          %v2296 = vld [vmem:[#allocation4 + $0xd0] sm:$0xff]
          %v2297 = vld [vmem:[#allocation4 + $0xd8] sm:$0xff]
          %v2298 = vld [vmem:[#allocation4 + $0xe0] sm:$0xff]
          %v2299 = vld [vmem:[#allocation4 + $0xe8] sm:$0xff]
          %v2300 = vld [vmem:[#allocation4 + $0xf0] sm:$0xff]
          %v2301 = vld [vmem:[#allocation4 + $0xf8] sm:$0xff]
          %v2302 = vld [vmem:[#allocation4 + $0x100] sm:$0xff]
          %v2303 = vld [vmem:[#allocation4 + $0x108] sm:$0xff]
          %v2304 = vld [vmem:[#allocation4 + $0x110] sm:$0xff]
          %v2305 = vld [vmem:[#allocation4 + $0x118] sm:$0xff]
          %v2306 = vld [vmem:[#allocation4 + $0x120] sm:$0xff]
          %v2307 = vld [vmem:[#allocation4 + $0x128] sm:$0xff]
          %v2308 = vld [vmem:[#allocation4 + $0x130] sm:$0xff]
          %v2309 = vld [vmem:[#allocation4 + $0x138] sm:$0xff]
          %v2310 = vld [vmem:[#allocation4 + $0x140] sm:$0xff]
          %v2311 = vld [vmem:[#allocation4 + $0x148] sm:$0xff]
          %v2312 = vld [vmem:[#allocation4 + $0x150] sm:$0xff]
          %v2313 = vld [vmem:[#allocation4 + $0x158] sm:$0xff]
          %v2314 = vld [vmem:[#allocation4 + $0x160] sm:$0xff]
          %v2315 = vld [vmem:[#allocation4 + $0x168] sm:$0xff]
          %v2316 = vld [vmem:[#allocation4 + $0x170] sm:$0xff]
          %v2317 = vld [vmem:[#allocation4 + $0x178] sm:$0xff]
          %v2318 = vld [vmem:[#allocation4 + $0x180] sm:$0xff]
          %v2319 = vld [vmem:[#allocation4 + $0x188] sm:$0xff]
          %v2320 = vld [vmem:[#allocation4 + $0x190] sm:$0xff]
          %v2321 = vld [vmem:[#allocation4 + $0x198] sm:$0xff]
          %v2322 = vld [vmem:[#allocation4 + $0x1a0] sm:$0xff]
          %v2323 = vld [vmem:[#allocation4 + $0x1a8] sm:$0xff]
          %v2324 = vld [vmem:[#allocation4 + $0x1b0] sm:$0xff]
          %v2325 = vld [vmem:[#allocation4 + $0x1b8] sm:$0xff]
          %v2326 = vld [vmem:[#allocation4 + $0x1c0] sm:$0xff]
          %v2327 = vld [vmem:[#allocation4 + $0x1c8] sm:$0xff]
          %v2328 = vld [vmem:[#allocation4 + $0x1d0] sm:$0xff]
          %v2329 = vld [vmem:[#allocation4 + $0x1d8] sm:$0xff]
          %v2330 = vld [vmem:[#allocation4 + $0x1e0] sm:$0xff]
          %v2331 = vld [vmem:[#allocation4 + $0x1e8] sm:$0xff]
          %v2332 = vld [vmem:[#allocation4 + $0x1f0] sm:$0xff]
          %v2333 = vld [vmem:[#allocation4 + $0x1f8] sm:$0xff]
          %v2334 = vld [vmem:[#allocation4 + $0x200] sm:$0xff]
          %v2335 = vld [vmem:[#allocation5] sm:$0x3]
          %v2337 = vlaneseq
          %v2338 = vshrl.u32 %v2337, 7
          %v2339 = vsub.s32 0, %v2338
          %v2340 = vrot.slane %v2335, %v2339
          %v2341 = vlaneseq
          %v2342 = vshrl.u32 %v2341, 7
          %v2343 = vsub.s32 1, %v2342
          %v2344 = vrot.slane %v2335, %v2343
          %v2412 = vunpack.c.l.b16 %v2270
          %v2413 = vunpack.c.h.b16 %v2270
          %v2414 = vunpack.c.l.b16 %v2271
          %v2415 = vunpack.c.h.b16 %v2271
          %v2416 = vunpack.c.l.b16 %v2272
          %v2417 = vunpack.c.h.b16 %v2272
          %v2418 = vunpack.c.l.b16 %v2273
          %v2419 = vunpack.c.h.b16 %v2273
          %v2420 = vunpack.c.l.b16 %v2274
          %v2421 = vunpack.c.h.b16 %v2274
          %v2422 = vunpack.c.l.b16 %v2275
          %v2423 = vunpack.c.h.b16 %v2275
          %v2424 = vunpack.c.l.b16 %v2276
          %v2425 = vunpack.c.h.b16 %v2276
          %v2426 = vunpack.c.l.b16 %v2277
          %v2427 = vunpack.c.h.b16 %v2277
          %v2428 = vunpack.c.l.b16 %v2278
          %v2429 = vunpack.c.h.b16 %v2278
          %v2430 = vunpack.c.l.b16 %v2279
          %v2431 = vunpack.c.h.b16 %v2279
          %v2432 = vunpack.c.l.b16 %v2280
          %v2433 = vunpack.c.h.b16 %v2280
          %v2434 = vunpack.c.l.b16 %v2281
          %v2435 = vunpack.c.h.b16 %v2281
          %v2436 = vunpack.c.l.b16 %v2282
          %v2437 = vunpack.c.h.b16 %v2282
          %v2438 = vunpack.c.l.b16 %v2283
          %v2439 = vunpack.c.h.b16 %v2283
          %v2440 = vunpack.c.l.b16 %v2284
          %v2441 = vunpack.c.h.b16 %v2284
          %v2442 = vunpack.c.l.b16 %v2285
          %v2443 = vunpack.c.h.b16 %v2285
          %v2444 = vunpack.c.l.b16 %v2286
          %v2445 = vunpack.c.h.b16 %v2286
          %v2446 = vunpack.c.l.b16 %v2287
          %v2447 = vunpack.c.h.b16 %v2287
          %v2448 = vunpack.c.l.b16 %v2288
          %v2449 = vunpack.c.h.b16 %v2288
          %v2450 = vunpack.c.l.b16 %v2289
          %v2451 = vunpack.c.h.b16 %v2289
          %v2452 = vunpack.c.l.b16 %v2290
          %v2453 = vunpack.c.h.b16 %v2290
          %v2454 = vunpack.c.l.b16 %v2291
          %v2455 = vunpack.c.h.b16 %v2291
          %v2456 = vunpack.c.l.b16 %v2292
          %v2457 = vunpack.c.h.b16 %v2292
          %v2458 = vunpack.c.l.b16 %v2293
          %v2459 = vunpack.c.h.b16 %v2293
          %v2460 = vunpack.c.l.b16 %v2294
          %v2461 = vunpack.c.h.b16 %v2294
          %v2462 = vunpack.c.l.b16 %v2295
          %v2463 = vunpack.c.h.b16 %v2295
          %v2464 = vunpack.c.l.b16 %v2296
          %v2465 = vunpack.c.h.b16 %v2296
          %v2466 = vunpack.c.l.b16 %v2297
          %v2467 = vunpack.c.h.b16 %v2297
          %v2468 = vunpack.c.l.b16 %v2298
          %v2469 = vunpack.c.h.b16 %v2298
          %v2470 = vunpack.c.l.b16 %v2299
          %v2471 = vunpack.c.h.b16 %v2299
          %v2472 = vunpack.c.l.b16 %v2300
          %v2473 = vunpack.c.h.b16 %v2300
          %v2474 = vunpack.c.l.b16 %v2301
          %v2475 = vunpack.c.h.b16 %v2301
          %v2476 = vunpack.c.l.b16 %v2302
          %v2477 = vunpack.c.h.b16 %v2302
          %v2478 = vunpack.c.l.b16 %v2303
          %v2479 = vunpack.c.h.b16 %v2303
          %v2480 = vunpack.c.l.b16 %v2304
          %v2481 = vunpack.c.h.b16 %v2304
          %v2482 = vunpack.c.l.b16 %v2305
          %v2483 = vunpack.c.h.b16 %v2305
          %v2484 = vunpack.c.l.b16 %v2306
          %v2485 = vunpack.c.h.b16 %v2306
          %v2486 = vunpack.c.l.b16 %v2307
          %v2487 = vunpack.c.h.b16 %v2307
          %v2488 = vunpack.c.l.b16 %v2308
          %v2489 = vunpack.c.h.b16 %v2308
          %v2490 = vunpack.c.l.b16 %v2309
          %v2491 = vunpack.c.h.b16 %v2309
          %v2492 = vunpack.c.l.b16 %v2310
          %v2493 = vunpack.c.h.b16 %v2310
          %v2494 = vunpack.c.l.b16 %v2311
          %v2495 = vunpack.c.h.b16 %v2311
          %v2496 = vunpack.c.l.b16 %v2312
          %v2497 = vunpack.c.h.b16 %v2312
          %v2498 = vunpack.c.l.b16 %v2313
          %v2499 = vunpack.c.h.b16 %v2313
          %v2500 = vunpack.c.l.b16 %v2314
          %v2501 = vunpack.c.h.b16 %v2314
          %v2502 = vunpack.c.l.b16 %v2315
          %v2503 = vunpack.c.h.b16 %v2315
          %v2504 = vunpack.c.l.b16 %v2316
          %v2505 = vunpack.c.h.b16 %v2316
          %v2506 = vunpack.c.l.b16 %v2317
          %v2507 = vunpack.c.h.b16 %v2317
          %v2508 = vunpack.c.l.b16 %v2318
          %v2509 = vunpack.c.h.b16 %v2318
          %v2510 = vunpack.c.l.b16 %v2319
          %v2511 = vunpack.c.h.b16 %v2319
          %v2512 = vunpack.c.l.b16 %v2320
          %v2513 = vunpack.c.h.b16 %v2320
          %v2514 = vunpack.c.l.b16 %v2321
          %v2515 = vunpack.c.h.b16 %v2321
          %v2516 = vunpack.c.l.b16 %v2322
          %v2517 = vunpack.c.h.b16 %v2322
          %v2518 = vunpack.c.l.b16 %v2323
          %v2519 = vunpack.c.h.b16 %v2323
          %v2520 = vunpack.c.l.b16 %v2324
          %v2521 = vunpack.c.h.b16 %v2324
          %v2522 = vunpack.c.l.b16 %v2325
          %v2523 = vunpack.c.h.b16 %v2325
          %v2524 = vunpack.c.l.b16 %v2326
          %v2525 = vunpack.c.h.b16 %v2326
          %v2526 = vunpack.c.l.b16 %v2327
          %v2527 = vunpack.c.h.b16 %v2327
          %v2528 = vunpack.c.l.b16 %v2328
          %v2529 = vunpack.c.h.b16 %v2328
          %v2530 = vunpack.c.l.b16 %v2329
          %v2531 = vunpack.c.h.b16 %v2329
          %v2532 = vunpack.c.l.b16 %v2330
          %v2533 = vunpack.c.h.b16 %v2330
          %v2534 = vunpack.c.l.b16 %v2331
          %v2535 = vunpack.c.h.b16 %v2331
          %v2536 = vunpack.c.l.b16 %v2332
          %v2537 = vunpack.c.h.b16 %v2332
          %v2538 = vunpack.c.l.b16 %v2333
          %v2539 = vunpack.c.h.b16 %v2333
          %v2540 = vunpack.c.l.b16 %v2334
          %v2541 = vunpack.c.h.b16 %v2334
          %v2542 = vpack.c.b16 %v2414, %v2412
          %v2543 = vpack.c.b16 %v2415, %v2413
          %v2544 = vpack.c.b16 %v2418, %v2416
          %v2545 = vpack.c.b16 %v2419, %v2417
          %v2546 = vpack.c.b16 %v2422, %v2420
          %v2547 = vpack.c.b16 %v2423, %v2421
          %v2548 = vpack.c.b16 %v2426, %v2424
          %v2549 = vpack.c.b16 %v2427, %v2425
          %v2550 = vpack.c.b16 %v2430, %v2428
          %v2551 = vpack.c.b16 %v2431, %v2429
          %v2552 = vpack.c.b16 %v2434, %v2432
          %v2553 = vpack.c.b16 %v2435, %v2433
          %v2554 = vpack.c.b16 %v2438, %v2436
          %v2555 = vpack.c.b16 %v2439, %v2437
          %v2556 = vpack.c.b16 %v2442, %v2440
          %v2557 = vpack.c.b16 %v2443, %v2441
          %v2558 = vpack.c.b16 %v2446, %v2444
          %v2559 = vpack.c.b16 %v2447, %v2445
          %v2560 = vpack.c.b16 %v2450, %v2448
          %v2561 = vpack.c.b16 %v2451, %v2449
          %v2562 = vpack.c.b16 %v2454, %v2452
          %v2563 = vpack.c.b16 %v2455, %v2453
          %v2564 = vpack.c.b16 %v2458, %v2456
          %v2565 = vpack.c.b16 %v2459, %v2457
          %v2566 = vpack.c.b16 %v2462, %v2460
          %v2567 = vpack.c.b16 %v2463, %v2461
          %v2568 = vpack.c.b16 %v2466, %v2464
          %v2569 = vpack.c.b16 %v2467, %v2465
          %v2570 = vpack.c.b16 %v2470, %v2468
          %v2571 = vpack.c.b16 %v2471, %v2469
          %v2572 = vpack.c.b16 %v2474, %v2472
          %v2573 = vpack.c.b16 %v2475, %v2473
          %v2574 = vpack.c.b16 %v2478, %v2476
          %v2575 = vpack.c.b16 %v2479, %v2477
          %v2576 = vpack.c.b16 %v2482, %v2480
          %v2577 = vpack.c.b16 %v2483, %v2481
          %v2578 = vpack.c.b16 %v2486, %v2484
          %v2579 = vpack.c.b16 %v2487, %v2485
          %v2580 = vpack.c.b16 %v2490, %v2488
          %v2581 = vpack.c.b16 %v2491, %v2489
          %v2582 = vpack.c.b16 %v2494, %v2492
          %v2583 = vpack.c.b16 %v2495, %v2493
          %v2584 = vpack.c.b16 %v2498, %v2496
          %v2585 = vpack.c.b16 %v2499, %v2497
          %v2586 = vpack.c.b16 %v2502, %v2500
          %v2587 = vpack.c.b16 %v2503, %v2501
          %v2588 = vpack.c.b16 %v2506, %v2504
          %v2589 = vpack.c.b16 %v2507, %v2505
          %v2590 = vpack.c.b16 %v2510, %v2508
          %v2591 = vpack.c.b16 %v2511, %v2509
          %v2592 = vpack.c.b16 %v2514, %v2512
          %v2593 = vpack.c.b16 %v2515, %v2513
          %v2594 = vpack.c.b16 %v2518, %v2516
          %v2595 = vpack.c.b16 %v2519, %v2517
          %v2596 = vpack.c.b16 %v2522, %v2520
          %v2597 = vpack.c.b16 %v2523, %v2521
          %v2598 = vpack.c.b16 %v2526, %v2524
          %v2599 = vpack.c.b16 %v2527, %v2525
          %v2600 = vpack.c.b16 %v2530, %v2528
          %v2601 = vpack.c.b16 %v2531, %v2529
          %v2602 = vpack.c.b16 %v2534, %v2532
          %v2603 = vpack.c.b16 %v2535, %v2533
          %v2604 = vpack.c.b16 %v2538, %v2536
          %v2605 = vpack.c.b16 %v2539, %v2537
          %v2606 = vpack.c.b16 %v2540, %v2540
          %v2607 = vpack.c.b16 %v2541, %v2541
          %vm2672 = vcmask 64512
          %v2674 = vsel %vm2672, %v2269, 0
          %vm2676 = vcmask 1043456
          %v2678 = vsel %vm2676, %v2606, 0
          %v2681 = vsel %vm2676, %v2607, 0
          %2683 = vmatprep.subr.bf16.mxu0 %v2543
          %2684 = vmatpush1.bf16.msra.mxu0 %v2542
          %2685 = vmatprep.subr.bf16.mxu0 %v2545
          %2686 = vmatpush1.bf16.msra.mxu0 %v2544
          %2687 = vmatprep.subr.bf16.mxu0 %v2547
          %2688 = vmatpush1.bf16.msra.mxu0 %v2546
          %2689 = vmatprep.subr.bf16.mxu0 %v2549
          %2690 = vmatpush1.bf16.msra.mxu0 %v2548
          %2691 = vmatprep.subr.bf16.mxu0 %v2551
          %2692 = vmatpush1.bf16.msra.mxu0 %v2550
          %2693 = vmatprep.subr.bf16.mxu0 %v2553
          %2694 = vmatpush1.bf16.msra.mxu0 %v2552
          %2695 = vmatprep.subr.bf16.mxu0 %v2555
          %2696 = vmatpush1.bf16.msra.mxu0 %v2554
          %2697 = vmatprep.subr.bf16.mxu0 %v2557
          %2698 = vmatpush1.bf16.msra.mxu0 %v2556
          %2699 = vmatprep.subr.bf16.mxu0 %v2559
          %2700 = vmatpush1.bf16.msra.mxu0 %v2558
          %2701 = vmatprep.subr.bf16.mxu0 %v2561
          %2702 = vmatpush1.bf16.msra.mxu0 %v2560
          %2703 = vmatprep.subr.bf16.mxu0 %v2563
          %2704 = vmatpush1.bf16.msra.mxu0 %v2562
          %2705 = vmatprep.subr.bf16.mxu0 %v2565
          %2706 = vmatpush1.bf16.msra.mxu0 %v2564
          %2707 = vmatprep.subr.bf16.mxu0 %v2567
          %2708 = vmatpush1.bf16.msra.mxu0 %v2566
          %2709 = vmatprep.subr.bf16.mxu0 %v2569
          %2710 = vmatpush1.bf16.msra.mxu0 %v2568
          %2711 = vmatprep.subr.bf16.mxu0 %v2571
          %2712 = vmatpush1.bf16.msra.mxu0 %v2570
          %2713 = vmatprep.subr.bf16.mxu0 %v2573
          %2714 = vmatpush1.bf16.msra.mxu0 %v2572
          %2715 = vmatprep.mubr.bf16.mxu0 %v2265
          %2716 = vmatmul.mubr.bf16.gmra.mrb[0].mxu0 %v2264
          %v2717 = vpop.f32.mrb[0].mxu0
          %v2718 = vadd.f32 %v2340, %v2717
          %v2719 = vpop.f32.mrb[0].mxu0
          %v2720 = vadd.f32 %v2344, %v2719
          %v2721 = vpop.f32.mrb[0].mxu0
          %v2722 = vpop.f32.mrb[0].mxu0
          %2723 = vdwg.mxu0
          %2724 = vmatprep.subr.bf16.mxu0 %v2575
          %2725 = vmatpush1.bf16.msra.mxu0 %v2574
          %2726 = vmatprep.subr.bf16.mxu0 %v2577
          %2727 = vmatpush1.bf16.msra.mxu0 %v2576
          %2728 = vmatprep.subr.bf16.mxu0 %v2579
          %2729 = vmatpush1.bf16.msra.mxu0 %v2578
          %2730 = vmatprep.subr.bf16.mxu0 %v2581
          %2731 = vmatpush1.bf16.msra.mxu0 %v2580
          %2732 = vmatprep.subr.bf16.mxu0 %v2583
          %2733 = vmatpush1.bf16.msra.mxu0 %v2582
          %2734 = vmatprep.subr.bf16.mxu0 %v2585
          %2735 = vmatpush1.bf16.msra.mxu0 %v2584
          %2736 = vmatprep.subr.bf16.mxu0 %v2587
          %2737 = vmatpush1.bf16.msra.mxu0 %v2586
          %2738 = vmatprep.subr.bf16.mxu0 %v2589
          %2739 = vmatpush1.bf16.msra.mxu0 %v2588
          %2740 = vmatprep.subr.bf16.mxu0 %v2591
          %2741 = vmatpush1.bf16.msra.mxu0 %v2590
          %2742 = vmatprep.subr.bf16.mxu0 %v2593
          %2743 = vmatpush1.bf16.msra.mxu0 %v2592
          %2744 = vmatprep.subr.bf16.mxu0 %v2595
          %2745 = vmatpush1.bf16.msra.mxu0 %v2594
          %2746 = vmatprep.subr.bf16.mxu0 %v2597
          %2747 = vmatpush1.bf16.msra.mxu0 %v2596
          %2748 = vmatprep.subr.bf16.mxu0 %v2599
          %2749 = vmatpush1.bf16.msra.mxu0 %v2598
          %2750 = vmatprep.subr.bf16.mxu0 %v2601
          %2751 = vmatpush1.bf16.msra.mxu0 %v2600
          %2752 = vmatprep.subr.bf16.mxu0 %v2603
          %2753 = vmatpush1.bf16.msra.mxu0 %v2602
          %2754 = vmatprep.subr.bf16.mxu0 %v2605
          %2755 = vmatpush1.bf16.msra.mxu0 %v2604
          %2756 = vmatprep.mubr.bf16.mxu0 %v2267
          %2757 = vmatmul.mubr.bf16.gmra.mrb[0].mxu0 %v2266
          %v2758 = vpop.f32.mrb[0].mxu0
          %v2759 = vadd.f32 %v2718, %v2758
          %v2760 = vpop.f32.mrb[0].mxu0
          %v2761 = vadd.f32 %v2720, %v2760
          %v2762 = vpop.f32.mrb[0].mxu0
          %v2763 = vpop.f32.mrb[0].mxu0
          %2764 = vdwg.mxu0
          %2765 = vmatprep.subr.bf16.mxu0 %v2681
          %2766 = vmatpush1.bf16.msra.mxu0 %v2678
          %2767 = vmatprep.subr.bf16.mxu0 0
          %2768 = vmatpush1.bf16.msra.mxu0 0
          %2769 = vmatprep.subr.bf16.mxu0 0
          %2770 = vmatpush1.bf16.msra.mxu0 0
          %2771 = vmatprep.subr.bf16.mxu0 0
          %2772 = vmatpush1.bf16.msra.mxu0 0
          %2773 = vmatprep.subr.bf16.mxu0 0
          %2774 = vmatpush1.bf16.msra.mxu0 0
          %2775 = vmatprep.subr.bf16.mxu0 0
          %2776 = vmatpush1.bf16.msra.mxu0 0
          %2777 = vmatprep.subr.bf16.mxu0 0
          %2778 = vmatpush1.bf16.msra.mxu0 0
          %2779 = vmatprep.subr.bf16.mxu0 0
          %2780 = vmatpush1.bf16.msra.mxu0 0
          %2781 = vmatprep.subr.bf16.mxu0 0
          %2782 = vmatpush1.bf16.msra.mxu0 0
          %2783 = vmatprep.subr.bf16.mxu0 0
          %2784 = vmatpush1.bf16.msra.mxu0 0
          %2785 = vmatprep.subr.bf16.mxu0 0
          %2786 = vmatpush1.bf16.msra.mxu0 0
          %2787 = vmatprep.subr.bf16.mxu0 0
          %2788 = vmatpush1.bf16.msra.mxu0 0
          %2789 = vmatprep.subr.bf16.mxu0 0
          %2790 = vmatpush1.bf16.msra.mxu0 0
          %2791 = vmatprep.subr.bf16.mxu0 0
          %2792 = vmatpush1.bf16.msra.mxu0 0
          %2793 = vmatprep.subr.bf16.mxu0 0
          %2794 = vmatpush1.bf16.msra.mxu0 0
          %2795 = vmatprep.subr.bf16.mxu0 0
          %2796 = vmatpush1.bf16.msra.mxu0 0
          %2797 = vmatprep.mubr.bf16.mxu0 0
          %2798 = vmatmul.mubr.bf16.gmra.mrb[0].mxu0 %v2674
          %v2799 = vpop.f32.mrb[0].mxu0
          %v2800 = vadd.f32 %v2759, %v2799
          %v2801 = vpop.f32.mrb[0].mxu0
          %v2802 = vadd.f32 %v2761, %v2801
          %v2803 = vpop.f32.mrb[0].mxu0
          %v2804 = vpop.f32.mrb[0].mxu0
          %2805 = vdwg.mxu0
          %v2806 = vmax.f32 %v2800, 0.0
          %v2807 = vmax.f32 %v2802, 0.0
          %v2808 = vpack.c.bf16 %v2806, %v2806
          %v2809 = vpack.c.bf16 %v2807, %v2807
          %v2810 = vld [vmem:[#allocation15] sm:$0xf]
          %v2811 = vld [vmem:[#allocation15 + $0x4] sm:$0xf]
          %v2812 = vld [vmem:[#allocation15 + $0x8] sm:$0xf]
          %v2813 = vld [vmem:[#allocation15 + $0xc] sm:$0xf]
          %v2814 = vld [vmem:[#allocation15 + $0x10] sm:$0xf]
          %v2815 = vld [vmem:[#allocation15 + $0x14] sm:$0xf]
          %v2816 = vld [vmem:[#allocation15 + $0x18] sm:$0xf]
          %v2817 = vld [vmem:[#allocation15 + $0x1c] sm:$0xf]
          %v2818 = vld [vmem:[#allocation15 + $0x20] sm:$0xf]
          %v2819 = vld [vmem:[#allocation15 + $0x24] sm:$0xf]
          %v2820 = vld [vmem:[#allocation15 + $0x28] sm:$0xf]
          %v2821 = vld [vmem:[#allocation15 + $0x2c] sm:$0xf]
          %v2822 = vld [vmem:[#allocation15 + $0x30] sm:$0xf]
          %v2823 = vld [vmem:[#allocation15 + $0x34] sm:$0xf]
          %v2824 = vld [vmem:[#allocation15 + $0x38] sm:$0xf]
          %v2825 = vld [vmem:[#allocation15 + $0x3c] sm:$0xf]
          %v2826 = vld [vmem:[#allocation15 + $0x40] sm:$0xf]
          %v2827 = vld [vmem:[#allocation15 + $0x44] sm:$0xf]
          %v2828 = vld [vmem:[#allocation15 + $0x48] sm:$0xf]
          %v2829 = vld [vmem:[#allocation15 + $0x4c] sm:$0xf]
          %v2830 = vld [vmem:[#allocation15 + $0x50] sm:$0xf]
          %v2831 = vld [vmem:[#allocation15 + $0x54] sm:$0xf]
          %v2832 = vld [vmem:[#allocation15 + $0x58] sm:$0xf]
          %v2833 = vld [vmem:[#allocation15 + $0x5c] sm:$0xf]
          %v2834 = vld [vmem:[#allocation15 + $0x60] sm:$0xf]
          %v2835 = vld [vmem:[#allocation15 + $0x64] sm:$0xf]
          %v2836 = vld [vmem:[#allocation15 + $0x68] sm:$0xf]
          %v2837 = vld [vmem:[#allocation15 + $0x6c] sm:$0xf]
          %v2838 = vld [vmem:[#allocation15 + $0x70] sm:$0xf]
          %v2839 = vld [vmem:[#allocation15 + $0x74] sm:$0xf]
          %v2840 = vld [vmem:[#allocation15 + $0x78] sm:$0xf]
          %v2841 = vld [vmem:[#allocation15 + $0x7c] sm:$0xf]
          %v2842 = vld [vmem:[%s8] sm:$0x1]
          %v2844 = vlaneseq
          %v2845 = vshrl.u32 %v2844, 7
          %v2846 = vsub.s32 0, %v2845
          %v2847 = vrot.slane %v2842, %v2846
          %v2881 = vunpack.c.l.b16 %v2810
          %v2882 = vunpack.c.l.b16 %v2811
          %v2883 = vunpack.c.l.b16 %v2812
          %v2884 = vunpack.c.l.b16 %v2813
          %v2885 = vunpack.c.l.b16 %v2814
          %v2886 = vunpack.c.l.b16 %v2815
          %v2887 = vunpack.c.l.b16 %v2816
          %v2888 = vunpack.c.l.b16 %v2817
          %v2889 = vunpack.c.l.b16 %v2818
          %v2890 = vunpack.c.l.b16 %v2819
          %v2891 = vunpack.c.l.b16 %v2820
          %v2892 = vunpack.c.l.b16 %v2821
          %v2893 = vunpack.c.l.b16 %v2822
          %v2894 = vunpack.c.l.b16 %v2823
          %v2895 = vunpack.c.l.b16 %v2824
          %v2896 = vunpack.c.l.b16 %v2825
          %v2897 = vunpack.c.l.b16 %v2826
          %v2898 = vunpack.c.l.b16 %v2827
          %v2899 = vunpack.c.l.b16 %v2828
          %v2900 = vunpack.c.l.b16 %v2829
          %v2901 = vunpack.c.l.b16 %v2830
          %v2902 = vunpack.c.l.b16 %v2831
          %v2903 = vunpack.c.l.b16 %v2832
          %v2904 = vunpack.c.l.b16 %v2833
          %v2905 = vunpack.c.l.b16 %v2834
          %v2906 = vunpack.c.l.b16 %v2835
          %v2907 = vunpack.c.l.b16 %v2836
          %v2908 = vunpack.c.l.b16 %v2837
          %v2909 = vunpack.c.l.b16 %v2838
          %v2910 = vunpack.c.l.b16 %v2839
          %v2911 = vunpack.c.l.b16 %v2840
          %v2912 = vunpack.c.l.b16 %v2841
          %v2913 = vpack.c.b16 %v2882, %v2881
          %v2914 = vpack.c.b16 %v2884, %v2883
          %v2915 = vpack.c.b16 %v2886, %v2885
          %v2916 = vpack.c.b16 %v2888, %v2887
          %v2917 = vpack.c.b16 %v2890, %v2889
          %v2918 = vpack.c.b16 %v2892, %v2891
          %v2919 = vpack.c.b16 %v2894, %v2893
          %v2920 = vpack.c.b16 %v2896, %v2895
          %v2921 = vpack.c.b16 %v2898, %v2897
          %v2922 = vpack.c.b16 %v2900, %v2899
          %v2923 = vpack.c.b16 %v2902, %v2901
          %v2924 = vpack.c.b16 %v2904, %v2903
          %v2925 = vpack.c.b16 %v2906, %v2905
          %v2926 = vpack.c.b16 %v2908, %v2907
          %v2927 = vpack.c.b16 %v2910, %v2909
          %v2928 = vpack.c.b16 %v2912, %v2911
          %2945 = vmatprep.subr.bf16.mxu0 0
          %2946 = vmatpush1.bf16.msra.mxu0 %v2913
          %2947 = vmatprep.subr.bf16.mxu0 0
          %2948 = vmatpush1.bf16.msra.mxu0 %v2914
          %2949 = vmatprep.subr.bf16.mxu0 0
          %2950 = vmatpush1.bf16.msra.mxu0 %v2915
          %2951 = vmatprep.subr.bf16.mxu0 0
          %2952 = vmatpush1.bf16.msra.mxu0 %v2916
          %2953 = vmatprep.subr.bf16.mxu0 0
          %2954 = vmatpush1.bf16.msra.mxu0 %v2917
          %2955 = vmatprep.subr.bf16.mxu0 0
          %2956 = vmatpush1.bf16.msra.mxu0 %v2918
          %2957 = vmatprep.subr.bf16.mxu0 0
          %2958 = vmatpush1.bf16.msra.mxu0 %v2919
          %2959 = vmatprep.subr.bf16.mxu0 0
          %2960 = vmatpush1.bf16.msra.mxu0 %v2920
          %2961 = vmatprep.subr.bf16.mxu0 0
          %2962 = vmatpush1.bf16.msra.mxu0 %v2921
          %2963 = vmatprep.subr.bf16.mxu0 0
          %2964 = vmatpush1.bf16.msra.mxu0 %v2922
          %2965 = vmatprep.subr.bf16.mxu0 0
          %2966 = vmatpush1.bf16.msra.mxu0 %v2923
          %2967 = vmatprep.subr.bf16.mxu0 0
          %2968 = vmatpush1.bf16.msra.mxu0 %v2924
          %2969 = vmatprep.subr.bf16.mxu0 0
          %2970 = vmatpush1.bf16.msra.mxu0 %v2925
          %2971 = vmatprep.subr.bf16.mxu0 0
          %2972 = vmatpush1.bf16.msra.mxu0 %v2926
          %2973 = vmatprep.subr.bf16.mxu0 0
          %2974 = vmatpush1.bf16.msra.mxu0 %v2927
          %2975 = vmatprep.subr.bf16.mxu0 0
          %2976 = vmatpush1.bf16.msra.mxu0 %v2928
          %2977 = vmatprep.mubr.bf16.mxu0 %v2809
          %2978 = vmatmul.mubr.bf16.gmra.mrb[0].mxu0 %v2808
          %v2979 = vpop.f32.mrb[0].mxu0
          %v2980 = vadd.f32 %v2847, %v2979
          %v2981 = vpop.f32.mrb[0].mxu0
          %v2982 = vpop.f32.mrb[0].mxu0
          %v2983 = vpop.f32.mrb[0].mxu0
          %2984 = vdwg.mxu0
          %v2985 = vmax.f32 %v2980, 0.0
          %v2986 = vld [vmem:[%s9] sm:$0x1]
          %v2987 = vunpack.c.l.bf16 %v2986
          %v2988 = vld [vmem:[#allocation6] sm:$0x1]
          %2990 = vset.pattern.permute.xlu0 0
          %2991 = vperm.xlu0 %2990, %v2988
          %v2992 = vpop.permute.xlu0 %2991
          %v2994 = vlaneseq
          %v2995 = vshrl.u32 %v2994, 7
          %v2996 = vsub.s32 0, %v2995
          %v2997 = vrot.slane %v2992, %v2996
          %2998 = vmatprep.subr.mxu0 0.0
          %2999 = vmatpush1.xpose.msra.mxu0 %v2985
          %3000 = vmatprep.subr.mxu0 0.0
          %3001 = vmatpush1.xpose.msra.mxu0 0.0
          %3002 = vmatprep.subr.mxu0 0.0
          %3003 = vmatpush1.xpose.msra.mxu0 0.0
          %3004 = vmatprep.subr.mxu0 0.0
          %3005 = vmatpush1.xpose.msra.mxu0 0.0
          %3006 = vmatprep.subr.mxu0 0.0
          %3007 = vmatpush1.xpose.msra.mxu0 0.0
          %3008 = vmatprep.subr.mxu0 0.0
          %3009 = vmatpush1.xpose.msra.mxu0 0.0
          %3010 = vmatprep.subr.mxu0 0.0
          %3011 = vmatpush1.xpose.msra.mxu0 0.0
          %3012 = vmatprep.subr.mxu0 0.0
          %3013 = vmatpush1.xpose.msra.mxu0 0.0
          %3014 = vmatprep.subr.mxu0 0.0
          %3015 = vmatpush1.xpose.msra.mxu0 0.0
          %3016 = vmatprep.subr.mxu0 0.0
          %3017 = vmatpush1.xpose.msra.mxu0 0.0
          %3018 = vmatprep.subr.mxu0 0.0
          %3019 = vmatpush1.xpose.msra.mxu0 0.0
          %3020 = vmatprep.subr.mxu0 0.0
          %3021 = vmatpush1.xpose.msra.mxu0 0.0
          %3022 = vmatprep.subr.mxu0 0.0
          %3023 = vmatpush1.xpose.msra.mxu0 0.0
          %3024 = vmatprep.subr.mxu0 0.0
          %3025 = vmatpush1.xpose.msra.mxu0 0.0
          %3026 = vmatprep.subr.mxu0 0.0
          %3027 = vmatpush1.xpose.msra.mxu0 0.0
          %3028 = vmatprep.subr.mxu0 0.0
          %3029 = vmatpush1.xpose.msra.mxu0 0.0
          %3030 = vmatprep.subr.mxu0 0.0
          %3031 = vmatpush1.xpose.msra.mxu0 0.0
          %3032 = vmatprep.subr.mxu0 0.0
          %3033 = vmatpush1.xpose.msra.mxu0 0.0
          %3034 = vmatprep.subr.mxu0 0.0
          %3035 = vmatpush1.xpose.msra.mxu0 0.0
          %3036 = vmatprep.subr.mxu0 0.0
          %3037 = vmatpush1.xpose.msra.mxu0 0.0
          %3038 = vmatprep.subr.mxu0 0.0
          %3039 = vmatpush1.xpose.msra.mxu0 0.0
          %3040 = vmatprep.subr.mxu0 0.0
          %3041 = vmatpush1.xpose.msra.mxu0 0.0
          %3042 = vmatprep.subr.mxu0 0.0
          %3043 = vmatpush1.xpose.msra.mxu0 0.0
          %3044 = vmatprep.subr.mxu0 0.0
          %3045 = vmatpush1.xpose.msra.mxu0 0.0
          %3046 = vmatprep.subr.mxu0 0.0
          %3047 = vmatpush1.xpose.msra.mxu0 0.0
          %3048 = vmatprep.subr.mxu0 0.0
          %3049 = vmatpush1.xpose.msra.mxu0 0.0
          %3050 = vmatprep.subr.mxu0 0.0
          %3051 = vmatpush1.xpose.msra.mxu0 0.0
          %3052 = vmatprep.subr.mxu0 0.0
          %3053 = vmatpush1.xpose.msra.mxu0 0.0
          %3054 = vmatprep.subr.mxu0 0.0
          %3055 = vmatpush1.xpose.msra.mxu0 0.0
          %3056 = vmatprep.subr.mxu0 0.0
          %3057 = vmatpush1.xpose.msra.mxu0 0.0
          %3058 = vmatprep.subr.mxu0 0.0
          %3059 = vmatpush1.xpose.msra.mxu0 0.0
          %3060 = vmatprep.subr.mxu0 0.0
          %3061 = vmatpush1.xpose.msra.mxu0 0.0
          %3062 = vmatprep.mubr.f32.mxu0 0.0
          %3063 = vmatmul.mubr.f32.gmra.mrb[0].mxu0 %v2987
          %v3064 = vpop.f32.mrb[0].mxu0
          %v3065 = vadd.f32 %v2997, %v3064
          %v3066 = vpop.f32.mrb[0].mxu0
          %3067 = vdwg.mxu0
          %vm3068 = vcmask 57344
          %3069 = vst.msk [vmem:[%s516] sm:$0x1] %vm3068, %v3065
        $region104: #{tpu_custom_call.1} parent=71 // pred_fallthru
          _
        %s3070 = sand.u32 %s337, 1
        %s3071 = scalar_lea.sflag [#allocation9], %s3070
        %s3072 = sand.u32 %s337, 1
        %s3073 = scalar_lea.vmem [#allocation16], %s3072
        // Predicated region
        $region109: #{tpu_custom_call.1} parent=71 // pred_check
          %p3074 = pneg %p347
        $region110: #{tpu_custom_call.1} parent=71 // pred_check_branch
          %3076 = sbr.rel (%p3074) target = $region112
        $region111: #{tpu_custom_call.1} parent=71 // pred_region
          %s3077 = smul.u32 %s36, %s37
          %s3079 = ssub.s32 16, 16
          %3080 = vsyncadd %s3071, %s3079
          %s3081 = smul.addr %s3077, 16
          %s3082 = scalar_lea.hbm %s13, %s3081
          %s3084 = sshll.u32 %s3073, 4
          %s3085 = int_to_ptr.vmem [resolvable:$true] %s3084
          %3087 = dma.vmem_to_hbm [thread:$0]  %s3085, 16, %s3082, %s3071
        $region112: #{tpu_custom_call.1} parent=71 // pred_fallthru
          _
      $region72: #{tpu_custom_call.1} parent=5 // pred_fallthru
        _
      %p3088 = scmp.le.s32.totalorder 2, %s27
      // Predicated region
      $region113: #{tpu_custom_call.1} parent=5 // pred_check
        %p3089 = pneg %p3088
      $region114: #{tpu_custom_call.1} parent=5 // pred_check_branch
        %3091 = sbr.rel (%p3089) target = $region116
      $region115: #{tpu_custom_call.1} parent=5 // pred_region
        %s3092 = ssub.s32 %s27, 2
        // Predicated region
        $region117: #{tpu_custom_call.1} parent=115 // pred_check
          %p3093 = pneg %p353
        $region118: #{tpu_custom_call.1} parent=115 // pred_check_branch
          %3095 = sbr.rel (%p3093) target = $region120
        $region119: #{tpu_custom_call.1} parent=115 // pred_region
          %s3096 = sand.u32 %s338, 1
          %s3097 = scalar_lea.sflag [#allocation9], %s3096
          %s3098 = sand.u32 %s338, 1
          %s3099 = scalar_lea.vmem [#allocation16], %s3098
          %3100 = dma.done %s3097, 16
        $region120: #{tpu_custom_call.1} parent=115 // pred_fallthru
          _
      $region116: #{tpu_custom_call.1} parent=5 // pred_fallthru
        _
    $region6: #{tpu_custom_call.1} parent=1 // loop_footer
      %s31 = sadd.s32 1, %s27
    $region7: #{tpu_custom_call.1} parent=1 // loop_footer_branch
      %26 = sbr.rel target = $region3
    $region8: #{tpu_custom_call.1} parent=1 // loop_exit
      _
    %3101 = vsyncpa [#allocation8], 1
    %s3102 = scalar_lea.sflag [#allocation8], 1
    %3103 = vsyncpa %s3102, 1
    %3104 = vsyncpa [#allocation11], 1
    %3105 = vsyncpa [#allocation14], 1
    %3106 = vsyncpa [#allocation9], 1
    %s3107 = scalar_lea.sflag [#allocation9], 1
    %3108 = vsyncpa %s3107, 1

</llo_original>
